<compile_context>
chip_gen: v6e
topology: v6e:2x2x1
jax: 0.10.0
libtpu: 0.0.40
codegen_flags: <defaults>
</compile_context>

<pallas_src>
import functools

import jax
import jax.numpy as jnp
from jax.experimental import pallas as pl
from jax.experimental.pallas import tpu as pltpu

GAMMA = 0.001        # eps (module default)
HIDDEN = 100         # logical hidden width (build_relu hidden_dim)
NUM_MID = 5          # number of hidden->hidden layers (build_relu num_layers)
HP = 128             # hidden width padded to one full lane width
MAX_TILE_B = 4096    # batch rows per grid step (cap; multiple of 1024)


def _uniform_fwd_kernel(a_ref, x_ref,
                        w_in_ref, b_in_ref,
                        w_mid_ref, b_mid_ref,
                        w_out_ref, b_out_ref,
                        o_ref, *, eps):
    # ---- localizer MLP: bf16 MXU matmuls, f32 accumulation & elementwise ----
    h = jnp.dot(x_ref[...], w_in_ref[...],              # x already bf16
                preferred_element_type=jnp.float32) + b_in_ref[...]
    h = jnp.maximum(h, 0.0)
    for l in range(NUM_MID):                             # static unroll (5 layers)
        h = jnp.dot(h.astype(jnp.bfloat16), w_mid_ref[l],
                    preferred_element_type=jnp.float32) + b_mid_ref[l]
        h = jnp.maximum(h, 0.0)
    # Final Linear(hidden -> 1) as an f32 lane reduction (XLU slot) instead of
    # an N=1 matmul; result is a (TILE_B, 1) column.
    y = jnp.sum(h * w_out_ref[...], axis=-1, keepdims=True) + b_out_ref[...]

    # ---- w = abs(.), relayout lane-dense, out = sigmoid(a / (eps + w)) ----
    w_loc = jnp.abs(y)                                   # (TILE_B, 1) column
    w_loc = jnp.reshape(w_loc, o_ref.shape)              # (TILE_B//128, 128) lane-dense
    t = a_ref[...] * pl.reciprocal(eps + w_loc, approx=True)    # EUP recip
    # numerically stable sigmoid: never exponentiates a positive argument
    z = jnp.exp(-jnp.abs(t))
    s = pl.reciprocal(1.0 + z, approx=True)
    o_ref[...] = jnp.where(t >= 0.0, s, 1.0 - s)


def prepare_params(params):
    """One-time padding/dtype prep (hoisted out of the forward path)."""
    w_in, b_in, w_mid, b_mid, w_out, b_out = params
    dim = w_in.shape[0]
    f32 = jnp.float32
    w_in_p = jnp.zeros((dim, HP), f32).at[:, :HIDDEN].set(w_in).astype(jnp.bfloat16)
    b_in_p = jnp.zeros((1, HP), f32).at[0, :HIDDEN].set(b_in)
    w_mid_p = (jnp.zeros((NUM_MID, HP, HP), f32)
               .at[:, :HIDDEN, :HIDDEN].set(w_mid).astype(jnp.bfloat16))
    b_mid_p = jnp.zeros((NUM_MID, 1, HP), f32).at[:, 0, :HIDDEN].set(b_mid)
    w_out_p = jnp.zeros((1, HP), f32).at[0, :HIDDEN].set(w_out)
    b_out_p = jnp.reshape(b_out, (1, 1)).astype(f32)
    return (w_in_p, b_in_p, w_mid_p, b_mid_p, w_out_p, b_out_p)


def uniform_forward(a, x, padded_params, *, eps=GAMMA):
    """a: (B,), x: (B, dim), padded_params from prepare_params() -> (B,) f32."""
    B, dim = x.shape
    w_in_p, b_in_p, w_mid_p, b_mid_p, w_out_p, b_out_p = padded_params

    # Lane-dense batch layout: a / out live as (B128, 128).
    b128 = (B + 127) // 128
    b_pad = b128 * 128

    # Tile selection: one full-array tile when it fits, else 4096-row tiles
    # (tile_rows = 32, a multiple of 8, so the (8,128) block rule holds and the
    # ragged last block is clipped/masked by Pallas).
    if b_pad <= MAX_TILE_B:
        tile_rows = b128
    else:
        tile_rows = MAX_TILE_B // 128
    tile_b = tile_rows * 128
    num_tiles = -(-b128 // tile_rows)

    # `a` is tiny (4 B/row): pad to a multiple of 128 and make it lane-dense.
    a2 = a.astype(jnp.float32)
    if b_pad != B:
        a2 = jnp.pad(a2, (0, b_pad - B))
    a2 = a2.reshape(b128, 128)

    # `x` is the only B-proportional HBM stream: ship as bf16, no padding
    # (Pallas clips the ragged last block; garbage rows are sliced off below).
    x2 = x.astype(jnp.bfloat16)

    out = pl.pallas_call(
        functools.partial(_uniform_fwd_kernel, eps=eps),
        out_shape=jax.ShapeDtypeStruct((b128, 128), jnp.float32),
        grid=(num_tiles,),
        in_specs=[
            pl.BlockSpec((tile_rows, 128), lambda i: (i, 0)),      # a  (lane-dense)
            pl.BlockSpec((tile_b, dim), lambda i: (i, 0)),         # x  (bf16, tiled)
            pl.BlockSpec((dim, HP), lambda i: (0, 0)),             # w_in   (resident)
            pl.BlockSpec((1, HP), lambda i: (0, 0)),               # b_in   (resident)
            pl.BlockSpec((NUM_MID, HP, HP), lambda i: (0, 0, 0)),  # w_mid  (resident)
            pl.BlockSpec((NUM_MID, 1, HP), lambda i: (0, 0, 0)),   # b_mid  (resident)
            pl.BlockSpec((1, HP), lambda i: (0, 0)),               # w_out  (resident)
            pl.BlockSpec((1, 1), lambda i: (0, 0)),                # b_out  (resident)
        ],
        out_specs=pl.BlockSpec((tile_rows, 128), lambda i: (i, 0)),
        compiler_params=pltpu.CompilerParams(
            dimension_semantics=("parallel",),
            vmem_limit_bytes=32 * 1024 * 1024),
    )(a2, x2, w_in_p, b_in_p, w_mid_p, b_mid_p, w_out_p, b_out_p)
    return out.reshape(b_pad)[:B]


def init_params(key, dim):
    """Deterministic params mimicking PyTorch nn.Linear default init."""
    def linear(k, fan_in, fan_out):
        kw, kb = jax.random.split(k)
        bound = 1.0 / jnp.sqrt(fan_in)
        W = jax.random.uniform(kw, (fan_in, fan_out), jnp.float32, -bound, bound)
        b = jax.random.uniform(kb, (fan_out,), jnp.float32, -bound, bound)
        return W, b

    keys = jax.random.split(key, NUM_MID + 2)
    w_in, b_in = linear(keys[0], dim, HIDDEN)
    w_mid, b_mid = [], []
    for l in range(NUM_MID):
        W, b = linear(keys[1 + l], HIDDEN, HIDDEN)
        w_mid.append(W); b_mid.append(b)
    w_mid = jnp.stack(w_mid)                 # (5, H, H)
    b_mid = jnp.stack(b_mid)                 # (5, H)
    w_out, b_out = linear(keys[-1], HIDDEN, 1)
    return (w_in, b_in, w_mid, b_mid, w_out.reshape(HIDDEN), b_out.reshape(()))


def reference_forward(a, x, params, *, eps=GAMMA):
    """Pure-JAX reference mirroring the kernel numerics (bf16 matmul inputs, f32 acc)."""
    w_in, b_in, w_mid, b_mid, w_out, b_out = params
    bf = jnp.bfloat16
    h = jnp.dot(x.astype(bf), w_in.astype(bf),
                preferred_element_type=jnp.float32) + b_in
    h = jnp.maximum(h, 0.0)
    for l in range(NUM_MID):
        h = jnp.dot(h.astype(bf), w_mid[l].astype(bf),
                    preferred_element_type=jnp.float32) + b_mid[l]
        h = jnp.maximum(h, 0.0)
    y = h @ w_out.reshape(HIDDEN, 1) + b_out          # (B, 1)
    w_loc = jnp.abs(y[:, 0])                          # (B,)
    return jax.nn.sigmoid(a / (eps + w_loc))


if __name__ == "__main__":
    B, DIM = 512, 32          # small demo (single 512-row tile, lane-dense out)
    key = jax.random.PRNGKey(0)
    k_p, k_x, k_a = jax.random.split(key, 3)
    params = init_params(k_p, DIM)
    padded_params = prepare_params(params)            # hoisted one-time prep
    x = jax.random.normal(k_x, (B, DIM), jnp.float32)
    a = jax.random.normal(k_a, (B,), jnp.float32)

    fwd = jax.jit(lambda a_, x_: uniform_forward(a_, x_, padded_params))
    out = jax.block_until_ready(fwd(a, x))

    ref = reference_forward(a, x, params)
    assert out.shape == (B,)
    assert jnp.allclose(out, ref, rtol=1e-2, atol=5e-3), (
        "max abs diff:", float(jnp.max(jnp.abs(out - ref))))
    print("KERNEL_OK")
</pallas_src>

<mosaic_0001>
module attributes {stable_mosaic.version = 11 : i64} {
  func.func @_uniform_fwd_kernel(%arg0: i32, %arg1: memref<4x128xf32, #tpu.memory_space<vmem>>, %arg2: memref<512x32xbf16, #tpu.memory_space<vmem>>, %arg3: memref<32x128xbf16, #tpu.memory_space<vmem>>, %arg4: memref<1x128xf32, #tpu.memory_space<vmem>>, %arg5: memref<5x128x128xbf16, #tpu.memory_space<vmem>>, %arg6: memref<5x1x128xf32, #tpu.memory_space<vmem>>, %arg7: memref<1x128xf32, #tpu.memory_space<vmem>>, %arg8: memref<1x1xf32, #tpu.memory_space<vmem>>, %arg9: memref<4x128xf32, #tpu.memory_space<vmem>>) attributes {dimension_semantics = [#tpu.dimension_semantics<parallel>], iteration_bounds = array<i64: 1>, scalar_prefetch = 0 : i64, scratch_operands = 0 : i64, tpu.core_type = #tpu.core_type<tc>, window_params = [{transform_indices = @transform_0, window_bounds = array<i64: 4, 128>}, {transform_indices = @transform_1, window_bounds = array<i64: 512, 32>}, {pipeline_mode = #tpu.pipeline_mode<synchronous>, transform_indices = @transform_2, window_bounds = array<i64: 32, 128>}, {pipeline_mode = #tpu.pipeline_mode<synchronous>, transform_indices = @transform_3, window_bounds = array<i64: 1, 128>}, {pipeline_mode = #tpu.pipeline_mode<synchronous>, transform_indices = @transform_4, window_bounds = array<i64: 5, 128, 128>}, {pipeline_mode = #tpu.pipeline_mode<synchronous>, transform_indices = @transform_5, window_bounds = array<i64: 5, 1, 128>}, {pipeline_mode = #tpu.pipeline_mode<synchronous>, transform_indices = @transform_6, window_bounds = array<i64: 1, 128>}, {pipeline_mode = #tpu.pipeline_mode<synchronous>, transform_indices = @transform_7, window_bounds = array<i64: 1, 1>}, {transform_indices = @transform_8, window_bounds = array<i64: 4, 128>}]} {
    %c0 = arith.constant 0 : index
    %c0_0 = arith.constant 0 : index
    %0 = vector.load %arg2[%c0, %c0_0] : memref<512x32xbf16, #tpu.memory_space<vmem>>, vector<512x32xbf16>
    %c0_1 = arith.constant 0 : index
    %c0_2 = arith.constant 0 : index
    %1 = vector.load %arg3[%c0_1, %c0_2] : memref<32x128xbf16, #tpu.memory_space<vmem>>, vector<32x128xbf16>
    %cst = arith.constant dense<0.000000e+00> : vector<512x128xf32>
    %2 = tpu.matmul %0, %1, %cst {dimension_numbers = #tpu.dot_dimension_numbers<[1], [0], [0], [1], [0, 0, 1, 1], [], []>} : vector<512x32xbf16>, vector<32x128xbf16>, vector<512x128xf32> -> vector<512x128xf32>
    %c0_3 = arith.constant 0 : index
    %c0_4 = arith.constant 0 : index
    %3 = vector.load %arg4[%c0_3, %c0_4] : memref<1x128xf32, #tpu.memory_space<vmem>>, vector<1x128xf32>
    %4 = vector.broadcast %3 : vector<1x128xf32> to vector<512x128xf32>
    %5 = arith.addf %2, %4 : vector<512x128xf32>
    %cst_5 = arith.constant 0.000000e+00 : f32
    %6 = vector.broadcast %cst_5 : f32 to vector<512x128xf32>
    %7 = arith.maximumf %5, %6 : vector<512x128xf32>
    %8 = arith.truncf %7 : vector<512x128xf32> to vector<512x128xbf16>
    %c0_6 = arith.constant 0 : index
    %c0_7 = arith.constant 0 : index
    %c0_8 = arith.constant 0 : index
    %9 = vector.load %arg5[%c0_6, %c0_7, %c0_8] : memref<5x128x128xbf16, #tpu.memory_space<vmem>>, vector<1x128x128xbf16>
    %10 = vector.shape_cast %9 : vector<1x128x128xbf16> to vector<128x128xbf16>
    %cst_9 = arith.constant dense<0.000000e+00> : vector<512x128xf32>
    %11 = tpu.matmul %8, %10, %cst_9 {dimension_numbers = #tpu.dot_dimension_numbers<[1], [0], [0], [1], [0, 0, 1, 1], [], []>} : vector<512x128xbf16>, vector<128x128xbf16>, vector<512x128xf32> -> vector<512x128xf32>
    %c0_10 = arith.constant 0 : index
    %c0_11 = arith.constant 0 : index
    %c0_12 = arith.constant 0 : index
    %12 = vector.load %arg6[%c0_10, %c0_11, %c0_12] : memref<5x1x128xf32, #tpu.memory_space<vmem>>, vector<1x1x128xf32>
    %13 = vector.shape_cast %12 : vector<1x1x128xf32> to vector<1x128xf32>
    %14 = vector.broadcast %13 : vector<1x128xf32> to vector<512x128xf32>
    %15 = arith.addf %11, %14 : vector<512x128xf32>
    %cst_13 = arith.constant 0.000000e+00 : f32
    %16 = vector.broadcast %cst_13 : f32 to vector<512x128xf32>
    %17 = arith.maximumf %15, %16 : vector<512x128xf32>
    %18 = arith.truncf %17 : vector<512x128xf32> to vector<512x128xbf16>
    %c1 = arith.constant 1 : index
    %c0_14 = arith.constant 0 : index
    %c0_15 = arith.constant 0 : index
    %19 = vector.load %arg5[%c1, %c0_14, %c0_15] : memref<5x128x128xbf16, #tpu.memory_space<vmem>>, vector<1x128x128xbf16>
    %20 = vector.shape_cast %19 : vector<1x128x128xbf16> to vector<128x128xbf16>
    %cst_16 = arith.constant dense<0.000000e+00> : vector<512x128xf32>
    %21 = tpu.matmul %18, %20, %cst_16 {dimension_numbers = #tpu.dot_dimension_numbers<[1], [0], [0], [1], [0, 0, 1, 1], [], []>} : vector<512x128xbf16>, vector<128x128xbf16>, vector<512x128xf32> -> vector<512x128xf32>
    %c1_17 = arith.constant 1 : index
    %c0_18 = arith.constant 0 : index
    %c0_19 = arith.constant 0 : index
    %22 = vector.load %arg6[%c1_17, %c0_18, %c0_19] : memref<5x1x128xf32, #tpu.memory_space<vmem>>, vector<1x1x128xf32>
    %23 = vector.shape_cast %22 : vector<1x1x128xf32> to vector<1x128xf32>
    %24 = vector.broadcast %23 : vector<1x128xf32> to vector<512x128xf32>
    %25 = arith.addf %21, %24 : vector<512x128xf32>
    %cst_20 = arith.constant 0.000000e+00 : f32
    %26 = vector.broadcast %cst_20 : f32 to vector<512x128xf32>
    %27 = arith.maximumf %25, %26 : vector<512x128xf32>
    %28 = arith.truncf %27 : vector<512x128xf32> to vector<512x128xbf16>
    %c2 = arith.constant 2 : index
    %c0_21 = arith.constant 0 : index
    %c0_22 = arith.constant 0 : index
    %29 = vector.load %arg5[%c2, %c0_21, %c0_22] : memref<5x128x128xbf16, #tpu.memory_space<vmem>>, vector<1x128x128xbf16>
    %30 = vector.shape_cast %29 : vector<1x128x128xbf16> to vector<128x128xbf16>
    %cst_23 = arith.constant dense<0.000000e+00> : vector<512x128xf32>
    %31 = tpu.matmul %28, %30, %cst_23 {dimension_numbers = #tpu.dot_dimension_numbers<[1], [0], [0], [1], [0, 0, 1, 1], [], []>} : vector<512x128xbf16>, vector<128x128xbf16>, vector<512x128xf32> -> vector<512x128xf32>
    %c2_24 = arith.constant 2 : index
    %c0_25 = arith.constant 0 : index
    %c0_26 = arith.constant 0 : index
    %32 = vector.load %arg6[%c2_24, %c0_25, %c0_26] : memref<5x1x128xf32, #tpu.memory_space<vmem>>, vector<1x1x128xf32>
    %33 = vector.shape_cast %32 : vector<1x1x128xf32> to vector<1x128xf32>
    %34 = vector.broadcast %33 : vector<1x128xf32> to vector<512x128xf32>
    %35 = arith.addf %31, %34 : vector<512x128xf32>
    %cst_27 = arith.constant 0.000000e+00 : f32
    %36 = vector.broadcast %cst_27 : f32 to vector<512x128xf32>
    %37 = arith.maximumf %35, %36 : vector<512x128xf32>
    %38 = arith.truncf %37 : vector<512x128xf32> to vector<512x128xbf16>
    %c3 = arith.constant 3 : index
    %c0_28 = arith.constant 0 : index
    %c0_29 = arith.constant 0 : index
    %39 = vector.load %arg5[%c3, %c0_28, %c0_29] : memref<5x128x128xbf16, #tpu.memory_space<vmem>>, vector<1x128x128xbf16>
    %40 = vector.shape_cast %39 : vector<1x128x128xbf16> to vector<128x128xbf16>
    %cst_30 = arith.constant dense<0.000000e+00> : vector<512x128xf32>
    %41 = tpu.matmul %38, %40, %cst_30 {dimension_numbers = #tpu.dot_dimension_numbers<[1], [0], [0], [1], [0, 0, 1, 1], [], []>} : vector<512x128xbf16>, vector<128x128xbf16>, vector<512x128xf32> -> vector<512x128xf32>
    %c3_31 = arith.constant 3 : index
    %c0_32 = arith.constant 0 : index
    %c0_33 = arith.constant 0 : index
    %42 = vector.load %arg6[%c3_31, %c0_32, %c0_33] : memref<5x1x128xf32, #tpu.memory_space<vmem>>, vector<1x1x128xf32>
    %43 = vector.shape_cast %42 : vector<1x1x128xf32> to vector<1x128xf32>
    %44 = vector.broadcast %43 : vector<1x128xf32> to vector<512x128xf32>
    %45 = arith.addf %41, %44 : vector<512x128xf32>
    %cst_34 = arith.constant 0.000000e+00 : f32
    %46 = vector.broadcast %cst_34 : f32 to vector<512x128xf32>
    %47 = arith.maximumf %45, %46 : vector<512x128xf32>
    %48 = arith.truncf %47 : vector<512x128xf32> to vector<512x128xbf16>
    %c4 = arith.constant 4 : index
    %c0_35 = arith.constant 0 : index
    %c0_36 = arith.constant 0 : index
    %49 = vector.load %arg5[%c4, %c0_35, %c0_36] : memref<5x128x128xbf16, #tpu.memory_space<vmem>>, vector<1x128x128xbf16>
    %50 = vector.shape_cast %49 : vector<1x128x128xbf16> to vector<128x128xbf16>
    %cst_37 = arith.constant dense<0.000000e+00> : vector<512x128xf32>
    %51 = tpu.matmul %48, %50, %cst_37 {dimension_numbers = #tpu.dot_dimension_numbers<[1], [0], [0], [1], [0, 0, 1, 1], [], []>} : vector<512x128xbf16>, vector<128x128xbf16>, vector<512x128xf32> -> vector<512x128xf32>
    %c4_38 = arith.constant 4 : index
    %c0_39 = arith.constant 0 : index
    %c0_40 = arith.constant 0 : index
    %52 = vector.load %arg6[%c4_38, %c0_39, %c0_40] : memref<5x1x128xf32, #tpu.memory_space<vmem>>, vector<1x1x128xf32>
    %53 = vector.shape_cast %52 : vector<1x1x128xf32> to vector<1x128xf32>
    %54 = vector.broadcast %53 : vector<1x128xf32> to vector<512x128xf32>
    %55 = arith.addf %51, %54 : vector<512x128xf32>
    %cst_41 = arith.constant 0.000000e+00 : f32
    %56 = vector.broadcast %cst_41 : f32 to vector<512x128xf32>
    %57 = arith.maximumf %55, %56 : vector<512x128xf32>
    %c0_42 = arith.constant 0 : index
    %c0_43 = arith.constant 0 : index
    %58 = vector.load %arg7[%c0_42, %c0_43] : memref<1x128xf32, #tpu.memory_space<vmem>>, vector<1x128xf32>
    %59 = vector.broadcast %58 : vector<1x128xf32> to vector<512x128xf32>
    %60 = arith.mulf %57, %59 : vector<512x128xf32>
    %cst_44 = arith.constant dense<0.000000e+00> : vector<512xf32>
    %61 = vector.multi_reduction <add>, %60, %cst_44 [1] : vector<512x128xf32> to vector<512xf32>
    %62 = vector.shape_cast %61 : vector<512xf32> to vector<512x1xf32>
    %c0_45 = arith.constant 0 : index
    %c0_46 = arith.constant 0 : index
    %63 = vector.load %arg8[%c0_45, %c0_46] : memref<1x1xf32, #tpu.memory_space<vmem>>, vector<1x1xf32>
    %64 = vector.broadcast %63 : vector<1x1xf32> to vector<512x1xf32>
    %65 = arith.addf %62, %64 : vector<512x1xf32>
    %66 = math.absf %65 : vector<512x1xf32>
    %67 = vector.shape_cast %66 : vector<512x1xf32> to vector<4x128xf32>
    %c0_47 = arith.constant 0 : index
    %c0_48 = arith.constant 0 : index
    %68 = vector.load %arg1[%c0_47, %c0_48] : memref<4x128xf32, #tpu.memory_space<vmem>>, vector<4x128xf32>
    %cst_49 = arith.constant 1.000000e-03 : f32
    %69 = vector.broadcast %cst_49 : f32 to vector<4x128xf32>
    %70 = arith.addf %69, %67 : vector<4x128xf32>
    %71 = tpu.reciprocal %70 {approx = true} : vector<4x128xf32> -> vector<4x128xf32>
    %72 = arith.mulf %68, %71 : vector<4x128xf32>
    %73 = math.absf %72 : vector<4x128xf32>
    %cst_50 = arith.constant 0.000000e+00 : f32
    %74 = vector.broadcast %cst_50 : f32 to vector<4x128xf32>
    %75 = arith.subf %74, %73 : vector<4x128xf32>
    %76 = math.exp %75 : vector<4x128xf32>
    %cst_51 = arith.constant 1.000000e+00 : f32
    %77 = vector.broadcast %cst_51 : f32 to vector<4x128xf32>
    %78 = arith.addf %77, %76 : vector<4x128xf32>
    %79 = tpu.reciprocal %78 {approx = true} : vector<4x128xf32> -> vector<4x128xf32>
    %cst_52 = arith.constant 0.000000e+00 : f32
    %80 = vector.broadcast %cst_52 : f32 to vector<4x128xf32>
    %81 = arith.cmpf oge, %72, %80 : vector<4x128xf32>
    %cst_53 = arith.constant 1.000000e+00 : f32
    %82 = vector.broadcast %cst_53 : f32 to vector<4x128xf32>
    %83 = arith.subf %82, %79 : vector<4x128xf32>
    %84 = arith.select %81, %79, %83 : vector<4x128xi1>, vector<4x128xf32>
    %c0_54 = arith.constant 0 : index
    %c0_55 = arith.constant 0 : index
    %85 = vector.load %arg9[%c0_54, %c0_55] : memref<4x128xf32, #tpu.memory_space<vmem>>, vector<4x128xf32>
    tpu.vector_store %arg9[%c0_54, %c0_55], %84 {strides = array<i32>} : memref<4x128xf32, #tpu.memory_space<vmem>>, vector<4x128xf32>,
    return
  }
  func.func @transform_0(%arg0: i32) -> (i32, i32) {
    %c0_i32 = arith.constant 0 : i32
    %c0_i32_0 = arith.constant 0 : i32
    return %arg0, %c0_i32 : i32, i32
  }
  func.func @transform_1(%arg0: i32) -> (i32, i32) {
    %c0_i32 = arith.constant 0 : i32
    %c0_i32_0 = arith.constant 0 : i32
    return %arg0, %c0_i32 : i32, i32
  }
  func.func @transform_2(%arg0: i32) -> (i32, i32) {
    %c0_i32 = arith.constant 0 : i32
    %c0_i32_0 = arith.constant 0 : i32
    %c0_i32_1 = arith.constant 0 : i32
    return %c0_i32, %c0_i32_0 : i32, i32
  }
  func.func @transform_3(%arg0: i32) -> (i32, i32) {
    %c0_i32 = arith.constant 0 : i32
    %c0_i32_0 = arith.constant 0 : i32
    %c0_i32_1 = arith.constant 0 : i32
    return %c0_i32, %c0_i32_0 : i32, i32
  }
  func.func @transform_4(%arg0: i32) -> (i32, i32, i32) {
    %c0_i32 = arith.constant 0 : i32
    %c0_i32_0 = arith.constant 0 : i32
    %c0_i32_1 = arith.constant 0 : i32
    %c0_i32_2 = arith.constant 0 : i32
    return %c0_i32, %c0_i32_0, %c0_i32_1 : i32, i32, i32
  }
  func.func @transform_5(%arg0: i32) -> (i32, i32, i32) {
    %c0_i32 = arith.constant 0 : i32
    %c0_i32_0 = arith.constant 0 : i32
    %c0_i32_1 = arith.constant 0 : i32
    %c0_i32_2 = arith.constant 0 : i32
    return %c0_i32, %c0_i32_0, %c0_i32_1 : i32, i32, i32
  }
  func.func @transform_6(%arg0: i32) -> (i32, i32) {
    %c0_i32 = arith.constant 0 : i32
    %c0_i32_0 = arith.constant 0 : i32
    %c0_i32_1 = arith.constant 0 : i32
    return %c0_i32, %c0_i32_0 : i32, i32
  }
  func.func @transform_7(%arg0: i32) -> (i32, i32) {
    %c0_i32 = arith.constant 0 : i32
    %c0_i32_0 = arith.constant 0 : i32
    %c0_i32_1 = arith.constant 0 : i32
    return %c0_i32, %c0_i32_0 : i32, i32
  }
  func.func @transform_8(%arg0: i32) -> (i32, i32) {
    %c0_i32 = arith.constant 0 : i32
    %c0_i32_0 = arith.constant 0 : i32
    return %arg0, %c0_i32 : i32, i32
  }
}

</mosaic_0001>

<llo_original>
// kernel: _lambda_.1
$region0: #{_lambda_.1}
  #allocation0 [shape = 'u32[]', space=smem, size = 0x4, offset = 0x4, fixed_abs, tag = 'smem constant byte address 0x4 - core index']
  #allocation1 [shape = 'u32[144,128]{1,0:T(1,128)}', space=vmem, size = 0x12000, scoped, tag = 'internal scratch']
  #allocation2 [shape = 'f32[1,1]{1,0:T(1,128)S(1)}', space=vmem, size = 0x200, scoped, tag = 'scoped memory for _lambda_.1']
  %s0 = inlined_call_operand.vmem [shape: f32[4,128], index: 0, kind: input, shape index: {}]
  %s1 = inlined_call_operand.vmem [shape: bf16[512,32], index: 1, kind: input, shape index: {}]
  %s2 = inlined_call_operand.vmem [shape: bf16[32,128], index: 2, kind: input, shape index: {}]
  %s3 = inlined_call_operand.vmem [shape: f32[1,128], index: 3, kind: input, shape index: {}]
  %s4 = inlined_call_operand.vmem [shape: bf16[5,128,128], index: 4, kind: input, shape index: {}]
  %s5 = inlined_call_operand.vmem [shape: f32[5,1,128], index: 5, kind: input, shape index: {}]
  %s6 = inlined_call_operand.vmem [shape: f32[1,128], index: 6, kind: input, shape index: {}]
  %s7 = inlined_call_operand.<no memory space> [shape: f32[1,1], index: 7, kind: input, shape index: {}]
  %s8 = inlined_call_operand.hbm [shape: f32[4,128], index: 8, kind: output, shape index: {}]
  %s9 = sld [smem:[#allocation0]]
  $region42: #{_lambda_.1} parent=0
    _
  %s11 = ssub.s32 1, %s9
  %s12 = scalar_select 0, %s11, %s9
  %v13 = vstv %s7
  %14 = vst [vmem:[#allocation2] sm:$0x1] %v13
  $region1: #{_lambda_.1} parent=0
    #allocation3 [shape = 'u8[2048]{0}', space=vmem, size = 0x800, scoped, tag = 'output window, operand 0, single buffered']
    #allocation4 [shape = 's32[1]{0}', space=sflag, size = 0x4, scoped, tag = 'scoped memory for _lambda_.1']
    %15 = vsyncpa [#allocation4], 0
    // Predicated region
    $region2: #{_lambda_.1} parent=1 // pred_check
      _
    $region3: #{_lambda_.1} parent=1 // pred_check_branch
      %17 = sbr.rel (0) target = $region5
    $region4: #{_lambda_.1} parent=1 // pred_region
      _
    $region5: #{_lambda_.1} parent=1 // pred_fallthru
      _
    // Predicated region
    $region6: #{_lambda_.1} parent=1 // pred_check
      _
    $region7: #{_lambda_.1} parent=1 // pred_check_branch
      %19 = sbr.rel (0) target = $region9
    $region8: #{_lambda_.1} parent=1 // pred_region
      _
    $region9: #{_lambda_.1} parent=1 // pred_fallthru
      _
    // Predicated region
    $region10: #{_lambda_.1} parent=1 // pred_check
      _
    $region11: #{_lambda_.1} parent=1 // pred_check_branch
      %21 = sbr.rel (0) target = $region13
    $region12: #{_lambda_.1} parent=1 // pred_region
      _
    $region13: #{_lambda_.1} parent=1 // pred_fallthru
      _
    // Predicated region
    $region14: #{_lambda_.1} parent=1 // pred_check
      _
    $region15: #{_lambda_.1} parent=1 // pred_check_branch
      %23 = sbr.rel (0) target = $region17
    $region16: #{_lambda_.1} parent=1 // pred_region
      _
    $region17: #{_lambda_.1} parent=1 // pred_fallthru
      _
    // Predicated region
    $region18: #{_lambda_.1} parent=1 // pred_check
      _
    $region19: #{_lambda_.1} parent=1 // pred_check_branch
      %25 = sbr.rel (0) target = $region21
    $region20: #{_lambda_.1} parent=1 // pred_region
      _
    $region21: #{_lambda_.1} parent=1 // pred_fallthru
      _
    // Predicated region
    $region22: #{_lambda_.1} parent=1 // pred_check
      _
    $region23: #{_lambda_.1} parent=1 // pred_check_branch
      %27 = sbr.rel (0) target = $region25
    $region24: #{_lambda_.1} parent=1 // pred_region
      _
    $region25: #{_lambda_.1} parent=1 // pred_fallthru
      _
    // Predicated region
    $region26: #{_lambda_.1} parent=1 // pred_check
      _
    $region27: #{_lambda_.1} parent=1 // pred_check_branch
      %29 = sbr.rel (0) target = $region29
    $region28: #{_lambda_.1} parent=1 // pred_region
      _
    $region29: #{_lambda_.1} parent=1 // pred_fallthru
      _
    // Predicated region
    $region30: #{_lambda_.1} parent=1 // pred_check
      _
    $region31: #{_lambda_.1} parent=1 // pred_check_branch
      %31 = sbr.rel (0) target = $region33
    $region32: #{_lambda_.1} parent=1 // pred_region
      _
    $region33: #{_lambda_.1} parent=1 // pred_fallthru
      _
    %v33 = vld [vmem:[%s1] sm:$0xf]
    %v34 = vld [vmem:[%s1 + $0x4] sm:$0xf]
    %v35 = vld [vmem:[%s1 + $0x8] sm:$0xf]
    %v36 = vld [vmem:[%s1 + $0xc] sm:$0xf]
    %v37 = vld [vmem:[%s1 + $0x10] sm:$0xf]
    %v38 = vld [vmem:[%s1 + $0x14] sm:$0xf]
    %v39 = vld [vmem:[%s1 + $0x18] sm:$0xf]
    %v40 = vld [vmem:[%s1 + $0x1c] sm:$0xf]
    %v41 = vld [vmem:[%s1 + $0x20] sm:$0xf]
    %v42 = vld [vmem:[%s1 + $0x24] sm:$0xf]
    %v43 = vld [vmem:[%s1 + $0x28] sm:$0xf]
    %v44 = vld [vmem:[%s1 + $0x2c] sm:$0xf]
    %v45 = vld [vmem:[%s1 + $0x30] sm:$0xf]
    %v46 = vld [vmem:[%s1 + $0x34] sm:$0xf]
    %v47 = vld [vmem:[%s1 + $0x38] sm:$0xf]
    %v48 = vld [vmem:[%s1 + $0x3c] sm:$0xf]
    %v49 = vld [vmem:[%s1 + $0x40] sm:$0xf]
    %v50 = vld [vmem:[%s1 + $0x44] sm:$0xf]
    %v51 = vld [vmem:[%s1 + $0x48] sm:$0xf]
    %v52 = vld [vmem:[%s1 + $0x4c] sm:$0xf]
    %v53 = vld [vmem:[%s1 + $0x50] sm:$0xf]
    %v54 = vld [vmem:[%s1 + $0x54] sm:$0xf]
    %v55 = vld [vmem:[%s1 + $0x58] sm:$0xf]
    %v56 = vld [vmem:[%s1 + $0x5c] sm:$0xf]
    %v57 = vld [vmem:[%s1 + $0x60] sm:$0xf]
    %v58 = vld [vmem:[%s1 + $0x64] sm:$0xf]
    %v59 = vld [vmem:[%s1 + $0x68] sm:$0xf]
    %v60 = vld [vmem:[%s1 + $0x6c] sm:$0xf]
    %v61 = vld [vmem:[%s1 + $0x70] sm:$0xf]
    %v62 = vld [vmem:[%s1 + $0x74] sm:$0xf]
    %v63 = vld [vmem:[%s1 + $0x78] sm:$0xf]
    %v64 = vld [vmem:[%s1 + $0x7c] sm:$0xf]
    %v65 = vld [vmem:[%s1 + $0x80] sm:$0xf]
    %v66 = vld [vmem:[%s1 + $0x84] sm:$0xf]
    %v67 = vld [vmem:[%s1 + $0x88] sm:$0xf]
    %v68 = vld [vmem:[%s1 + $0x8c] sm:$0xf]
    %v69 = vld [vmem:[%s1 + $0x90] sm:$0xf]
    %v70 = vld [vmem:[%s1 + $0x94] sm:$0xf]
    %v71 = vld [vmem:[%s1 + $0x98] sm:$0xf]
    %v72 = vld [vmem:[%s1 + $0x9c] sm:$0xf]
    %v73 = vld [vmem:[%s1 + $0xa0] sm:$0xf]
    %v74 = vld [vmem:[%s1 + $0xa4] sm:$0xf]
    %v75 = vld [vmem:[%s1 + $0xa8] sm:$0xf]
    %v76 = vld [vmem:[%s1 + $0xac] sm:$0xf]
    %v77 = vld [vmem:[%s1 + $0xb0] sm:$0xf]
    %v78 = vld [vmem:[%s1 + $0xb4] sm:$0xf]
    %v79 = vld [vmem:[%s1 + $0xb8] sm:$0xf]
    %v80 = vld [vmem:[%s1 + $0xbc] sm:$0xf]
    %v81 = vld [vmem:[%s1 + $0xc0] sm:$0xf]
    %v82 = vld [vmem:[%s1 + $0xc4] sm:$0xf]
    %v83 = vld [vmem:[%s1 + $0xc8] sm:$0xf]
    %v84 = vld [vmem:[%s1 + $0xcc] sm:$0xf]
    %v85 = vld [vmem:[%s1 + $0xd0] sm:$0xf]
    %v86 = vld [vmem:[%s1 + $0xd4] sm:$0xf]
    %v87 = vld [vmem:[%s1 + $0xd8] sm:$0xf]
    %v88 = vld [vmem:[%s1 + $0xdc] sm:$0xf]
    %v89 = vld [vmem:[%s1 + $0xe0] sm:$0xf]
    %v90 = vld [vmem:[%s1 + $0xe4] sm:$0xf]
    %v91 = vld [vmem:[%s1 + $0xe8] sm:$0xf]
    %v92 = vld [vmem:[%s1 + $0xec] sm:$0xf]
    %v93 = vld [vmem:[%s1 + $0xf0] sm:$0xf]
    %v94 = vld [vmem:[%s1 + $0xf4] sm:$0xf]
    %v95 = vld [vmem:[%s1 + $0xf8] sm:$0xf]
    %v96 = vld [vmem:[%s1 + $0xfc] sm:$0xf]
    %v97 = vld [vmem:[%s2] sm:$0xf]
    %v98 = vld [vmem:[%s2 + $0x4] sm:$0xf]
    %v99 = vld [vmem:[%s2 + $0x8] sm:$0xf]
    %v100 = vld [vmem:[%s2 + $0xc] sm:$0xf]
    %v101 = vld [vmem:[%s3] sm:$0x1]
    %v103 = vlaneseq
    %v104 = vshrl.u32 %v103, 7
    %v105 = vsub.s32 0, %v104
    %v106 = vrot.slane %v101, %v105
    %v172 = vunpack.c.l.b16 %v33
    %v173 = vunpack.c.l.b16 %v34
    %v174 = vunpack.c.l.b16 %v35
    %v175 = vunpack.c.l.b16 %v36
    %v176 = vunpack.c.l.b16 %v37
    %v177 = vunpack.c.l.b16 %v38
    %v178 = vunpack.c.l.b16 %v39
    %v179 = vunpack.c.l.b16 %v40
    %v180 = vunpack.c.l.b16 %v41
    %v181 = vunpack.c.l.b16 %v42
    %v182 = vunpack.c.l.b16 %v43
    %v183 = vunpack.c.l.b16 %v44
    %v184 = vunpack.c.l.b16 %v45
    %v185 = vunpack.c.l.b16 %v46
    %v186 = vunpack.c.l.b16 %v47
    %v187 = vunpack.c.l.b16 %v48
    %v188 = vunpack.c.l.b16 %v49
    %v189 = vunpack.c.l.b16 %v50
    %v190 = vunpack.c.l.b16 %v51
    %v191 = vunpack.c.l.b16 %v52
    %v192 = vunpack.c.l.b16 %v53
    %v193 = vunpack.c.l.b16 %v54
    %v194 = vunpack.c.l.b16 %v55
    %v195 = vunpack.c.l.b16 %v56
    %v196 = vunpack.c.l.b16 %v57
    %v197 = vunpack.c.l.b16 %v58
    %v198 = vunpack.c.l.b16 %v59
    %v199 = vunpack.c.l.b16 %v60
    %v200 = vunpack.c.l.b16 %v61
    %v201 = vunpack.c.l.b16 %v62
    %v202 = vunpack.c.l.b16 %v63
    %v203 = vunpack.c.l.b16 %v64
    %v204 = vunpack.c.l.b16 %v65
    %v205 = vunpack.c.l.b16 %v66
    %v206 = vunpack.c.l.b16 %v67
    %v207 = vunpack.c.l.b16 %v68
    %v208 = vunpack.c.l.b16 %v69
    %v209 = vunpack.c.l.b16 %v70
    %v210 = vunpack.c.l.b16 %v71
    %v211 = vunpack.c.l.b16 %v72
    %v212 = vunpack.c.l.b16 %v73
    %v213 = vunpack.c.l.b16 %v74
    %v214 = vunpack.c.l.b16 %v75
    %v215 = vunpack.c.l.b16 %v76
    %v216 = vunpack.c.l.b16 %v77
    %v217 = vunpack.c.l.b16 %v78
    %v218 = vunpack.c.l.b16 %v79
    %v219 = vunpack.c.l.b16 %v80
    %v220 = vunpack.c.l.b16 %v81
    %v221 = vunpack.c.l.b16 %v82
    %v222 = vunpack.c.l.b16 %v83
    %v223 = vunpack.c.l.b16 %v84
    %v224 = vunpack.c.l.b16 %v85
    %v225 = vunpack.c.l.b16 %v86
    %v226 = vunpack.c.l.b16 %v87
    %v227 = vunpack.c.l.b16 %v88
    %v228 = vunpack.c.l.b16 %v89
    %v229 = vunpack.c.l.b16 %v90
    %v230 = vunpack.c.l.b16 %v91
    %v231 = vunpack.c.l.b16 %v92
    %v232 = vunpack.c.l.b16 %v93
    %v233 = vunpack.c.l.b16 %v94
    %v234 = vunpack.c.l.b16 %v95
    %v235 = vunpack.c.l.b16 %v96
    %v236 = vpack.c.b16 %v173, %v172
    %v237 = vpack.c.b16 %v175, %v174
    %v238 = vpack.c.b16 %v177, %v176
    %v239 = vpack.c.b16 %v179, %v178
    %v240 = vpack.c.b16 %v181, %v180
    %v241 = vpack.c.b16 %v183, %v182
    %v242 = vpack.c.b16 %v185, %v184
    %v243 = vpack.c.b16 %v187, %v186
    %v244 = vpack.c.b16 %v189, %v188
    %v245 = vpack.c.b16 %v191, %v190
    %v246 = vpack.c.b16 %v193, %v192
    %v247 = vpack.c.b16 %v195, %v194
    %v248 = vpack.c.b16 %v197, %v196
    %v249 = vpack.c.b16 %v199, %v198
    %v250 = vpack.c.b16 %v201, %v200
    %v251 = vpack.c.b16 %v203, %v202
    %v252 = vpack.c.b16 %v205, %v204
    %v253 = vpack.c.b16 %v207, %v206
    %v254 = vpack.c.b16 %v209, %v208
    %v255 = vpack.c.b16 %v211, %v210
    %v256 = vpack.c.b16 %v213, %v212
    %v257 = vpack.c.b16 %v215, %v214
    %v258 = vpack.c.b16 %v217, %v216
    %v259 = vpack.c.b16 %v219, %v218
    %v260 = vpack.c.b16 %v221, %v220
    %v261 = vpack.c.b16 %v223, %v222
    %v262 = vpack.c.b16 %v225, %v224
    %v263 = vpack.c.b16 %v227, %v226
    %v264 = vpack.c.b16 %v229, %v228
    %v265 = vpack.c.b16 %v231, %v230
    %v266 = vpack.c.b16 %v233, %v232
    %v267 = vpack.c.b16 %v235, %v234
    %v272 = vunpack.c.l.b16 %v97
    %v273 = vunpack.c.l.b16 %v98
    %v274 = vunpack.c.l.b16 %v99
    %v275 = vunpack.c.l.b16 %v100
    %v276 = vpack.c.b16 %v273, %v272
    %v277 = vpack.c.b16 %v275, %v274
    %vm280 = vcmask 261120
    %v282 = vsel %vm280, %v236, 0
    %v285 = vsel %vm280, %v237, 0
    %v288 = vsel %vm280, %v238, 0
    %v291 = vsel %vm280, %v239, 0
    %v294 = vsel %vm280, %v240, 0
    %v297 = vsel %vm280, %v241, 0
    %v300 = vsel %vm280, %v242, 0
    %v303 = vsel %vm280, %v243, 0
    %v306 = vsel %vm280, %v244, 0
    %v309 = vsel %vm280, %v245, 0
    %v312 = vsel %vm280, %v246, 0
    %v315 = vsel %vm280, %v247, 0
    %v318 = vsel %vm280, %v248, 0
    %v321 = vsel %vm280, %v249, 0
    %v324 = vsel %vm280, %v250, 0
    %v327 = vsel %vm280, %v251, 0
    %v330 = vsel %vm280, %v252, 0
    %v333 = vsel %vm280, %v253, 0
    %v336 = vsel %vm280, %v254, 0
    %v339 = vsel %vm280, %v255, 0
    %v342 = vsel %vm280, %v256, 0
    %v345 = vsel %vm280, %v257, 0
    %v348 = vsel %vm280, %v258, 0
    %v351 = vsel %vm280, %v259, 0
    %v354 = vsel %vm280, %v260, 0
    %v357 = vsel %vm280, %v261, 0
    %v360 = vsel %vm280, %v262, 0
    %v363 = vsel %vm280, %v263, 0
    %v366 = vsel %vm280, %v264, 0
    %v369 = vsel %vm280, %v265, 0
    %v372 = vsel %vm280, %v266, 0
    %v375 = vsel %vm280, %v267, 0
    %377 = vmatprep.subr.bf16.mxu0 0
    %378 = vmatpush1.bf16.msra.mxu0 0
    %379 = vmatprep.subr.bf16.mxu0 0
    %380 = vmatpush1.bf16.msra.mxu0 0
    %381 = vmatprep.subr.bf16.mxu0 0
    %382 = vmatpush1.bf16.msra.mxu0 0
    %383 = vmatprep.subr.bf16.mxu0 0
    %384 = vmatpush1.bf16.msra.mxu0 0
    %385 = vmatprep.subr.bf16.mxu0 0
    %386 = vmatpush1.bf16.msra.mxu0 0
    %387 = vmatprep.subr.bf16.mxu0 0
    %388 = vmatpush1.bf16.msra.mxu0 0
    %389 = vmatprep.subr.bf16.mxu0 0
    %390 = vmatpush1.bf16.msra.mxu0 %v277
    %391 = vmatprep.subr.bf16.mxu0 0
    %392 = vmatpush1.bf16.msra.mxu0 %v276
    %393 = vmatprep.subr.bf16.mxu0 0
    %394 = vmatpush2.bf16.msra.mxu0 0
    %395 = vmatprep.subr.bf16.mxu0 0
    %396 = vmatpush2.bf16.msra.mxu0 0
    %397 = vmatprep.subr.bf16.mxu0 0
    %398 = vmatpush2.bf16.msra.mxu0 0
    %399 = vmatprep.subr.bf16.mxu0 0
    %400 = vmatpush2.bf16.msra.mxu0 0
    %401 = vmatprep.subr.bf16.mxu0 0
    %402 = vmatpush2.bf16.msra.mxu0 0
    %403 = vmatprep.subr.bf16.mxu0 0
    %404 = vmatpush2.bf16.msra.mxu0 0
    %405 = vmatprep.subr.bf16.mxu0 0
    %406 = vmatpush2.bf16.msra.mxu0 0
    %407 = vmatprep.subr.bf16.mxu0 0
    %408 = vmatpush2.bf16.msra.mxu0 0
    %409 = vmatprep.mubr.bf16.mxu0 0
    %410 = vmatmul.mubr.bf16.gmra.mxu0 %v282
    %v411 = vpop.f32.mrf.mxu0
    %v412 = vadd.f32 %v106, %v411
    %v413 = vpop.f32.mrf.mxu0
    %v414 = vpop.f32.mrf.mxu0
    %v415 = vadd.f32 %v106, %v414
    %v416 = vpop.f32.mrf.mxu0
    %417 = vmatprep.mubr.bf16.mxu0 0
    %418 = vmatmul.mubr.bf16.gmra.mxu0 %v285
    %v419 = vpop.f32.mrf.mxu0
    %v420 = vadd.f32 %v106, %v419
    %v421 = vpop.f32.mrf.mxu0
    %v422 = vpop.f32.mrf.mxu0
    %v423 = vadd.f32 %v106, %v422
    %v424 = vpop.f32.mrf.mxu0
    %425 = vmatprep.mubr.bf16.mxu0 0
    %426 = vmatmul.mubr.bf16.gmra.mxu0 %v288
    %v427 = vpop.f32.mrf.mxu0
    %v428 = vadd.f32 %v106, %v427
    %v429 = vpop.f32.mrf.mxu0
    %v430 = vpop.f32.mrf.mxu0
    %v431 = vadd.f32 %v106, %v430
    %v432 = vpop.f32.mrf.mxu0
    %433 = vmatprep.mubr.bf16.mxu0 0
    %434 = vmatmul.mubr.bf16.gmra.mxu0 %v291
    %v435 = vpop.f32.mrf.mxu0
    %v436 = vadd.f32 %v106, %v435
    %v437 = vpop.f32.mrf.mxu0
    %v438 = vpop.f32.mrf.mxu0
    %v439 = vadd.f32 %v106, %v438
    %v440 = vpop.f32.mrf.mxu0
    %441 = vmatprep.mubr.bf16.mxu0 0
    %442 = vmatmul.mubr.bf16.gmra.mxu0 %v294
    %v443 = vpop.f32.mrf.mxu0
    %v444 = vadd.f32 %v106, %v443
    %v445 = vpop.f32.mrf.mxu0
    %v446 = vpop.f32.mrf.mxu0
    %v447 = vadd.f32 %v106, %v446
    %v448 = vpop.f32.mrf.mxu0
    %449 = vmatprep.mubr.bf16.mxu0 0
    %450 = vmatmul.mubr.bf16.gmra.mxu0 %v297
    %v451 = vpop.f32.mrf.mxu0
    %v452 = vadd.f32 %v106, %v451
    %v453 = vpop.f32.mrf.mxu0
    %v454 = vpop.f32.mrf.mxu0
    %v455 = vadd.f32 %v106, %v454
    %v456 = vpop.f32.mrf.mxu0
    %457 = vmatprep.mubr.bf16.mxu0 0
    %458 = vmatmul.mubr.bf16.gmra.mxu0 %v300
    %v459 = vpop.f32.mrf.mxu0
    %v460 = vadd.f32 %v106, %v459
    %v461 = vpop.f32.mrf.mxu0
    %v462 = vpop.f32.mrf.mxu0
    %v463 = vadd.f32 %v106, %v462
    %v464 = vpop.f32.mrf.mxu0
    %465 = vmatprep.mubr.bf16.mxu0 0
    %466 = vmatmul.mubr.bf16.gmra.mxu0 %v303
    %v467 = vpop.f32.mrf.mxu0
    %v468 = vadd.f32 %v106, %v467
    %v469 = vpop.f32.mrf.mxu0
    %v470 = vpop.f32.mrf.mxu0
    %v471 = vadd.f32 %v106, %v470
    %v472 = vpop.f32.mrf.mxu0
    %473 = vmatprep.mubr.bf16.mxu0 0
    %474 = vmatmul.mubr.bf16.gmra.mxu0 %v306
    %v475 = vpop.f32.mrf.mxu0
    %v476 = vadd.f32 %v106, %v475
    %v477 = vpop.f32.mrf.mxu0
    %v478 = vpop.f32.mrf.mxu0
    %v479 = vadd.f32 %v106, %v478
    %v480 = vpop.f32.mrf.mxu0
    %481 = vmatprep.mubr.bf16.mxu0 0
    %482 = vmatmul.mubr.bf16.gmra.mxu0 %v309
    %v483 = vpop.f32.mrf.mxu0
    %v484 = vadd.f32 %v106, %v483
    %v485 = vpop.f32.mrf.mxu0
    %v486 = vpop.f32.mrf.mxu0
    %v487 = vadd.f32 %v106, %v486
    %v488 = vpop.f32.mrf.mxu0
    %489 = vmatprep.mubr.bf16.mxu0 0
    %490 = vmatmul.mubr.bf16.gmra.mxu0 %v312
    %v491 = vpop.f32.mrf.mxu0
    %v492 = vadd.f32 %v106, %v491
    %v493 = vpop.f32.mrf.mxu0
    %v494 = vpop.f32.mrf.mxu0
    %v495 = vadd.f32 %v106, %v494
    %v496 = vpop.f32.mrf.mxu0
    %497 = vmatprep.mubr.bf16.mxu0 0
    %498 = vmatmul.mubr.bf16.gmra.mxu0 %v315
    %v499 = vpop.f32.mrf.mxu0
    %v500 = vadd.f32 %v106, %v499
    %v501 = vpop.f32.mrf.mxu0
    %v502 = vpop.f32.mrf.mxu0
    %v503 = vadd.f32 %v106, %v502
    %v504 = vpop.f32.mrf.mxu0
    %505 = vmatprep.mubr.bf16.mxu0 0
    %506 = vmatmul.mubr.bf16.gmra.mxu0 %v318
    %v507 = vpop.f32.mrf.mxu0
    %v508 = vadd.f32 %v106, %v507
    %v509 = vpop.f32.mrf.mxu0
    %v510 = vpop.f32.mrf.mxu0
    %v511 = vadd.f32 %v106, %v510
    %v512 = vpop.f32.mrf.mxu0
    %513 = vmatprep.mubr.bf16.mxu0 0
    %514 = vmatmul.mubr.bf16.gmra.mxu0 %v321
    %v515 = vpop.f32.mrf.mxu0
    %v516 = vadd.f32 %v106, %v515
    %v517 = vpop.f32.mrf.mxu0
    %v518 = vpop.f32.mrf.mxu0
    %v519 = vadd.f32 %v106, %v518
    %v520 = vpop.f32.mrf.mxu0
    %521 = vmatprep.mubr.bf16.mxu0 0
    %522 = vmatmul.mubr.bf16.gmra.mxu0 %v324
    %v523 = vpop.f32.mrf.mxu0
    %v524 = vadd.f32 %v106, %v523
    %v525 = vpop.f32.mrf.mxu0
    %v526 = vpop.f32.mrf.mxu0
    %v527 = vadd.f32 %v106, %v526
    %v528 = vpop.f32.mrf.mxu0
    %529 = vmatprep.mubr.bf16.mxu0 0
    %530 = vmatmul.mubr.bf16.gmra.mxu0 %v327
    %v531 = vpop.f32.mrf.mxu0
    %v532 = vadd.f32 %v106, %v531
    %v533 = vpop.f32.mrf.mxu0
    %v534 = vpop.f32.mrf.mxu0
    %v535 = vadd.f32 %v106, %v534
    %v536 = vpop.f32.mrf.mxu0
    %537 = vmatprep.mubr.bf16.mxu0 0
    %538 = vmatmul.mubr.bf16.gmra.mxu0 %v330
    %v539 = vpop.f32.mrf.mxu0
    %v540 = vadd.f32 %v106, %v539
    %v541 = vpop.f32.mrf.mxu0
    %v542 = vpop.f32.mrf.mxu0
    %v543 = vadd.f32 %v106, %v542
    %v544 = vpop.f32.mrf.mxu0
    %545 = vmatprep.mubr.bf16.mxu0 0
    %546 = vmatmul.mubr.bf16.gmra.mxu0 %v333
    %v547 = vpop.f32.mrf.mxu0
    %v548 = vadd.f32 %v106, %v547
    %v549 = vpop.f32.mrf.mxu0
    %v550 = vpop.f32.mrf.mxu0
    %v551 = vadd.f32 %v106, %v550
    %v552 = vpop.f32.mrf.mxu0
    %553 = vmatprep.mubr.bf16.mxu0 0
    %554 = vmatmul.mubr.bf16.gmra.mxu0 %v336
    %v555 = vpop.f32.mrf.mxu0
    %v556 = vadd.f32 %v106, %v555
    %v557 = vpop.f32.mrf.mxu0
    %v558 = vpop.f32.mrf.mxu0
    %v559 = vadd.f32 %v106, %v558
    %v560 = vpop.f32.mrf.mxu0
    %561 = vmatprep.mubr.bf16.mxu0 0
    %562 = vmatmul.mubr.bf16.gmra.mxu0 %v339
    %v563 = vpop.f32.mrf.mxu0
    %v564 = vadd.f32 %v106, %v563
    %v565 = vpop.f32.mrf.mxu0
    %v566 = vpop.f32.mrf.mxu0
    %v567 = vadd.f32 %v106, %v566
    %v568 = vpop.f32.mrf.mxu0
    %569 = vmatprep.mubr.bf16.mxu0 0
    %570 = vmatmul.mubr.bf16.gmra.mxu0 %v342
    %v571 = vpop.f32.mrf.mxu0
    %v572 = vadd.f32 %v106, %v571
    %v573 = vpop.f32.mrf.mxu0
    %v574 = vpop.f32.mrf.mxu0
    %v575 = vadd.f32 %v106, %v574
    %v576 = vpop.f32.mrf.mxu0
    %577 = vmatprep.mubr.bf16.mxu0 0
    %578 = vmatmul.mubr.bf16.gmra.mxu0 %v345
    %v579 = vpop.f32.mrf.mxu0
    %v580 = vadd.f32 %v106, %v579
    %v581 = vpop.f32.mrf.mxu0
    %v582 = vpop.f32.mrf.mxu0
    %v583 = vadd.f32 %v106, %v582
    %v584 = vpop.f32.mrf.mxu0
    %585 = vmatprep.mubr.bf16.mxu0 0
    %586 = vmatmul.mubr.bf16.gmra.mxu0 %v348
    %v587 = vpop.f32.mrf.mxu0
    %v588 = vadd.f32 %v106, %v587
    %v589 = vpop.f32.mrf.mxu0
    %v590 = vpop.f32.mrf.mxu0
    %v591 = vadd.f32 %v106, %v590
    %v592 = vpop.f32.mrf.mxu0
    %593 = vmatprep.mubr.bf16.mxu0 0
    %594 = vmatmul.mubr.bf16.gmra.mxu0 %v351
    %v595 = vpop.f32.mrf.mxu0
    %v596 = vadd.f32 %v106, %v595
    %v597 = vpop.f32.mrf.mxu0
    %v598 = vpop.f32.mrf.mxu0
    %v599 = vadd.f32 %v106, %v598
    %v600 = vpop.f32.mrf.mxu0
    %601 = vmatprep.mubr.bf16.mxu0 0
    %602 = vmatmul.mubr.bf16.gmra.mxu0 %v354
    %v603 = vpop.f32.mrf.mxu0
    %v604 = vadd.f32 %v106, %v603
    %v605 = vpop.f32.mrf.mxu0
    %v606 = vpop.f32.mrf.mxu0
    %v607 = vadd.f32 %v106, %v606
    %v608 = vpop.f32.mrf.mxu0
    %609 = vmatprep.mubr.bf16.mxu0 0
    %610 = vmatmul.mubr.bf16.gmra.mxu0 %v357
    %v611 = vpop.f32.mrf.mxu0
    %v612 = vadd.f32 %v106, %v611
    %v613 = vpop.f32.mrf.mxu0
    %v614 = vpop.f32.mrf.mxu0
    %v615 = vadd.f32 %v106, %v614
    %v616 = vpop.f32.mrf.mxu0
    %617 = vmatprep.mubr.bf16.mxu0 0
    %618 = vmatmul.mubr.bf16.gmra.mxu0 %v360
    %v619 = vpop.f32.mrf.mxu0
    %v620 = vadd.f32 %v106, %v619
    %v621 = vpop.f32.mrf.mxu0
    %v622 = vpop.f32.mrf.mxu0
    %v623 = vadd.f32 %v106, %v622
    %v624 = vpop.f32.mrf.mxu0
    %625 = vmatprep.mubr.bf16.mxu0 0
    %626 = vmatmul.mubr.bf16.gmra.mxu0 %v363
    %v627 = vpop.f32.mrf.mxu0
    %v628 = vadd.f32 %v106, %v627
    %v629 = vpop.f32.mrf.mxu0
    %v630 = vpop.f32.mrf.mxu0
    %v631 = vadd.f32 %v106, %v630
    %v632 = vpop.f32.mrf.mxu0
    %633 = vmatprep.mubr.bf16.mxu0 0
    %634 = vmatmul.mubr.bf16.gmra.mxu0 %v366
    %v635 = vpop.f32.mrf.mxu0
    %v636 = vadd.f32 %v106, %v635
    %v637 = vpop.f32.mrf.mxu0
    %v638 = vpop.f32.mrf.mxu0
    %v639 = vadd.f32 %v106, %v638
    %v640 = vpop.f32.mrf.mxu0
    %641 = vmatprep.mubr.bf16.mxu0 0
    %642 = vmatmul.mubr.bf16.gmra.mxu0 %v369
    %v643 = vpop.f32.mrf.mxu0
    %v644 = vadd.f32 %v106, %v643
    %v645 = vpop.f32.mrf.mxu0
    %v646 = vpop.f32.mrf.mxu0
    %v647 = vadd.f32 %v106, %v646
    %v648 = vpop.f32.mrf.mxu0
    %649 = vmatprep.mubr.bf16.mxu0 0
    %650 = vmatmul.mubr.bf16.gmra.mxu0 %v372
    %v651 = vpop.f32.mrf.mxu0
    %v652 = vadd.f32 %v106, %v651
    %v653 = vpop.f32.mrf.mxu0
    %v654 = vpop.f32.mrf.mxu0
    %v655 = vadd.f32 %v106, %v654
    %v656 = vpop.f32.mrf.mxu0
    %657 = vmatprep.mubr.bf16.mxu0 0
    %658 = vmatmul.mubr.bf16.gmra.mxu0 %v375
    %v659 = vpop.f32.mrf.mxu0
    %v660 = vadd.f32 %v106, %v659
    %v661 = vpop.f32.mrf.mxu0
    %v662 = vpop.f32.mrf.mxu0
    %v663 = vadd.f32 %v106, %v662
    %v664 = vpop.f32.mrf.mxu0
    %665 = vdwg.mxu0
    %v666 = vmax.f32 %v412, 0.0
    %v667 = vmax.f32 %v415, 0.0
    %v668 = vmax.f32 %v420, 0.0
    %v669 = vmax.f32 %v423, 0.0
    %v670 = vmax.f32 %v428, 0.0
    %v671 = vmax.f32 %v431, 0.0
    %v672 = vmax.f32 %v436, 0.0
    %v673 = vmax.f32 %v439, 0.0
    %v674 = vmax.f32 %v444, 0.0
    %v675 = vmax.f32 %v447, 0.0
    %v676 = vmax.f32 %v452, 0.0
    %v677 = vmax.f32 %v455, 0.0
    %v678 = vmax.f32 %v460, 0.0
    %v679 = vmax.f32 %v463, 0.0
    %v680 = vmax.f32 %v468, 0.0
    %v681 = vmax.f32 %v471, 0.0
    %v682 = vmax.f32 %v476, 0.0
    %v683 = vmax.f32 %v479, 0.0
    %v684 = vmax.f32 %v484, 0.0
    %v685 = vmax.f32 %v487, 0.0
    %v686 = vmax.f32 %v492, 0.0
    %v687 = vmax.f32 %v495, 0.0
    %v688 = vmax.f32 %v500, 0.0
    %v689 = vmax.f32 %v503, 0.0
    %v690 = vmax.f32 %v508, 0.0
    %v691 = vmax.f32 %v511, 0.0
    %v692 = vmax.f32 %v516, 0.0
    %v693 = vmax.f32 %v519, 0.0
    %v694 = vmax.f32 %v524, 0.0
    %v695 = vmax.f32 %v527, 0.0
    %v696 = vmax.f32 %v532, 0.0
    %v697 = vmax.f32 %v535, 0.0
    %v698 = vmax.f32 %v540, 0.0
    %v699 = vmax.f32 %v543, 0.0
    %v700 = vmax.f32 %v548, 0.0
    %v701 = vmax.f32 %v551, 0.0
    %v702 = vmax.f32 %v556, 0.0
    %v703 = vmax.f32 %v559, 0.0
    %v704 = vmax.f32 %v564, 0.0
    %v705 = vmax.f32 %v567, 0.0
    %v706 = vmax.f32 %v572, 0.0
    %v707 = vmax.f32 %v575, 0.0
    %v708 = vmax.f32 %v580, 0.0
    %v709 = vmax.f32 %v583, 0.0
    %v710 = vmax.f32 %v588, 0.0
    %v711 = vmax.f32 %v591, 0.0
    %v712 = vmax.f32 %v596, 0.0
    %v713 = vmax.f32 %v599, 0.0
    %v714 = vmax.f32 %v604, 0.0
    %v715 = vmax.f32 %v607, 0.0
    %v716 = vmax.f32 %v612, 0.0
    %v717 = vmax.f32 %v615, 0.0
    %v718 = vmax.f32 %v620, 0.0
    %v719 = vmax.f32 %v623, 0.0
    %v720 = vmax.f32 %v628, 0.0
    %v721 = vmax.f32 %v631, 0.0
    %v722 = vmax.f32 %v636, 0.0
    %v723 = vmax.f32 %v639, 0.0
    %v724 = vmax.f32 %v644, 0.0
    %v725 = vmax.f32 %v647, 0.0
    %v726 = vmax.f32 %v652, 0.0
    %v727 = vmax.f32 %v655, 0.0
    %v728 = vmax.f32 %v660, 0.0
    %v729 = vmax.f32 %v663, 0.0
    %v730 = vpack.c.bf16 %v667, %v666
    %v731 = vpack.c.bf16 %v669, %v668
    %v732 = vpack.c.bf16 %v671, %v670
    %v733 = vpack.c.bf16 %v673, %v672
    %v734 = vpack.c.bf16 %v675, %v674
    %v735 = vpack.c.bf16 %v677, %v676
    %v736 = vpack.c.bf16 %v679, %v678
    %v737 = vpack.c.bf16 %v681, %v680
    %v738 = vpack.c.bf16 %v683, %v682
    %v739 = vpack.c.bf16 %v685, %v684
    %v740 = vpack.c.bf16 %v687, %v686
    %v741 = vpack.c.bf16 %v689, %v688
    %v742 = vpack.c.bf16 %v691, %v690
    %v743 = vpack.c.bf16 %v693, %v692
    %v744 = vpack.c.bf16 %v695, %v694
    %v745 = vpack.c.bf16 %v697, %v696
    %v746 = vpack.c.bf16 %v699, %v698
    %v747 = vpack.c.bf16 %v701, %v700
    %v748 = vpack.c.bf16 %v703, %v702
    %v749 = vpack.c.bf16 %v705, %v704
    %v750 = vpack.c.bf16 %v707, %v706
    %v751 = vpack.c.bf16 %v709, %v708
    %v752 = vpack.c.bf16 %v711, %v710
    %v753 = vpack.c.bf16 %v713, %v712
    %v754 = vpack.c.bf16 %v715, %v714
    %v755 = vpack.c.bf16 %v717, %v716
    %v756 = vpack.c.bf16 %v719, %v718
    %v757 = vpack.c.bf16 %v721, %v720
    %v758 = vpack.c.bf16 %v723, %v722
    %v759 = vpack.c.bf16 %v725, %v724
    %v760 = vpack.c.bf16 %v727, %v726
    %v761 = vpack.c.bf16 %v729, %v728
    %v762 = vld [vmem:[%s4] sm:$0xf]
    %v763 = vld [vmem:[%s4 + $0x4] sm:$0xf]
    %v764 = vld [vmem:[%s4 + $0x8] sm:$0xf]
    %v765 = vld [vmem:[%s4 + $0xc] sm:$0xf]
    %v766 = vld [vmem:[%s4 + $0x10] sm:$0xf]
    %v767 = vld [vmem:[%s4 + $0x14] sm:$0xf]
    %v768 = vld [vmem:[%s4 + $0x18] sm:$0xf]
    %v769 = vld [vmem:[%s4 + $0x1c] sm:$0xf]
    %v770 = vld [vmem:[%s4 + $0x20] sm:$0xf]
    %v771 = vld [vmem:[%s4 + $0x24] sm:$0xf]
    %v772 = vld [vmem:[%s4 + $0x28] sm:$0xf]
    %v773 = vld [vmem:[%s4 + $0x2c] sm:$0xf]
    %v774 = vld [vmem:[%s4 + $0x30] sm:$0xf]
    %v775 = vld [vmem:[%s4 + $0x34] sm:$0xf]
    %v776 = vld [vmem:[%s4 + $0x38] sm:$0xf]
    %v777 = vld [vmem:[%s4 + $0x3c] sm:$0xf]
    %v778 = vld [vmem:[%s5] sm:$0x1]
    %v780 = vlaneseq
    %v781 = vshrl.u32 %v780, 7
    %v782 = vsub.s32 0, %v781
    %v783 = vrot.slane %v778, %v782
    %v801 = vunpack.c.l.b16 %v762
    %v802 = vunpack.c.l.b16 %v763
    %v803 = vunpack.c.l.b16 %v764
    %v804 = vunpack.c.l.b16 %v765
    %v805 = vunpack.c.l.b16 %v766
    %v806 = vunpack.c.l.b16 %v767
    %v807 = vunpack.c.l.b16 %v768
    %v808 = vunpack.c.l.b16 %v769
    %v809 = vunpack.c.l.b16 %v770
    %v810 = vunpack.c.l.b16 %v771
    %v811 = vunpack.c.l.b16 %v772
    %v812 = vunpack.c.l.b16 %v773
    %v813 = vunpack.c.l.b16 %v774
    %v814 = vunpack.c.l.b16 %v775
    %v815 = vunpack.c.l.b16 %v776
    %v816 = vunpack.c.l.b16 %v777
    %v817 = vpack.c.b16 %v802, %v801
    %v818 = vpack.c.b16 %v804, %v803
    %v819 = vpack.c.b16 %v806, %v805
    %v820 = vpack.c.b16 %v808, %v807
    %v821 = vpack.c.b16 %v810, %v809
    %v822 = vpack.c.b16 %v812, %v811
    %v823 = vpack.c.b16 %v814, %v813
    %v824 = vpack.c.b16 %v816, %v815
    %833 = vmatprep.subr.bf16.mxu0 0
    %834 = vmatpush1.bf16.msra.mxu0 %v824
    %835 = vmatprep.subr.bf16.mxu0 0
    %836 = vmatpush1.bf16.msra.mxu0 %v823
    %837 = vmatprep.subr.bf16.mxu0 0
    %838 = vmatpush1.bf16.msra.mxu0 %v822
    %839 = vmatprep.subr.bf16.mxu0 0
    %840 = vmatpush1.bf16.msra.mxu0 %v821
    %841 = vmatprep.subr.bf16.mxu0 0
    %842 = vmatpush1.bf16.msra.mxu0 %v820
    %843 = vmatprep.subr.bf16.mxu0 0
    %844 = vmatpush1.bf16.msra.mxu0 %v819
    %845 = vmatprep.subr.bf16.mxu0 0
    %846 = vmatpush1.bf16.msra.mxu0 %v818
    %847 = vmatprep.subr.bf16.mxu0 0
    %848 = vmatpush1.bf16.msra.mxu0 %v817
    %849 = vmatprep.subr.bf16.mxu0 0
    %850 = vmatpush2.bf16.msra.mxu0 0
    %851 = vmatprep.subr.bf16.mxu0 0
    %852 = vmatpush2.bf16.msra.mxu0 0
    %853 = vmatprep.subr.bf16.mxu0 0
    %854 = vmatpush2.bf16.msra.mxu0 0
    %855 = vmatprep.subr.bf16.mxu0 0
    %856 = vmatpush2.bf16.msra.mxu0 0
    %857 = vmatprep.subr.bf16.mxu0 0
    %858 = vmatpush2.bf16.msra.mxu0 0
    %859 = vmatprep.subr.bf16.mxu0 0
    %860 = vmatpush2.bf16.msra.mxu0 0
    %861 = vmatprep.subr.bf16.mxu0 0
    %862 = vmatpush2.bf16.msra.mxu0 0
    %863 = vmatprep.subr.bf16.mxu0 0
    %864 = vmatpush2.bf16.msra.mxu0 0
    %865 = vmatprep.mubr.bf16.mxu0 0
    %866 = vmatmul.mubr.bf16.gmra.mxu0 %v730
    %v867 = vpop.f32.mrf.mxu0
    %v868 = vadd.f32 %v783, %v867
    %v869 = vpop.f32.mrf.mxu0
    %v870 = vpop.f32.mrf.mxu0
    %v871 = vadd.f32 %v783, %v870
    %v872 = vpop.f32.mrf.mxu0
    %873 = vmatprep.mubr.bf16.mxu0 0
    %874 = vmatmul.mubr.bf16.gmra.mxu0 %v731
    %v875 = vpop.f32.mrf.mxu0
    %v876 = vadd.f32 %v783, %v875
    %v877 = vpop.f32.mrf.mxu0
    %v878 = vpop.f32.mrf.mxu0
    %v879 = vadd.f32 %v783, %v878
    %v880 = vpop.f32.mrf.mxu0
    %881 = vmatprep.mubr.bf16.mxu0 0
    %882 = vmatmul.mubr.bf16.gmra.mxu0 %v732
    %v883 = vpop.f32.mrf.mxu0
    %v884 = vadd.f32 %v783, %v883
    %v885 = vpop.f32.mrf.mxu0
    %v886 = vpop.f32.mrf.mxu0
    %v887 = vadd.f32 %v783, %v886
    %v888 = vpop.f32.mrf.mxu0
    %889 = vmatprep.mubr.bf16.mxu0 0
    %890 = vmatmul.mubr.bf16.gmra.mxu0 %v733
    %v891 = vpop.f32.mrf.mxu0
    %v892 = vadd.f32 %v783, %v891
    %v893 = vpop.f32.mrf.mxu0
    %v894 = vpop.f32.mrf.mxu0
    %v895 = vadd.f32 %v783, %v894
    %v896 = vpop.f32.mrf.mxu0
    %897 = vmatprep.mubr.bf16.mxu0 0
    %898 = vmatmul.mubr.bf16.gmra.mxu0 %v734
    %v899 = vpop.f32.mrf.mxu0
    %v900 = vadd.f32 %v783, %v899
    %v901 = vpop.f32.mrf.mxu0
    %v902 = vpop.f32.mrf.mxu0
    %v903 = vadd.f32 %v783, %v902
    %v904 = vpop.f32.mrf.mxu0
    %905 = vmatprep.mubr.bf16.mxu0 0
    %906 = vmatmul.mubr.bf16.gmra.mxu0 %v735
    %v907 = vpop.f32.mrf.mxu0
    %v908 = vadd.f32 %v783, %v907
    %v909 = vpop.f32.mrf.mxu0
    %v910 = vpop.f32.mrf.mxu0
    %v911 = vadd.f32 %v783, %v910
    %v912 = vpop.f32.mrf.mxu0
    %913 = vmatprep.mubr.bf16.mxu0 0
    %914 = vmatmul.mubr.bf16.gmra.mxu0 %v736
    %v915 = vpop.f32.mrf.mxu0
    %v916 = vadd.f32 %v783, %v915
    %v917 = vpop.f32.mrf.mxu0
    %v918 = vpop.f32.mrf.mxu0
    %v919 = vadd.f32 %v783, %v918
    %v920 = vpop.f32.mrf.mxu0
    %921 = vmatprep.mubr.bf16.mxu0 0
    %922 = vmatmul.mubr.bf16.gmra.mxu0 %v737
    %v923 = vpop.f32.mrf.mxu0
    %v924 = vadd.f32 %v783, %v923
    %v925 = vpop.f32.mrf.mxu0
    %v926 = vpop.f32.mrf.mxu0
    %v927 = vadd.f32 %v783, %v926
    %v928 = vpop.f32.mrf.mxu0
    %929 = vmatprep.mubr.bf16.mxu0 0
    %930 = vmatmul.mubr.bf16.gmra.mxu0 %v738
    %v931 = vpop.f32.mrf.mxu0
    %v932 = vadd.f32 %v783, %v931
    %v933 = vpop.f32.mrf.mxu0
    %v934 = vpop.f32.mrf.mxu0
    %v935 = vadd.f32 %v783, %v934
    %v936 = vpop.f32.mrf.mxu0
    %937 = vmatprep.mubr.bf16.mxu0 0
    %938 = vmatmul.mubr.bf16.gmra.mxu0 %v739
    %v939 = vpop.f32.mrf.mxu0
    %v940 = vadd.f32 %v783, %v939
    %v941 = vpop.f32.mrf.mxu0
    %v942 = vpop.f32.mrf.mxu0
    %v943 = vadd.f32 %v783, %v942
    %v944 = vpop.f32.mrf.mxu0
    %945 = vmatprep.mubr.bf16.mxu0 0
    %946 = vmatmul.mubr.bf16.gmra.mxu0 %v740
    %v947 = vpop.f32.mrf.mxu0
    %v948 = vadd.f32 %v783, %v947
    %v949 = vpop.f32.mrf.mxu0
    %v950 = vpop.f32.mrf.mxu0
    %v951 = vadd.f32 %v783, %v950
    %v952 = vpop.f32.mrf.mxu0
    %953 = vmatprep.mubr.bf16.mxu0 0
    %954 = vmatmul.mubr.bf16.gmra.mxu0 %v741
    %v955 = vpop.f32.mrf.mxu0
    %v956 = vadd.f32 %v783, %v955
    %v957 = vpop.f32.mrf.mxu0
    %v958 = vpop.f32.mrf.mxu0
    %v959 = vadd.f32 %v783, %v958
    %v960 = vpop.f32.mrf.mxu0
    %961 = vmatprep.mubr.bf16.mxu0 0
    %962 = vmatmul.mubr.bf16.gmra.mxu0 %v742
    %v963 = vpop.f32.mrf.mxu0
    %v964 = vadd.f32 %v783, %v963
    %v965 = vpop.f32.mrf.mxu0
    %v966 = vpop.f32.mrf.mxu0
    %v967 = vadd.f32 %v783, %v966
    %v968 = vpop.f32.mrf.mxu0
    %969 = vmatprep.mubr.bf16.mxu0 0
    %970 = vmatmul.mubr.bf16.gmra.mxu0 %v743
    %v971 = vpop.f32.mrf.mxu0
    %v972 = vadd.f32 %v783, %v971
    %v973 = vpop.f32.mrf.mxu0
    %v974 = vpop.f32.mrf.mxu0
    %v975 = vadd.f32 %v783, %v974
    %v976 = vpop.f32.mrf.mxu0
    %977 = vmatprep.mubr.bf16.mxu0 0
    %978 = vmatmul.mubr.bf16.gmra.mxu0 %v744
    %v979 = vpop.f32.mrf.mxu0
    %v980 = vadd.f32 %v783, %v979
    %v981 = vpop.f32.mrf.mxu0
    %v982 = vpop.f32.mrf.mxu0
    %v983 = vadd.f32 %v783, %v982
    %v984 = vpop.f32.mrf.mxu0
    %985 = vmatprep.mubr.bf16.mxu0 0
    %986 = vmatmul.mubr.bf16.gmra.mxu0 %v745
    %v987 = vpop.f32.mrf.mxu0
    %v988 = vadd.f32 %v783, %v987
    %v989 = vpop.f32.mrf.mxu0
    %v990 = vpop.f32.mrf.mxu0
    %v991 = vadd.f32 %v783, %v990
    %v992 = vpop.f32.mrf.mxu0
    %993 = vmatprep.mubr.bf16.mxu0 0
    %994 = vmatmul.mubr.bf16.gmra.mxu0 %v746
    %v995 = vpop.f32.mrf.mxu0
    %v996 = vadd.f32 %v783, %v995
    %v997 = vpop.f32.mrf.mxu0
    %v998 = vpop.f32.mrf.mxu0
    %v999 = vadd.f32 %v783, %v998
    %v1000 = vpop.f32.mrf.mxu0
    %1001 = vmatprep.mubr.bf16.mxu0 0
    %1002 = vmatmul.mubr.bf16.gmra.mxu0 %v747
    %v1003 = vpop.f32.mrf.mxu0
    %v1004 = vadd.f32 %v783, %v1003
    %v1005 = vpop.f32.mrf.mxu0
    %v1006 = vpop.f32.mrf.mxu0
    %v1007 = vadd.f32 %v783, %v1006
    %v1008 = vpop.f32.mrf.mxu0
    %1009 = vmatprep.mubr.bf16.mxu0 0
    %1010 = vmatmul.mubr.bf16.gmra.mxu0 %v748
    %v1011 = vpop.f32.mrf.mxu0
    %v1012 = vadd.f32 %v783, %v1011
    %v1013 = vpop.f32.mrf.mxu0
    %v1014 = vpop.f32.mrf.mxu0
    %v1015 = vadd.f32 %v783, %v1014
    %v1016 = vpop.f32.mrf.mxu0
    %1017 = vmatprep.mubr.bf16.mxu0 0
    %1018 = vmatmul.mubr.bf16.gmra.mxu0 %v749
    %v1019 = vpop.f32.mrf.mxu0
    %v1020 = vadd.f32 %v783, %v1019
    %v1021 = vpop.f32.mrf.mxu0
    %v1022 = vpop.f32.mrf.mxu0
    %v1023 = vadd.f32 %v783, %v1022
    %v1024 = vpop.f32.mrf.mxu0
    %1025 = vmatprep.mubr.bf16.mxu0 0
    %1026 = vmatmul.mubr.bf16.gmra.mxu0 %v750
    %v1027 = vpop.f32.mrf.mxu0
    %v1028 = vadd.f32 %v783, %v1027
    %v1029 = vpop.f32.mrf.mxu0
    %v1030 = vpop.f32.mrf.mxu0
    %v1031 = vadd.f32 %v783, %v1030
    %v1032 = vpop.f32.mrf.mxu0
    %1033 = vmatprep.mubr.bf16.mxu0 0
    %1034 = vmatmul.mubr.bf16.gmra.mxu0 %v751
    %v1035 = vpop.f32.mrf.mxu0
    %v1036 = vadd.f32 %v783, %v1035
    %v1037 = vpop.f32.mrf.mxu0
    %v1038 = vpop.f32.mrf.mxu0
    %v1039 = vadd.f32 %v783, %v1038
    %v1040 = vpop.f32.mrf.mxu0
    %1041 = vmatprep.mubr.bf16.mxu0 0
    %1042 = vmatmul.mubr.bf16.gmra.mxu0 %v752
    %v1043 = vpop.f32.mrf.mxu0
    %v1044 = vadd.f32 %v783, %v1043
    %v1045 = vpop.f32.mrf.mxu0
    %v1046 = vpop.f32.mrf.mxu0
    %v1047 = vadd.f32 %v783, %v1046
    %v1048 = vpop.f32.mrf.mxu0
    %1049 = vmatprep.mubr.bf16.mxu0 0
    %1050 = vmatmul.mubr.bf16.gmra.mxu0 %v753
    %v1051 = vpop.f32.mrf.mxu0
    %v1052 = vadd.f32 %v783, %v1051
    %v1053 = vpop.f32.mrf.mxu0
    %v1054 = vpop.f32.mrf.mxu0
    %v1055 = vadd.f32 %v783, %v1054
    %v1056 = vpop.f32.mrf.mxu0
    %1057 = vmatprep.mubr.bf16.mxu0 0
    %1058 = vmatmul.mubr.bf16.gmra.mxu0 %v754
    %v1059 = vpop.f32.mrf.mxu0
    %v1060 = vadd.f32 %v783, %v1059
    %v1061 = vpop.f32.mrf.mxu0
    %v1062 = vpop.f32.mrf.mxu0
    %v1063 = vadd.f32 %v783, %v1062
    %v1064 = vpop.f32.mrf.mxu0
    %1065 = vmatprep.mubr.bf16.mxu0 0
    %1066 = vmatmul.mubr.bf16.gmra.mxu0 %v755
    %v1067 = vpop.f32.mrf.mxu0
    %v1068 = vadd.f32 %v783, %v1067
    %v1069 = vpop.f32.mrf.mxu0
    %v1070 = vpop.f32.mrf.mxu0
    %v1071 = vadd.f32 %v783, %v1070
    %v1072 = vpop.f32.mrf.mxu0
    %1073 = vmatprep.mubr.bf16.mxu0 0
    %1074 = vmatmul.mubr.bf16.gmra.mxu0 %v756
    %v1075 = vpop.f32.mrf.mxu0
    %v1076 = vadd.f32 %v783, %v1075
    %v1077 = vpop.f32.mrf.mxu0
    %v1078 = vpop.f32.mrf.mxu0
    %v1079 = vadd.f32 %v783, %v1078
    %v1080 = vpop.f32.mrf.mxu0
    %1081 = vmatprep.mubr.bf16.mxu0 0
    %1082 = vmatmul.mubr.bf16.gmra.mxu0 %v757
    %v1083 = vpop.f32.mrf.mxu0
    %v1084 = vadd.f32 %v783, %v1083
    %v1085 = vpop.f32.mrf.mxu0
    %v1086 = vpop.f32.mrf.mxu0
    %v1087 = vadd.f32 %v783, %v1086
    %v1088 = vpop.f32.mrf.mxu0
    %1089 = vmatprep.mubr.bf16.mxu0 0
    %1090 = vmatmul.mubr.bf16.gmra.mxu0 %v758
    %v1091 = vpop.f32.mrf.mxu0
    %v1092 = vadd.f32 %v783, %v1091
    %v1093 = vpop.f32.mrf.mxu0
    %v1094 = vpop.f32.mrf.mxu0
    %v1095 = vadd.f32 %v783, %v1094
    %v1096 = vpop.f32.mrf.mxu0
    %1097 = vmatprep.mubr.bf16.mxu0 0
    %1098 = vmatmul.mubr.bf16.gmra.mxu0 %v759
    %v1099 = vpop.f32.mrf.mxu0
    %v1100 = vadd.f32 %v783, %v1099
    %v1101 = vpop.f32.mrf.mxu0
    %v1102 = vpop.f32.mrf.mxu0
    %v1103 = vadd.f32 %v783, %v1102
    %v1104 = vpop.f32.mrf.mxu0
    %1105 = vmatprep.mubr.bf16.mxu0 0
    %1106 = vmatmul.mubr.bf16.gmra.mxu0 %v760
    %v1107 = vpop.f32.mrf.mxu0
    %v1108 = vadd.f32 %v783, %v1107
    %v1109 = vpop.f32.mrf.mxu0
    %v1110 = vpop.f32.mrf.mxu0
    %v1111 = vadd.f32 %v783, %v1110
    %v1112 = vpop.f32.mrf.mxu0
    %1113 = vmatprep.mubr.bf16.mxu0 0
    %1114 = vmatmul.mubr.bf16.gmra.mxu0 %v761
    %v1115 = vpop.f32.mrf.mxu0
    %v1116 = vadd.f32 %v783, %v1115
    %v1117 = vpop.f32.mrf.mxu0
    %v1118 = vpop.f32.mrf.mxu0
    %v1119 = vadd.f32 %v783, %v1118
    %v1120 = vpop.f32.mrf.mxu0
    %1121 = vdwg.mxu0
    %v1122 = vmax.f32 %v868, 0.0
    %v1123 = vmax.f32 %v871, 0.0
    %v1124 = vmax.f32 %v876, 0.0
    %v1125 = vmax.f32 %v879, 0.0
    %v1126 = vmax.f32 %v884, 0.0
    %v1127 = vmax.f32 %v887, 0.0
    %v1128 = vmax.f32 %v892, 0.0
    %v1129 = vmax.f32 %v895, 0.0
    %v1130 = vmax.f32 %v900, 0.0
    %v1131 = vmax.f32 %v903, 0.0
    %v1132 = vmax.f32 %v908, 0.0
    %v1133 = vmax.f32 %v911, 0.0
    %v1134 = vmax.f32 %v916, 0.0
    %v1135 = vmax.f32 %v919, 0.0
    %v1136 = vmax.f32 %v924, 0.0
    %v1137 = vmax.f32 %v927, 0.0
    %v1138 = vmax.f32 %v932, 0.0
    %v1139 = vmax.f32 %v935, 0.0
    %v1140 = vmax.f32 %v940, 0.0
    %v1141 = vmax.f32 %v943, 0.0
    %v1142 = vmax.f32 %v948, 0.0
    %v1143 = vmax.f32 %v951, 0.0
    %v1144 = vmax.f32 %v956, 0.0
    %v1145 = vmax.f32 %v959, 0.0
    %v1146 = vmax.f32 %v964, 0.0
    %v1147 = vmax.f32 %v967, 0.0
    %v1148 = vmax.f32 %v972, 0.0
    %v1149 = vmax.f32 %v975, 0.0
    %v1150 = vmax.f32 %v980, 0.0
    %v1151 = vmax.f32 %v983, 0.0
    %v1152 = vmax.f32 %v988, 0.0
    %v1153 = vmax.f32 %v991, 0.0
    %v1154 = vmax.f32 %v996, 0.0
    %v1155 = vmax.f32 %v999, 0.0
    %v1156 = vmax.f32 %v1004, 0.0
    %v1157 = vmax.f32 %v1007, 0.0
    %v1158 = vmax.f32 %v1012, 0.0
    %v1159 = vmax.f32 %v1015, 0.0
    %v1160 = vmax.f32 %v1020, 0.0
    %v1161 = vmax.f32 %v1023, 0.0
    %v1162 = vmax.f32 %v1028, 0.0
    %v1163 = vmax.f32 %v1031, 0.0
    %v1164 = vmax.f32 %v1036, 0.0
    %v1165 = vmax.f32 %v1039, 0.0
    %v1166 = vmax.f32 %v1044, 0.0
    %v1167 = vmax.f32 %v1047, 0.0
    %v1168 = vmax.f32 %v1052, 0.0
    %v1169 = vmax.f32 %v1055, 0.0
    %v1170 = vmax.f32 %v1060, 0.0
    %v1171 = vmax.f32 %v1063, 0.0
    %v1172 = vmax.f32 %v1068, 0.0
    %v1173 = vmax.f32 %v1071, 0.0
    %v1174 = vmax.f32 %v1076, 0.0
    %v1175 = vmax.f32 %v1079, 0.0
    %v1176 = vmax.f32 %v1084, 0.0
    %v1177 = vmax.f32 %v1087, 0.0
    %v1178 = vmax.f32 %v1092, 0.0
    %v1179 = vmax.f32 %v1095, 0.0
    %v1180 = vmax.f32 %v1100, 0.0
    %v1181 = vmax.f32 %v1103, 0.0
    %v1182 = vmax.f32 %v1108, 0.0
    %v1183 = vmax.f32 %v1111, 0.0
    %v1184 = vmax.f32 %v1116, 0.0
    %v1185 = vmax.f32 %v1119, 0.0
    %v1186 = vpack.c.bf16 %v1123, %v1122
    %v1187 = vpack.c.bf16 %v1125, %v1124
    %v1188 = vpack.c.bf16 %v1127, %v1126
    %v1189 = vpack.c.bf16 %v1129, %v1128
    %v1190 = vpack.c.bf16 %v1131, %v1130
    %v1191 = vpack.c.bf16 %v1133, %v1132
    %v1192 = vpack.c.bf16 %v1135, %v1134
    %v1193 = vpack.c.bf16 %v1137, %v1136
    %v1194 = vpack.c.bf16 %v1139, %v1138
    %v1195 = vpack.c.bf16 %v1141, %v1140
    %v1196 = vpack.c.bf16 %v1143, %v1142
    %v1197 = vpack.c.bf16 %v1145, %v1144
    %v1198 = vpack.c.bf16 %v1147, %v1146
    %v1199 = vpack.c.bf16 %v1149, %v1148
    %v1200 = vpack.c.bf16 %v1151, %v1150
    %v1201 = vpack.c.bf16 %v1153, %v1152
    %v1202 = vpack.c.bf16 %v1155, %v1154
    %v1203 = vpack.c.bf16 %v1157, %v1156
    %v1204 = vpack.c.bf16 %v1159, %v1158
    %v1205 = vpack.c.bf16 %v1161, %v1160
    %v1206 = vpack.c.bf16 %v1163, %v1162
    %v1207 = vpack.c.bf16 %v1165, %v1164
    %v1208 = vpack.c.bf16 %v1167, %v1166
    %v1209 = vpack.c.bf16 %v1169, %v1168
    %v1210 = vpack.c.bf16 %v1171, %v1170
    %v1211 = vpack.c.bf16 %v1173, %v1172
    %v1212 = vpack.c.bf16 %v1175, %v1174
    %v1213 = vpack.c.bf16 %v1177, %v1176
    %v1214 = vpack.c.bf16 %v1179, %v1178
    %v1215 = vpack.c.bf16 %v1181, %v1180
    %v1216 = vpack.c.bf16 %v1183, %v1182
    %v1217 = vpack.c.bf16 %v1185, %v1184
    %s1218 = scalar_lea.vmem %s4, 64
    %v1219 = vld [vmem:[%s1218] sm:$0xf]
    %v1220 = vld [vmem:[%s1218 + $0x4] sm:$0xf]
    %v1221 = vld [vmem:[%s1218 + $0x8] sm:$0xf]
    %v1222 = vld [vmem:[%s1218 + $0xc] sm:$0xf]
    %v1223 = vld [vmem:[%s1218 + $0x10] sm:$0xf]
    %v1224 = vld [vmem:[%s1218 + $0x14] sm:$0xf]
    %v1225 = vld [vmem:[%s1218 + $0x18] sm:$0xf]
    %v1226 = vld [vmem:[%s1218 + $0x1c] sm:$0xf]
    %v1227 = vld [vmem:[%s1218 + $0x20] sm:$0xf]
    %v1228 = vld [vmem:[%s1218 + $0x24] sm:$0xf]
    %v1229 = vld [vmem:[%s1218 + $0x28] sm:$0xf]
    %v1230 = vld [vmem:[%s1218 + $0x2c] sm:$0xf]
    %v1231 = vld [vmem:[%s1218 + $0x30] sm:$0xf]
    %v1232 = vld [vmem:[%s1218 + $0x34] sm:$0xf]
    %v1233 = vld [vmem:[%s1218 + $0x38] sm:$0xf]
    %v1234 = vld [vmem:[%s1218 + $0x3c] sm:$0xf]
    %s1235 = scalar_lea.vmem %s5, 1
    %v1236 = vld [vmem:[%s1235] sm:$0x1]
    %v1238 = vlaneseq
    %v1239 = vshrl.u32 %v1238, 7
    %v1240 = vsub.s32 0, %v1239
    %v1241 = vrot.slane %v1236, %v1240
    %v1259 = vunpack.c.l.b16 %v1219
    %v1260 = vunpack.c.l.b16 %v1220
    %v1261 = vunpack.c.l.b16 %v1221
    %v1262 = vunpack.c.l.b16 %v1222
    %v1263 = vunpack.c.l.b16 %v1223
    %v1264 = vunpack.c.l.b16 %v1224
    %v1265 = vunpack.c.l.b16 %v1225
    %v1266 = vunpack.c.l.b16 %v1226
    %v1267 = vunpack.c.l.b16 %v1227
    %v1268 = vunpack.c.l.b16 %v1228
    %v1269 = vunpack.c.l.b16 %v1229
    %v1270 = vunpack.c.l.b16 %v1230
    %v1271 = vunpack.c.l.b16 %v1231
    %v1272 = vunpack.c.l.b16 %v1232
    %v1273 = vunpack.c.l.b16 %v1233
    %v1274 = vunpack.c.l.b16 %v1234
    %v1275 = vpack.c.b16 %v1260, %v1259
    %v1276 = vpack.c.b16 %v1262, %v1261
    %v1277 = vpack.c.b16 %v1264, %v1263
    %v1278 = vpack.c.b16 %v1266, %v1265
    %v1279 = vpack.c.b16 %v1268, %v1267
    %v1280 = vpack.c.b16 %v1270, %v1269
    %v1281 = vpack.c.b16 %v1272, %v1271
    %v1282 = vpack.c.b16 %v1274, %v1273
    %1291 = vmatprep.subr.bf16.mxu0 0
    %1292 = vmatpush1.bf16.msra.mxu0 %v1282
    %1293 = vmatprep.subr.bf16.mxu0 0
    %1294 = vmatpush1.bf16.msra.mxu0 %v1281
    %1295 = vmatprep.subr.bf16.mxu0 0
    %1296 = vmatpush1.bf16.msra.mxu0 %v1280
    %1297 = vmatprep.subr.bf16.mxu0 0
    %1298 = vmatpush1.bf16.msra.mxu0 %v1279
    %1299 = vmatprep.subr.bf16.mxu0 0
    %1300 = vmatpush1.bf16.msra.mxu0 %v1278
    %1301 = vmatprep.subr.bf16.mxu0 0
    %1302 = vmatpush1.bf16.msra.mxu0 %v1277
    %1303 = vmatprep.subr.bf16.mxu0 0
    %1304 = vmatpush1.bf16.msra.mxu0 %v1276
    %1305 = vmatprep.subr.bf16.mxu0 0
    %1306 = vmatpush1.bf16.msra.mxu0 %v1275
    %1307 = vmatprep.subr.bf16.mxu0 0
    %1308 = vmatpush2.bf16.msra.mxu0 0
    %1309 = vmatprep.subr.bf16.mxu0 0
    %1310 = vmatpush2.bf16.msra.mxu0 0
    %1311 = vmatprep.subr.bf16.mxu0 0
    %1312 = vmatpush2.bf16.msra.mxu0 0
    %1313 = vmatprep.subr.bf16.mxu0 0
    %1314 = vmatpush2.bf16.msra.mxu0 0
    %1315 = vmatprep.subr.bf16.mxu0 0
    %1316 = vmatpush2.bf16.msra.mxu0 0
    %1317 = vmatprep.subr.bf16.mxu0 0
    %1318 = vmatpush2.bf16.msra.mxu0 0
    %1319 = vmatprep.subr.bf16.mxu0 0
    %1320 = vmatpush2.bf16.msra.mxu0 0
    %1321 = vmatprep.subr.bf16.mxu0 0
    %1322 = vmatpush2.bf16.msra.mxu0 0
    %1323 = vmatprep.mubr.bf16.mxu0 0
    %1324 = vmatmul.mubr.bf16.gmra.mxu0 %v1186
    %v1325 = vpop.f32.mrf.mxu0
    %v1326 = vadd.f32 %v1241, %v1325
    %v1327 = vpop.f32.mrf.mxu0
    %v1328 = vpop.f32.mrf.mxu0
    %v1329 = vadd.f32 %v1241, %v1328
    %v1330 = vpop.f32.mrf.mxu0
    %1331 = vmatprep.mubr.bf16.mxu0 0
    %1332 = vmatmul.mubr.bf16.gmra.mxu0 %v1187
    %v1333 = vpop.f32.mrf.mxu0
    %v1334 = vadd.f32 %v1241, %v1333
    %v1335 = vpop.f32.mrf.mxu0
    %v1336 = vpop.f32.mrf.mxu0
    %v1337 = vadd.f32 %v1241, %v1336
    %v1338 = vpop.f32.mrf.mxu0
    %1339 = vmatprep.mubr.bf16.mxu0 0
    %1340 = vmatmul.mubr.bf16.gmra.mxu0 %v1188
    %v1341 = vpop.f32.mrf.mxu0
    %v1342 = vadd.f32 %v1241, %v1341
    %v1343 = vpop.f32.mrf.mxu0
    %v1344 = vpop.f32.mrf.mxu0
    %v1345 = vadd.f32 %v1241, %v1344
    %v1346 = vpop.f32.mrf.mxu0
    %1347 = vmatprep.mubr.bf16.mxu0 0
    %1348 = vmatmul.mubr.bf16.gmra.mxu0 %v1189
    %v1349 = vpop.f32.mrf.mxu0
    %v1350 = vadd.f32 %v1241, %v1349
    %v1351 = vpop.f32.mrf.mxu0
    %v1352 = vpop.f32.mrf.mxu0
    %v1353 = vadd.f32 %v1241, %v1352
    %v1354 = vpop.f32.mrf.mxu0
    %1355 = vmatprep.mubr.bf16.mxu0 0
    %1356 = vmatmul.mubr.bf16.gmra.mxu0 %v1190
    %v1357 = vpop.f32.mrf.mxu0
    %v1358 = vadd.f32 %v1241, %v1357
    %v1359 = vpop.f32.mrf.mxu0
    %v1360 = vpop.f32.mrf.mxu0
    %v1361 = vadd.f32 %v1241, %v1360
    %v1362 = vpop.f32.mrf.mxu0
    %1363 = vmatprep.mubr.bf16.mxu0 0
    %1364 = vmatmul.mubr.bf16.gmra.mxu0 %v1191
    %v1365 = vpop.f32.mrf.mxu0
    %v1366 = vadd.f32 %v1241, %v1365
    %v1367 = vpop.f32.mrf.mxu0
    %v1368 = vpop.f32.mrf.mxu0
    %v1369 = vadd.f32 %v1241, %v1368
    %v1370 = vpop.f32.mrf.mxu0
    %1371 = vmatprep.mubr.bf16.mxu0 0
    %1372 = vmatmul.mubr.bf16.gmra.mxu0 %v1192
    %v1373 = vpop.f32.mrf.mxu0
    %v1374 = vadd.f32 %v1241, %v1373
    %v1375 = vpop.f32.mrf.mxu0
    %v1376 = vpop.f32.mrf.mxu0
    %v1377 = vadd.f32 %v1241, %v1376
    %v1378 = vpop.f32.mrf.mxu0
    %1379 = vmatprep.mubr.bf16.mxu0 0
    %1380 = vmatmul.mubr.bf16.gmra.mxu0 %v1193
    %v1381 = vpop.f32.mrf.mxu0
    %v1382 = vadd.f32 %v1241, %v1381
    %v1383 = vpop.f32.mrf.mxu0
    %v1384 = vpop.f32.mrf.mxu0
    %v1385 = vadd.f32 %v1241, %v1384
    %v1386 = vpop.f32.mrf.mxu0
    %1387 = vmatprep.mubr.bf16.mxu0 0
    %1388 = vmatmul.mubr.bf16.gmra.mxu0 %v1194
    %v1389 = vpop.f32.mrf.mxu0
    %v1390 = vadd.f32 %v1241, %v1389
    %v1391 = vpop.f32.mrf.mxu0
    %v1392 = vpop.f32.mrf.mxu0
    %v1393 = vadd.f32 %v1241, %v1392
    %v1394 = vpop.f32.mrf.mxu0
    %1395 = vmatprep.mubr.bf16.mxu0 0
    %1396 = vmatmul.mubr.bf16.gmra.mxu0 %v1195
    %v1397 = vpop.f32.mrf.mxu0
    %v1398 = vadd.f32 %v1241, %v1397
    %v1399 = vpop.f32.mrf.mxu0
    %v1400 = vpop.f32.mrf.mxu0
    %v1401 = vadd.f32 %v1241, %v1400
    %v1402 = vpop.f32.mrf.mxu0
    %1403 = vmatprep.mubr.bf16.mxu0 0
    %1404 = vmatmul.mubr.bf16.gmra.mxu0 %v1196
    %v1405 = vpop.f32.mrf.mxu0
    %v1406 = vadd.f32 %v1241, %v1405
    %v1407 = vpop.f32.mrf.mxu0
    %v1408 = vpop.f32.mrf.mxu0
    %v1409 = vadd.f32 %v1241, %v1408
    %v1410 = vpop.f32.mrf.mxu0
    %1411 = vmatprep.mubr.bf16.mxu0 0
    %1412 = vmatmul.mubr.bf16.gmra.mxu0 %v1197
    %v1413 = vpop.f32.mrf.mxu0
    %v1414 = vadd.f32 %v1241, %v1413
    %v1415 = vpop.f32.mrf.mxu0
    %v1416 = vpop.f32.mrf.mxu0
    %v1417 = vadd.f32 %v1241, %v1416
    %v1418 = vpop.f32.mrf.mxu0
    %1419 = vmatprep.mubr.bf16.mxu0 0
    %1420 = vmatmul.mubr.bf16.gmra.mxu0 %v1198
    %v1421 = vpop.f32.mrf.mxu0
    %v1422 = vadd.f32 %v1241, %v1421
    %v1423 = vpop.f32.mrf.mxu0
    %v1424 = vpop.f32.mrf.mxu0
    %v1425 = vadd.f32 %v1241, %v1424
    %v1426 = vpop.f32.mrf.mxu0
    %1427 = vmatprep.mubr.bf16.mxu0 0
    %1428 = vmatmul.mubr.bf16.gmra.mxu0 %v1199
    %v1429 = vpop.f32.mrf.mxu0
    %v1430 = vadd.f32 %v1241, %v1429
    %v1431 = vpop.f32.mrf.mxu0
    %v1432 = vpop.f32.mrf.mxu0
    %v1433 = vadd.f32 %v1241, %v1432
    %v1434 = vpop.f32.mrf.mxu0
    %1435 = vmatprep.mubr.bf16.mxu0 0
    %1436 = vmatmul.mubr.bf16.gmra.mxu0 %v1200
    %v1437 = vpop.f32.mrf.mxu0
    %v1438 = vadd.f32 %v1241, %v1437
    %v1439 = vpop.f32.mrf.mxu0
    %v1440 = vpop.f32.mrf.mxu0
    %v1441 = vadd.f32 %v1241, %v1440
    %v1442 = vpop.f32.mrf.mxu0
    %1443 = vmatprep.mubr.bf16.mxu0 0
    %1444 = vmatmul.mubr.bf16.gmra.mxu0 %v1201
    %v1445 = vpop.f32.mrf.mxu0
    %v1446 = vadd.f32 %v1241, %v1445
    %v1447 = vpop.f32.mrf.mxu0
    %v1448 = vpop.f32.mrf.mxu0
    %v1449 = vadd.f32 %v1241, %v1448
    %v1450 = vpop.f32.mrf.mxu0
    %1451 = vmatprep.mubr.bf16.mxu0 0
    %1452 = vmatmul.mubr.bf16.gmra.mxu0 %v1202
    %v1453 = vpop.f32.mrf.mxu0
    %v1454 = vadd.f32 %v1241, %v1453
    %v1455 = vpop.f32.mrf.mxu0
    %v1456 = vpop.f32.mrf.mxu0
    %v1457 = vadd.f32 %v1241, %v1456
    %v1458 = vpop.f32.mrf.mxu0
    %1459 = vmatprep.mubr.bf16.mxu0 0
    %1460 = vmatmul.mubr.bf16.gmra.mxu0 %v1203
    %v1461 = vpop.f32.mrf.mxu0
    %v1462 = vadd.f32 %v1241, %v1461
    %v1463 = vpop.f32.mrf.mxu0
    %v1464 = vpop.f32.mrf.mxu0
    %v1465 = vadd.f32 %v1241, %v1464
    %v1466 = vpop.f32.mrf.mxu0
    %1467 = vmatprep.mubr.bf16.mxu0 0
    %1468 = vmatmul.mubr.bf16.gmra.mxu0 %v1204
    %v1469 = vpop.f32.mrf.mxu0
    %v1470 = vadd.f32 %v1241, %v1469
    %v1471 = vpop.f32.mrf.mxu0
    %v1472 = vpop.f32.mrf.mxu0
    %v1473 = vadd.f32 %v1241, %v1472
    %v1474 = vpop.f32.mrf.mxu0
    %1475 = vmatprep.mubr.bf16.mxu0 0
    %1476 = vmatmul.mubr.bf16.gmra.mxu0 %v1205
    %v1477 = vpop.f32.mrf.mxu0
    %v1478 = vadd.f32 %v1241, %v1477
    %v1479 = vpop.f32.mrf.mxu0
    %v1480 = vpop.f32.mrf.mxu0
    %v1481 = vadd.f32 %v1241, %v1480
    %v1482 = vpop.f32.mrf.mxu0
    %1483 = vmatprep.mubr.bf16.mxu0 0
    %1484 = vmatmul.mubr.bf16.gmra.mxu0 %v1206
    %v1485 = vpop.f32.mrf.mxu0
    %v1486 = vadd.f32 %v1241, %v1485
    %v1487 = vpop.f32.mrf.mxu0
    %v1488 = vpop.f32.mrf.mxu0
    %v1489 = vadd.f32 %v1241, %v1488
    %v1490 = vpop.f32.mrf.mxu0
    %1491 = vmatprep.mubr.bf16.mxu0 0
    %1492 = vmatmul.mubr.bf16.gmra.mxu0 %v1207
    %v1493 = vpop.f32.mrf.mxu0
    %v1494 = vadd.f32 %v1241, %v1493
    %v1495 = vpop.f32.mrf.mxu0
    %v1496 = vpop.f32.mrf.mxu0
    %v1497 = vadd.f32 %v1241, %v1496
    %v1498 = vpop.f32.mrf.mxu0
    %1499 = vmatprep.mubr.bf16.mxu0 0
    %1500 = vmatmul.mubr.bf16.gmra.mxu0 %v1208
    %v1501 = vpop.f32.mrf.mxu0
    %v1502 = vadd.f32 %v1241, %v1501
    %v1503 = vpop.f32.mrf.mxu0
    %v1504 = vpop.f32.mrf.mxu0
    %v1505 = vadd.f32 %v1241, %v1504
    %v1506 = vpop.f32.mrf.mxu0
    %1507 = vmatprep.mubr.bf16.mxu0 0
    %1508 = vmatmul.mubr.bf16.gmra.mxu0 %v1209
    %v1509 = vpop.f32.mrf.mxu0
    %v1510 = vadd.f32 %v1241, %v1509
    %v1511 = vpop.f32.mrf.mxu0
    %v1512 = vpop.f32.mrf.mxu0
    %v1513 = vadd.f32 %v1241, %v1512
    %v1514 = vpop.f32.mrf.mxu0
    %1515 = vmatprep.mubr.bf16.mxu0 0
    %1516 = vmatmul.mubr.bf16.gmra.mxu0 %v1210
    %v1517 = vpop.f32.mrf.mxu0
    %v1518 = vadd.f32 %v1241, %v1517
    %v1519 = vpop.f32.mrf.mxu0
    %v1520 = vpop.f32.mrf.mxu0
    %v1521 = vadd.f32 %v1241, %v1520
    %v1522 = vpop.f32.mrf.mxu0
    %1523 = vmatprep.mubr.bf16.mxu0 0
    %1524 = vmatmul.mubr.bf16.gmra.mxu0 %v1211
    %v1525 = vpop.f32.mrf.mxu0
    %v1526 = vadd.f32 %v1241, %v1525
    %v1527 = vpop.f32.mrf.mxu0
    %v1528 = vpop.f32.mrf.mxu0
    %v1529 = vadd.f32 %v1241, %v1528
    %v1530 = vpop.f32.mrf.mxu0
    %1531 = vmatprep.mubr.bf16.mxu0 0
    %1532 = vmatmul.mubr.bf16.gmra.mxu0 %v1212
    %v1533 = vpop.f32.mrf.mxu0
    %v1534 = vadd.f32 %v1241, %v1533
    %v1535 = vpop.f32.mrf.mxu0
    %v1536 = vpop.f32.mrf.mxu0
    %v1537 = vadd.f32 %v1241, %v1536
    %v1538 = vpop.f32.mrf.mxu0
    %1539 = vmatprep.mubr.bf16.mxu0 0
    %1540 = vmatmul.mubr.bf16.gmra.mxu0 %v1213
    %v1541 = vpop.f32.mrf.mxu0
    %v1542 = vadd.f32 %v1241, %v1541
    %v1543 = vpop.f32.mrf.mxu0
    %v1544 = vpop.f32.mrf.mxu0
    %v1545 = vadd.f32 %v1241, %v1544
    %v1546 = vpop.f32.mrf.mxu0
    %1547 = vmatprep.mubr.bf16.mxu0 0
    %1548 = vmatmul.mubr.bf16.gmra.mxu0 %v1214
    %v1549 = vpop.f32.mrf.mxu0
    %v1550 = vadd.f32 %v1241, %v1549
    %v1551 = vpop.f32.mrf.mxu0
    %v1552 = vpop.f32.mrf.mxu0
    %v1553 = vadd.f32 %v1241, %v1552
    %v1554 = vpop.f32.mrf.mxu0
    %1555 = vmatprep.mubr.bf16.mxu0 0
    %1556 = vmatmul.mubr.bf16.gmra.mxu0 %v1215
    %v1557 = vpop.f32.mrf.mxu0
    %v1558 = vadd.f32 %v1241, %v1557
    %v1559 = vpop.f32.mrf.mxu0
    %v1560 = vpop.f32.mrf.mxu0
    %v1561 = vadd.f32 %v1241, %v1560
    %v1562 = vpop.f32.mrf.mxu0
    %1563 = vmatprep.mubr.bf16.mxu0 0
    %1564 = vmatmul.mubr.bf16.gmra.mxu0 %v1216
    %v1565 = vpop.f32.mrf.mxu0
    %v1566 = vadd.f32 %v1241, %v1565
    %v1567 = vpop.f32.mrf.mxu0
    %v1568 = vpop.f32.mrf.mxu0
    %v1569 = vadd.f32 %v1241, %v1568
    %v1570 = vpop.f32.mrf.mxu0
    %1571 = vmatprep.mubr.bf16.mxu0 0
    %1572 = vmatmul.mubr.bf16.gmra.mxu0 %v1217
    %v1573 = vpop.f32.mrf.mxu0
    %v1574 = vadd.f32 %v1241, %v1573
    %v1575 = vpop.f32.mrf.mxu0
    %v1576 = vpop.f32.mrf.mxu0
    %v1577 = vadd.f32 %v1241, %v1576
    %v1578 = vpop.f32.mrf.mxu0
    %1579 = vdwg.mxu0
    %v1580 = vmax.f32 %v1326, 0.0
    %v1581 = vmax.f32 %v1329, 0.0
    %v1582 = vmax.f32 %v1334, 0.0
    %v1583 = vmax.f32 %v1337, 0.0
    %v1584 = vmax.f32 %v1342, 0.0
    %v1585 = vmax.f32 %v1345, 0.0
    %v1586 = vmax.f32 %v1350, 0.0
    %v1587 = vmax.f32 %v1353, 0.0
    %v1588 = vmax.f32 %v1358, 0.0
    %v1589 = vmax.f32 %v1361, 0.0
    %v1590 = vmax.f32 %v1366, 0.0
    %v1591 = vmax.f32 %v1369, 0.0
    %v1592 = vmax.f32 %v1374, 0.0
    %v1593 = vmax.f32 %v1377, 0.0
    %v1594 = vmax.f32 %v1382, 0.0
    %v1595 = vmax.f32 %v1385, 0.0
    %v1596 = vmax.f32 %v1390, 0.0
    %v1597 = vmax.f32 %v1393, 0.0
    %v1598 = vmax.f32 %v1398, 0.0
    %v1599 = vmax.f32 %v1401, 0.0
    %v1600 = vmax.f32 %v1406, 0.0
    %v1601 = vmax.f32 %v1409, 0.0
    %v1602 = vmax.f32 %v1414, 0.0
    %v1603 = vmax.f32 %v1417, 0.0
    %v1604 = vmax.f32 %v1422, 0.0
    %v1605 = vmax.f32 %v1425, 0.0
    %v1606 = vmax.f32 %v1430, 0.0
    %v1607 = vmax.f32 %v1433, 0.0
    %v1608 = vmax.f32 %v1438, 0.0
    %v1609 = vmax.f32 %v1441, 0.0
    %v1610 = vmax.f32 %v1446, 0.0
    %v1611 = vmax.f32 %v1449, 0.0
    %v1612 = vmax.f32 %v1454, 0.0
    %v1613 = vmax.f32 %v1457, 0.0
    %v1614 = vmax.f32 %v1462, 0.0
    %v1615 = vmax.f32 %v1465, 0.0
    %v1616 = vmax.f32 %v1470, 0.0
    %v1617 = vmax.f32 %v1473, 0.0
    %v1618 = vmax.f32 %v1478, 0.0
    %v1619 = vmax.f32 %v1481, 0.0
    %v1620 = vmax.f32 %v1486, 0.0
    %v1621 = vmax.f32 %v1489, 0.0
    %v1622 = vmax.f32 %v1494, 0.0
    %v1623 = vmax.f32 %v1497, 0.0
    %v1624 = vmax.f32 %v1502, 0.0
    %v1625 = vmax.f32 %v1505, 0.0
    %v1626 = vmax.f32 %v1510, 0.0
    %v1627 = vmax.f32 %v1513, 0.0
    %v1628 = vmax.f32 %v1518, 0.0
    %v1629 = vmax.f32 %v1521, 0.0
    %v1630 = vmax.f32 %v1526, 0.0
    %v1631 = vmax.f32 %v1529, 0.0
    %v1632 = vmax.f32 %v1534, 0.0
    %v1633 = vmax.f32 %v1537, 0.0
    %v1634 = vmax.f32 %v1542, 0.0
    %v1635 = vmax.f32 %v1545, 0.0
    %v1636 = vmax.f32 %v1550, 0.0
    %v1637 = vmax.f32 %v1553, 0.0
    %v1638 = vmax.f32 %v1558, 0.0
    %v1639 = vmax.f32 %v1561, 0.0
    %v1640 = vmax.f32 %v1566, 0.0
    %v1641 = vmax.f32 %v1569, 0.0
    %v1642 = vmax.f32 %v1574, 0.0
    %v1643 = vmax.f32 %v1577, 0.0
    %v1644 = vpack.c.bf16 %v1581, %v1580
    %v1645 = vpack.c.bf16 %v1583, %v1582
    %v1646 = vpack.c.bf16 %v1585, %v1584
    %v1647 = vpack.c.bf16 %v1587, %v1586
    %v1648 = vpack.c.bf16 %v1589, %v1588
    %v1649 = vpack.c.bf16 %v1591, %v1590
    %v1650 = vpack.c.bf16 %v1593, %v1592
    %v1651 = vpack.c.bf16 %v1595, %v1594
    %v1652 = vpack.c.bf16 %v1597, %v1596
    %v1653 = vpack.c.bf16 %v1599, %v1598
    %v1654 = vpack.c.bf16 %v1601, %v1600
    %v1655 = vpack.c.bf16 %v1603, %v1602
    %v1656 = vpack.c.bf16 %v1605, %v1604
    %v1657 = vpack.c.bf16 %v1607, %v1606
    %v1658 = vpack.c.bf16 %v1609, %v1608
    %v1659 = vpack.c.bf16 %v1611, %v1610
    %v1660 = vpack.c.bf16 %v1613, %v1612
    %v1661 = vpack.c.bf16 %v1615, %v1614
    %v1662 = vpack.c.bf16 %v1617, %v1616
    %v1663 = vpack.c.bf16 %v1619, %v1618
    %v1664 = vpack.c.bf16 %v1621, %v1620
    %v1665 = vpack.c.bf16 %v1623, %v1622
    %v1666 = vpack.c.bf16 %v1625, %v1624
    %v1667 = vpack.c.bf16 %v1627, %v1626
    %v1668 = vpack.c.bf16 %v1629, %v1628
    %v1669 = vpack.c.bf16 %v1631, %v1630
    %v1670 = vpack.c.bf16 %v1633, %v1632
    %v1671 = vpack.c.bf16 %v1635, %v1634
    %v1672 = vpack.c.bf16 %v1637, %v1636
    %v1673 = vpack.c.bf16 %v1639, %v1638
    %v1674 = vpack.c.bf16 %v1641, %v1640
    %v1675 = vpack.c.bf16 %v1643, %v1642
    %s1676 = scalar_lea.vmem %s4, 128
    %v1677 = vld [vmem:[%s1676] sm:$0xf]
    %v1678 = vld [vmem:[%s1676 + $0x4] sm:$0xf]
    %v1679 = vld [vmem:[%s1676 + $0x8] sm:$0xf]
    %v1680 = vld [vmem:[%s1676 + $0xc] sm:$0xf]
    %v1681 = vld [vmem:[%s1676 + $0x10] sm:$0xf]
    %v1682 = vld [vmem:[%s1676 + $0x14] sm:$0xf]
    %v1683 = vld [vmem:[%s1676 + $0x18] sm:$0xf]
    %v1684 = vld [vmem:[%s1676 + $0x1c] sm:$0xf]
    %v1685 = vld [vmem:[%s1676 + $0x20] sm:$0xf]
    %v1686 = vld [vmem:[%s1676 + $0x24] sm:$0xf]
    %v1687 = vld [vmem:[%s1676 + $0x28] sm:$0xf]
    %v1688 = vld [vmem:[%s1676 + $0x2c] sm:$0xf]
    %v1689 = vld [vmem:[%s1676 + $0x30] sm:$0xf]
    %v1690 = vld [vmem:[%s1676 + $0x34] sm:$0xf]
    %v1691 = vld [vmem:[%s1676 + $0x38] sm:$0xf]
    %v1692 = vld [vmem:[%s1676 + $0x3c] sm:$0xf]
    %s1693 = scalar_lea.vmem %s5, 2
    %v1694 = vld [vmem:[%s1693] sm:$0x1]
    %v1696 = vlaneseq
    %v1697 = vshrl.u32 %v1696, 7
    %v1698 = vsub.s32 0, %v1697
    %v1699 = vrot.slane %v1694, %v1698
    %v1717 = vunpack.c.l.b16 %v1677
    %v1718 = vunpack.c.l.b16 %v1678
    %v1719 = vunpack.c.l.b16 %v1679
    %v1720 = vunpack.c.l.b16 %v1680
    %v1721 = vunpack.c.l.b16 %v1681
    %v1722 = vunpack.c.l.b16 %v1682
    %v1723 = vunpack.c.l.b16 %v1683
    %v1724 = vunpack.c.l.b16 %v1684
    %v1725 = vunpack.c.l.b16 %v1685
    %v1726 = vunpack.c.l.b16 %v1686
    %v1727 = vunpack.c.l.b16 %v1687
    %v1728 = vunpack.c.l.b16 %v1688
    %v1729 = vunpack.c.l.b16 %v1689
    %v1730 = vunpack.c.l.b16 %v1690
    %v1731 = vunpack.c.l.b16 %v1691
    %v1732 = vunpack.c.l.b16 %v1692
    %v1733 = vpack.c.b16 %v1718, %v1717
    %v1734 = vpack.c.b16 %v1720, %v1719
    %v1735 = vpack.c.b16 %v1722, %v1721
    %v1736 = vpack.c.b16 %v1724, %v1723
    %v1737 = vpack.c.b16 %v1726, %v1725
    %v1738 = vpack.c.b16 %v1728, %v1727
    %v1739 = vpack.c.b16 %v1730, %v1729
    %v1740 = vpack.c.b16 %v1732, %v1731
    %1749 = vmatprep.subr.bf16.mxu0 0
    %1750 = vmatpush1.bf16.msra.mxu0 %v1740
    %1751 = vmatprep.subr.bf16.mxu0 0
    %1752 = vmatpush1.bf16.msra.mxu0 %v1739
    %1753 = vmatprep.subr.bf16.mxu0 0
    %1754 = vmatpush1.bf16.msra.mxu0 %v1738
    %1755 = vmatprep.subr.bf16.mxu0 0
    %1756 = vmatpush1.bf16.msra.mxu0 %v1737
    %1757 = vmatprep.subr.bf16.mxu0 0
    %1758 = vmatpush1.bf16.msra.mxu0 %v1736
    %1759 = vmatprep.subr.bf16.mxu0 0
    %1760 = vmatpush1.bf16.msra.mxu0 %v1735
    %1761 = vmatprep.subr.bf16.mxu0 0
    %1762 = vmatpush1.bf16.msra.mxu0 %v1734
    %1763 = vmatprep.subr.bf16.mxu0 0
    %1764 = vmatpush1.bf16.msra.mxu0 %v1733
    %1765 = vmatprep.subr.bf16.mxu0 0
    %1766 = vmatpush2.bf16.msra.mxu0 0
    %1767 = vmatprep.subr.bf16.mxu0 0
    %1768 = vmatpush2.bf16.msra.mxu0 0
    %1769 = vmatprep.subr.bf16.mxu0 0
    %1770 = vmatpush2.bf16.msra.mxu0 0
    %1771 = vmatprep.subr.bf16.mxu0 0
    %1772 = vmatpush2.bf16.msra.mxu0 0
    %1773 = vmatprep.subr.bf16.mxu0 0
    %1774 = vmatpush2.bf16.msra.mxu0 0
    %1775 = vmatprep.subr.bf16.mxu0 0
    %1776 = vmatpush2.bf16.msra.mxu0 0
    %1777 = vmatprep.subr.bf16.mxu0 0
    %1778 = vmatpush2.bf16.msra.mxu0 0
    %1779 = vmatprep.subr.bf16.mxu0 0
    %1780 = vmatpush2.bf16.msra.mxu0 0
    %1781 = vmatprep.mubr.bf16.mxu0 0
    %1782 = vmatmul.mubr.bf16.gmra.mxu0 %v1644
    %v1783 = vpop.f32.mrf.mxu0
    %v1784 = vadd.f32 %v1699, %v1783
    %v1785 = vpop.f32.mrf.mxu0
    %v1786 = vpop.f32.mrf.mxu0
    %v1787 = vadd.f32 %v1699, %v1786
    %v1788 = vpop.f32.mrf.mxu0
    %1789 = vmatprep.mubr.bf16.mxu0 0
    %1790 = vmatmul.mubr.bf16.gmra.mxu0 %v1645
    %v1791 = vpop.f32.mrf.mxu0
    %v1792 = vadd.f32 %v1699, %v1791
    %v1793 = vpop.f32.mrf.mxu0
    %v1794 = vpop.f32.mrf.mxu0
    %v1795 = vadd.f32 %v1699, %v1794
    %v1796 = vpop.f32.mrf.mxu0
    %1797 = vmatprep.mubr.bf16.mxu0 0
    %1798 = vmatmul.mubr.bf16.gmra.mxu0 %v1646
    %v1799 = vpop.f32.mrf.mxu0
    %v1800 = vadd.f32 %v1699, %v1799
    %v1801 = vpop.f32.mrf.mxu0
    %v1802 = vpop.f32.mrf.mxu0
    %v1803 = vadd.f32 %v1699, %v1802
    %v1804 = vpop.f32.mrf.mxu0
    %1805 = vmatprep.mubr.bf16.mxu0 0
    %1806 = vmatmul.mubr.bf16.gmra.mxu0 %v1647
    %v1807 = vpop.f32.mrf.mxu0
    %v1808 = vadd.f32 %v1699, %v1807
    %v1809 = vpop.f32.mrf.mxu0
    %v1810 = vpop.f32.mrf.mxu0
    %v1811 = vadd.f32 %v1699, %v1810
    %v1812 = vpop.f32.mrf.mxu0
    %1813 = vmatprep.mubr.bf16.mxu0 0
    %1814 = vmatmul.mubr.bf16.gmra.mxu0 %v1648
    %v1815 = vpop.f32.mrf.mxu0
    %v1816 = vadd.f32 %v1699, %v1815
    %v1817 = vpop.f32.mrf.mxu0
    %v1818 = vpop.f32.mrf.mxu0
    %v1819 = vadd.f32 %v1699, %v1818
    %v1820 = vpop.f32.mrf.mxu0
    %1821 = vmatprep.mubr.bf16.mxu0 0
    %1822 = vmatmul.mubr.bf16.gmra.mxu0 %v1649
    %v1823 = vpop.f32.mrf.mxu0
    %v1824 = vadd.f32 %v1699, %v1823
    %v1825 = vpop.f32.mrf.mxu0
    %v1826 = vpop.f32.mrf.mxu0
    %v1827 = vadd.f32 %v1699, %v1826
    %v1828 = vpop.f32.mrf.mxu0
    %1829 = vmatprep.mubr.bf16.mxu0 0
    %1830 = vmatmul.mubr.bf16.gmra.mxu0 %v1650
    %v1831 = vpop.f32.mrf.mxu0
    %v1832 = vadd.f32 %v1699, %v1831
    %v1833 = vpop.f32.mrf.mxu0
    %v1834 = vpop.f32.mrf.mxu0
    %v1835 = vadd.f32 %v1699, %v1834
    %v1836 = vpop.f32.mrf.mxu0
    %1837 = vmatprep.mubr.bf16.mxu0 0
    %1838 = vmatmul.mubr.bf16.gmra.mxu0 %v1651
    %v1839 = vpop.f32.mrf.mxu0
    %v1840 = vadd.f32 %v1699, %v1839
    %v1841 = vpop.f32.mrf.mxu0
    %v1842 = vpop.f32.mrf.mxu0
    %v1843 = vadd.f32 %v1699, %v1842
    %v1844 = vpop.f32.mrf.mxu0
    %1845 = vmatprep.mubr.bf16.mxu0 0
    %1846 = vmatmul.mubr.bf16.gmra.mxu0 %v1652
    %v1847 = vpop.f32.mrf.mxu0
    %v1848 = vadd.f32 %v1699, %v1847
    %v1849 = vpop.f32.mrf.mxu0
    %v1850 = vpop.f32.mrf.mxu0
    %v1851 = vadd.f32 %v1699, %v1850
    %v1852 = vpop.f32.mrf.mxu0
    %1853 = vmatprep.mubr.bf16.mxu0 0
    %1854 = vmatmul.mubr.bf16.gmra.mxu0 %v1653
    %v1855 = vpop.f32.mrf.mxu0
    %v1856 = vadd.f32 %v1699, %v1855
    %v1857 = vpop.f32.mrf.mxu0
    %v1858 = vpop.f32.mrf.mxu0
    %v1859 = vadd.f32 %v1699, %v1858
    %v1860 = vpop.f32.mrf.mxu0
    %1861 = vmatprep.mubr.bf16.mxu0 0
    %1862 = vmatmul.mubr.bf16.gmra.mxu0 %v1654
    %v1863 = vpop.f32.mrf.mxu0
    %v1864 = vadd.f32 %v1699, %v1863
    %v1865 = vpop.f32.mrf.mxu0
    %v1866 = vpop.f32.mrf.mxu0
    %v1867 = vadd.f32 %v1699, %v1866
    %v1868 = vpop.f32.mrf.mxu0
    %1869 = vmatprep.mubr.bf16.mxu0 0
    %1870 = vmatmul.mubr.bf16.gmra.mxu0 %v1655
    %v1871 = vpop.f32.mrf.mxu0
    %v1872 = vadd.f32 %v1699, %v1871
    %v1873 = vpop.f32.mrf.mxu0
    %v1874 = vpop.f32.mrf.mxu0
    %v1875 = vadd.f32 %v1699, %v1874
    %v1876 = vpop.f32.mrf.mxu0
    %1877 = vmatprep.mubr.bf16.mxu0 0
    %1878 = vmatmul.mubr.bf16.gmra.mxu0 %v1656
    %v1879 = vpop.f32.mrf.mxu0
    %v1880 = vadd.f32 %v1699, %v1879
    %v1881 = vpop.f32.mrf.mxu0
    %v1882 = vpop.f32.mrf.mxu0
    %v1883 = vadd.f32 %v1699, %v1882
    %v1884 = vpop.f32.mrf.mxu0
    %1885 = vmatprep.mubr.bf16.mxu0 0
    %1886 = vmatmul.mubr.bf16.gmra.mxu0 %v1657
    %v1887 = vpop.f32.mrf.mxu0
    %v1888 = vadd.f32 %v1699, %v1887
    %v1889 = vpop.f32.mrf.mxu0
    %v1890 = vpop.f32.mrf.mxu0
    %v1891 = vadd.f32 %v1699, %v1890
    %v1892 = vpop.f32.mrf.mxu0
    %1893 = vmatprep.mubr.bf16.mxu0 0
    %1894 = vmatmul.mubr.bf16.gmra.mxu0 %v1658
    %v1895 = vpop.f32.mrf.mxu0
    %v1896 = vadd.f32 %v1699, %v1895
    %v1897 = vpop.f32.mrf.mxu0
    %v1898 = vpop.f32.mrf.mxu0
    %v1899 = vadd.f32 %v1699, %v1898
    %v1900 = vpop.f32.mrf.mxu0
    %1901 = vmatprep.mubr.bf16.mxu0 0
    %1902 = vmatmul.mubr.bf16.gmra.mxu0 %v1659
    %v1903 = vpop.f32.mrf.mxu0
    %v1904 = vadd.f32 %v1699, %v1903
    %v1905 = vpop.f32.mrf.mxu0
    %v1906 = vpop.f32.mrf.mxu0
    %v1907 = vadd.f32 %v1699, %v1906
    %v1908 = vpop.f32.mrf.mxu0
    %1909 = vmatprep.mubr.bf16.mxu0 0
    %1910 = vmatmul.mubr.bf16.gmra.mxu0 %v1660
    %v1911 = vpop.f32.mrf.mxu0
    %v1912 = vadd.f32 %v1699, %v1911
    %v1913 = vpop.f32.mrf.mxu0
    %v1914 = vpop.f32.mrf.mxu0
    %v1915 = vadd.f32 %v1699, %v1914
    %v1916 = vpop.f32.mrf.mxu0
    %1917 = vmatprep.mubr.bf16.mxu0 0
    %1918 = vmatmul.mubr.bf16.gmra.mxu0 %v1661
    %v1919 = vpop.f32.mrf.mxu0
    %v1920 = vadd.f32 %v1699, %v1919
    %v1921 = vpop.f32.mrf.mxu0
    %v1922 = vpop.f32.mrf.mxu0
    %v1923 = vadd.f32 %v1699, %v1922
    %v1924 = vpop.f32.mrf.mxu0
    %1925 = vmatprep.mubr.bf16.mxu0 0
    %1926 = vmatmul.mubr.bf16.gmra.mxu0 %v1662
    %v1927 = vpop.f32.mrf.mxu0
    %v1928 = vadd.f32 %v1699, %v1927
    %v1929 = vpop.f32.mrf.mxu0
    %v1930 = vpop.f32.mrf.mxu0
    %v1931 = vadd.f32 %v1699, %v1930
    %v1932 = vpop.f32.mrf.mxu0
    %1933 = vmatprep.mubr.bf16.mxu0 0
    %1934 = vmatmul.mubr.bf16.gmra.mxu0 %v1663
    %v1935 = vpop.f32.mrf.mxu0
    %v1936 = vadd.f32 %v1699, %v1935
    %v1937 = vpop.f32.mrf.mxu0
    %v1938 = vpop.f32.mrf.mxu0
    %v1939 = vadd.f32 %v1699, %v1938
    %v1940 = vpop.f32.mrf.mxu0
    %1941 = vmatprep.mubr.bf16.mxu0 0
    %1942 = vmatmul.mubr.bf16.gmra.mxu0 %v1664
    %v1943 = vpop.f32.mrf.mxu0
    %v1944 = vadd.f32 %v1699, %v1943
    %v1945 = vpop.f32.mrf.mxu0
    %v1946 = vpop.f32.mrf.mxu0
    %v1947 = vadd.f32 %v1699, %v1946
    %v1948 = vpop.f32.mrf.mxu0
    %1949 = vmatprep.mubr.bf16.mxu0 0
    %1950 = vmatmul.mubr.bf16.gmra.mxu0 %v1665
    %v1951 = vpop.f32.mrf.mxu0
    %v1952 = vadd.f32 %v1699, %v1951
    %v1953 = vpop.f32.mrf.mxu0
    %v1954 = vpop.f32.mrf.mxu0
    %v1955 = vadd.f32 %v1699, %v1954
    %v1956 = vpop.f32.mrf.mxu0
    %1957 = vmatprep.mubr.bf16.mxu0 0
    %1958 = vmatmul.mubr.bf16.gmra.mxu0 %v1666
    %v1959 = vpop.f32.mrf.mxu0
    %v1960 = vadd.f32 %v1699, %v1959
    %v1961 = vpop.f32.mrf.mxu0
    %v1962 = vpop.f32.mrf.mxu0
    %v1963 = vadd.f32 %v1699, %v1962
    %v1964 = vpop.f32.mrf.mxu0
    %1965 = vmatprep.mubr.bf16.mxu0 0
    %1966 = vmatmul.mubr.bf16.gmra.mxu0 %v1667
    %v1967 = vpop.f32.mrf.mxu0
    %v1968 = vadd.f32 %v1699, %v1967
    %v1969 = vpop.f32.mrf.mxu0
    %v1970 = vpop.f32.mrf.mxu0
    %v1971 = vadd.f32 %v1699, %v1970
    %v1972 = vpop.f32.mrf.mxu0
    %1973 = vmatprep.mubr.bf16.mxu0 0
    %1974 = vmatmul.mubr.bf16.gmra.mxu0 %v1668
    %v1975 = vpop.f32.mrf.mxu0
    %v1976 = vadd.f32 %v1699, %v1975
    %v1977 = vpop.f32.mrf.mxu0
    %v1978 = vpop.f32.mrf.mxu0
    %v1979 = vadd.f32 %v1699, %v1978
    %v1980 = vpop.f32.mrf.mxu0
    %1981 = vmatprep.mubr.bf16.mxu0 0
    %1982 = vmatmul.mubr.bf16.gmra.mxu0 %v1669
    %v1983 = vpop.f32.mrf.mxu0
    %v1984 = vadd.f32 %v1699, %v1983
    %v1985 = vpop.f32.mrf.mxu0
    %v1986 = vpop.f32.mrf.mxu0
    %v1987 = vadd.f32 %v1699, %v1986
    %v1988 = vpop.f32.mrf.mxu0
    %1989 = vmatprep.mubr.bf16.mxu0 0
    %1990 = vmatmul.mubr.bf16.gmra.mxu0 %v1670
    %v1991 = vpop.f32.mrf.mxu0
    %v1992 = vadd.f32 %v1699, %v1991
    %v1993 = vpop.f32.mrf.mxu0
    %v1994 = vpop.f32.mrf.mxu0
    %v1995 = vadd.f32 %v1699, %v1994
    %v1996 = vpop.f32.mrf.mxu0
    %1997 = vmatprep.mubr.bf16.mxu0 0
    %1998 = vmatmul.mubr.bf16.gmra.mxu0 %v1671
    %v1999 = vpop.f32.mrf.mxu0
    %v2000 = vadd.f32 %v1699, %v1999
    %v2001 = vpop.f32.mrf.mxu0
    %v2002 = vpop.f32.mrf.mxu0
    %v2003 = vadd.f32 %v1699, %v2002
    %v2004 = vpop.f32.mrf.mxu0
    %2005 = vmatprep.mubr.bf16.mxu0 0
    %2006 = vmatmul.mubr.bf16.gmra.mxu0 %v1672
    %v2007 = vpop.f32.mrf.mxu0
    %v2008 = vadd.f32 %v1699, %v2007
    %v2009 = vpop.f32.mrf.mxu0
    %v2010 = vpop.f32.mrf.mxu0
    %v2011 = vadd.f32 %v1699, %v2010
    %v2012 = vpop.f32.mrf.mxu0
    %2013 = vmatprep.mubr.bf16.mxu0 0
    %2014 = vmatmul.mubr.bf16.gmra.mxu0 %v1673
    %v2015 = vpop.f32.mrf.mxu0
    %v2016 = vadd.f32 %v1699, %v2015
    %v2017 = vpop.f32.mrf.mxu0
    %v2018 = vpop.f32.mrf.mxu0
    %v2019 = vadd.f32 %v1699, %v2018
    %v2020 = vpop.f32.mrf.mxu0
    %2021 = vmatprep.mubr.bf16.mxu0 0
    %2022 = vmatmul.mubr.bf16.gmra.mxu0 %v1674
    %v2023 = vpop.f32.mrf.mxu0
    %v2024 = vadd.f32 %v1699, %v2023
    %v2025 = vpop.f32.mrf.mxu0
    %v2026 = vpop.f32.mrf.mxu0
    %v2027 = vadd.f32 %v1699, %v2026
    %v2028 = vpop.f32.mrf.mxu0
    %2029 = vmatprep.mubr.bf16.mxu0 0
    %2030 = vmatmul.mubr.bf16.gmra.mxu0 %v1675
    %v2031 = vpop.f32.mrf.mxu0
    %v2032 = vadd.f32 %v1699, %v2031
    %v2033 = vpop.f32.mrf.mxu0
    %v2034 = vpop.f32.mrf.mxu0
    %v2035 = vadd.f32 %v1699, %v2034
    %v2036 = vpop.f32.mrf.mxu0
    %2037 = vdwg.mxu0
    %v2038 = vmax.f32 %v1784, 0.0
    %v2039 = vmax.f32 %v1787, 0.0
    %v2040 = vmax.f32 %v1792, 0.0
    %v2041 = vmax.f32 %v1795, 0.0
    %v2042 = vmax.f32 %v1800, 0.0
    %v2043 = vmax.f32 %v1803, 0.0
    %v2044 = vmax.f32 %v1808, 0.0
    %v2045 = vmax.f32 %v1811, 0.0
    %v2046 = vmax.f32 %v1816, 0.0
    %v2047 = vmax.f32 %v1819, 0.0
    %v2048 = vmax.f32 %v1824, 0.0
    %v2049 = vmax.f32 %v1827, 0.0
    %v2050 = vmax.f32 %v1832, 0.0
    %v2051 = vmax.f32 %v1835, 0.0
    %v2052 = vmax.f32 %v1840, 0.0
    %v2053 = vmax.f32 %v1843, 0.0
    %v2054 = vmax.f32 %v1848, 0.0
    %v2055 = vmax.f32 %v1851, 0.0
    %v2056 = vmax.f32 %v1856, 0.0
    %v2057 = vmax.f32 %v1859, 0.0
    %v2058 = vmax.f32 %v1864, 0.0
    %v2059 = vmax.f32 %v1867, 0.0
    %v2060 = vmax.f32 %v1872, 0.0
    %v2061 = vmax.f32 %v1875, 0.0
    %v2062 = vmax.f32 %v1880, 0.0
    %v2063 = vmax.f32 %v1883, 0.0
    %v2064 = vmax.f32 %v1888, 0.0
    %v2065 = vmax.f32 %v1891, 0.0
    %v2066 = vmax.f32 %v1896, 0.0
    %v2067 = vmax.f32 %v1899, 0.0
    %v2068 = vmax.f32 %v1904, 0.0
    %v2069 = vmax.f32 %v1907, 0.0
    %v2070 = vmax.f32 %v1912, 0.0
    %v2071 = vmax.f32 %v1915, 0.0
    %v2072 = vmax.f32 %v1920, 0.0
    %v2073 = vmax.f32 %v1923, 0.0
    %v2074 = vmax.f32 %v1928, 0.0
    %v2075 = vmax.f32 %v1931, 0.0
    %v2076 = vmax.f32 %v1936, 0.0
    %v2077 = vmax.f32 %v1939, 0.0
    %v2078 = vmax.f32 %v1944, 0.0
    %v2079 = vmax.f32 %v1947, 0.0
    %v2080 = vmax.f32 %v1952, 0.0
    %v2081 = vmax.f32 %v1955, 0.0
    %v2082 = vmax.f32 %v1960, 0.0
    %v2083 = vmax.f32 %v1963, 0.0
    %v2084 = vmax.f32 %v1968, 0.0
    %v2085 = vmax.f32 %v1971, 0.0
    %v2086 = vmax.f32 %v1976, 0.0
    %v2087 = vmax.f32 %v1979, 0.0
    %v2088 = vmax.f32 %v1984, 0.0
    %v2089 = vmax.f32 %v1987, 0.0
    %v2090 = vmax.f32 %v1992, 0.0
    %v2091 = vmax.f32 %v1995, 0.0
    %v2092 = vmax.f32 %v2000, 0.0
    %v2093 = vmax.f32 %v2003, 0.0
    %v2094 = vmax.f32 %v2008, 0.0
    %v2095 = vmax.f32 %v2011, 0.0
    %v2096 = vmax.f32 %v2016, 0.0
    %v2097 = vmax.f32 %v2019, 0.0
    %v2098 = vmax.f32 %v2024, 0.0
    %v2099 = vmax.f32 %v2027, 0.0
    %v2100 = vmax.f32 %v2032, 0.0
    %v2101 = vmax.f32 %v2035, 0.0
    %v2102 = vpack.c.bf16 %v2039, %v2038
    %v2103 = vpack.c.bf16 %v2041, %v2040
    %v2104 = vpack.c.bf16 %v2043, %v2042
    %v2105 = vpack.c.bf16 %v2045, %v2044
    %v2106 = vpack.c.bf16 %v2047, %v2046
    %v2107 = vpack.c.bf16 %v2049, %v2048
    %v2108 = vpack.c.bf16 %v2051, %v2050
    %v2109 = vpack.c.bf16 %v2053, %v2052
    %v2110 = vpack.c.bf16 %v2055, %v2054
    %v2111 = vpack.c.bf16 %v2057, %v2056
    %v2112 = vpack.c.bf16 %v2059, %v2058
    %v2113 = vpack.c.bf16 %v2061, %v2060
    %v2114 = vpack.c.bf16 %v2063, %v2062
    %v2115 = vpack.c.bf16 %v2065, %v2064
    %v2116 = vpack.c.bf16 %v2067, %v2066
    %v2117 = vpack.c.bf16 %v2069, %v2068
    %v2118 = vpack.c.bf16 %v2071, %v2070
    %v2119 = vpack.c.bf16 %v2073, %v2072
    %v2120 = vpack.c.bf16 %v2075, %v2074
    %v2121 = vpack.c.bf16 %v2077, %v2076
    %v2122 = vpack.c.bf16 %v2079, %v2078
    %v2123 = vpack.c.bf16 %v2081, %v2080
    %v2124 = vpack.c.bf16 %v2083, %v2082
    %v2125 = vpack.c.bf16 %v2085, %v2084
    %v2126 = vpack.c.bf16 %v2087, %v2086
    %v2127 = vpack.c.bf16 %v2089, %v2088
    %v2128 = vpack.c.bf16 %v2091, %v2090
    %v2129 = vpack.c.bf16 %v2093, %v2092
    %v2130 = vpack.c.bf16 %v2095, %v2094
    %v2131 = vpack.c.bf16 %v2097, %v2096
    %v2132 = vpack.c.bf16 %v2099, %v2098
    %v2133 = vpack.c.bf16 %v2101, %v2100
    %s2134 = scalar_lea.vmem %s4, 192
    %v2135 = vld [vmem:[%s2134] sm:$0xf]
    %v2136 = vld [vmem:[%s2134 + $0x4] sm:$0xf]
    %v2137 = vld [vmem:[%s2134 + $0x8] sm:$0xf]
    %v2138 = vld [vmem:[%s2134 + $0xc] sm:$0xf]
    %v2139 = vld [vmem:[%s2134 + $0x10] sm:$0xf]
    %v2140 = vld [vmem:[%s2134 + $0x14] sm:$0xf]
    %v2141 = vld [vmem:[%s2134 + $0x18] sm:$0xf]
    %v2142 = vld [vmem:[%s2134 + $0x1c] sm:$0xf]
    %v2143 = vld [vmem:[%s2134 + $0x20] sm:$0xf]
    %v2144 = vld [vmem:[%s2134 + $0x24] sm:$0xf]
    %v2145 = vld [vmem:[%s2134 + $0x28] sm:$0xf]
    %v2146 = vld [vmem:[%s2134 + $0x2c] sm:$0xf]
    %v2147 = vld [vmem:[%s2134 + $0x30] sm:$0xf]
    %v2148 = vld [vmem:[%s2134 + $0x34] sm:$0xf]
    %v2149 = vld [vmem:[%s2134 + $0x38] sm:$0xf]
    %v2150 = vld [vmem:[%s2134 + $0x3c] sm:$0xf]
    %s2151 = scalar_lea.vmem %s5, 3
    %v2152 = vld [vmem:[%s2151] sm:$0x1]
    %v2154 = vlaneseq
    %v2155 = vshrl.u32 %v2154, 7
    %v2156 = vsub.s32 0, %v2155
    %v2157 = vrot.slane %v2152, %v2156
    %v2175 = vunpack.c.l.b16 %v2135
    %v2176 = vunpack.c.l.b16 %v2136
    %v2177 = vunpack.c.l.b16 %v2137
    %v2178 = vunpack.c.l.b16 %v2138
    %v2179 = vunpack.c.l.b16 %v2139
    %v2180 = vunpack.c.l.b16 %v2140
    %v2181 = vunpack.c.l.b16 %v2141
    %v2182 = vunpack.c.l.b16 %v2142
    %v2183 = vunpack.c.l.b16 %v2143
    %v2184 = vunpack.c.l.b16 %v2144
    %v2185 = vunpack.c.l.b16 %v2145
    %v2186 = vunpack.c.l.b16 %v2146
    %v2187 = vunpack.c.l.b16 %v2147
    %v2188 = vunpack.c.l.b16 %v2148
    %v2189 = vunpack.c.l.b16 %v2149
    %v2190 = vunpack.c.l.b16 %v2150
    %v2191 = vpack.c.b16 %v2176, %v2175
    %v2192 = vpack.c.b16 %v2178, %v2177
    %v2193 = vpack.c.b16 %v2180, %v2179
    %v2194 = vpack.c.b16 %v2182, %v2181
    %v2195 = vpack.c.b16 %v2184, %v2183
    %v2196 = vpack.c.b16 %v2186, %v2185
    %v2197 = vpack.c.b16 %v2188, %v2187
    %v2198 = vpack.c.b16 %v2190, %v2189
    %2207 = vmatprep.subr.bf16.mxu0 0
    %2208 = vmatpush1.bf16.msra.mxu0 %v2198
    %2209 = vmatprep.subr.bf16.mxu0 0
    %2210 = vmatpush1.bf16.msra.mxu0 %v2197
    %2211 = vmatprep.subr.bf16.mxu0 0
    %2212 = vmatpush1.bf16.msra.mxu0 %v2196
    %2213 = vmatprep.subr.bf16.mxu0 0
    %2214 = vmatpush1.bf16.msra.mxu0 %v2195
    %2215 = vmatprep.subr.bf16.mxu0 0
    %2216 = vmatpush1.bf16.msra.mxu0 %v2194
    %2217 = vmatprep.subr.bf16.mxu0 0
    %2218 = vmatpush1.bf16.msra.mxu0 %v2193
    %2219 = vmatprep.subr.bf16.mxu0 0
    %2220 = vmatpush1.bf16.msra.mxu0 %v2192
    %2221 = vmatprep.subr.bf16.mxu0 0
    %2222 = vmatpush1.bf16.msra.mxu0 %v2191
    %2223 = vmatprep.subr.bf16.mxu0 0
    %2224 = vmatpush2.bf16.msra.mxu0 0
    %2225 = vmatprep.subr.bf16.mxu0 0
    %2226 = vmatpush2.bf16.msra.mxu0 0
    %2227 = vmatprep.subr.bf16.mxu0 0
    %2228 = vmatpush2.bf16.msra.mxu0 0
    %2229 = vmatprep.subr.bf16.mxu0 0
    %2230 = vmatpush2.bf16.msra.mxu0 0
    %2231 = vmatprep.subr.bf16.mxu0 0
    %2232 = vmatpush2.bf16.msra.mxu0 0
    %2233 = vmatprep.subr.bf16.mxu0 0
    %2234 = vmatpush2.bf16.msra.mxu0 0
    %2235 = vmatprep.subr.bf16.mxu0 0
    %2236 = vmatpush2.bf16.msra.mxu0 0
    %2237 = vmatprep.subr.bf16.mxu0 0
    %2238 = vmatpush2.bf16.msra.mxu0 0
    %2239 = vmatprep.mubr.bf16.mxu0 0
    %2240 = vmatmul.mubr.bf16.gmra.mxu0 %v2102
    %v2241 = vpop.f32.mrf.mxu0
    %v2242 = vadd.f32 %v2157, %v2241
    %v2243 = vpop.f32.mrf.mxu0
    %v2244 = vpop.f32.mrf.mxu0
    %v2245 = vadd.f32 %v2157, %v2244
    %v2246 = vpop.f32.mrf.mxu0
    %2247 = vmatprep.mubr.bf16.mxu0 0
    %2248 = vmatmul.mubr.bf16.gmra.mxu0 %v2103
    %v2249 = vpop.f32.mrf.mxu0
    %v2250 = vadd.f32 %v2157, %v2249
    %v2251 = vpop.f32.mrf.mxu0
    %v2252 = vpop.f32.mrf.mxu0
    %v2253 = vadd.f32 %v2157, %v2252
    %v2254 = vpop.f32.mrf.mxu0
    %2255 = vmatprep.mubr.bf16.mxu0 0
    %2256 = vmatmul.mubr.bf16.gmra.mxu0 %v2104
    %v2257 = vpop.f32.mrf.mxu0
    %v2258 = vadd.f32 %v2157, %v2257
    %v2259 = vpop.f32.mrf.mxu0
    %v2260 = vpop.f32.mrf.mxu0
    %v2261 = vadd.f32 %v2157, %v2260
    %v2262 = vpop.f32.mrf.mxu0
    %2263 = vmatprep.mubr.bf16.mxu0 0
    %2264 = vmatmul.mubr.bf16.gmra.mxu0 %v2105
    %v2265 = vpop.f32.mrf.mxu0
    %v2266 = vadd.f32 %v2157, %v2265
    %v2267 = vpop.f32.mrf.mxu0
    %v2268 = vpop.f32.mrf.mxu0
    %v2269 = vadd.f32 %v2157, %v2268
    %v2270 = vpop.f32.mrf.mxu0
    %2271 = vmatprep.mubr.bf16.mxu0 0
    %2272 = vmatmul.mubr.bf16.gmra.mxu0 %v2106
    %v2273 = vpop.f32.mrf.mxu0
    %v2274 = vadd.f32 %v2157, %v2273
    %v2275 = vpop.f32.mrf.mxu0
    %v2276 = vpop.f32.mrf.mxu0
    %v2277 = vadd.f32 %v2157, %v2276
    %v2278 = vpop.f32.mrf.mxu0
    %2279 = vmatprep.mubr.bf16.mxu0 0
    %2280 = vmatmul.mubr.bf16.gmra.mxu0 %v2107
    %v2281 = vpop.f32.mrf.mxu0
    %v2282 = vadd.f32 %v2157, %v2281
    %v2283 = vpop.f32.mrf.mxu0
    %v2284 = vpop.f32.mrf.mxu0
    %v2285 = vadd.f32 %v2157, %v2284
    %v2286 = vpop.f32.mrf.mxu0
    %2287 = vmatprep.mubr.bf16.mxu0 0
    %2288 = vmatmul.mubr.bf16.gmra.mxu0 %v2108
    %v2289 = vpop.f32.mrf.mxu0
    %v2290 = vadd.f32 %v2157, %v2289
    %v2291 = vpop.f32.mrf.mxu0
    %v2292 = vpop.f32.mrf.mxu0
    %v2293 = vadd.f32 %v2157, %v2292
    %v2294 = vpop.f32.mrf.mxu0
    %2295 = vmatprep.mubr.bf16.mxu0 0
    %2296 = vmatmul.mubr.bf16.gmra.mxu0 %v2109
    %v2297 = vpop.f32.mrf.mxu0
    %v2298 = vadd.f32 %v2157, %v2297
    %v2299 = vpop.f32.mrf.mxu0
    %v2300 = vpop.f32.mrf.mxu0
    %v2301 = vadd.f32 %v2157, %v2300
    %v2302 = vpop.f32.mrf.mxu0
    %2303 = vmatprep.mubr.bf16.mxu0 0
    %2304 = vmatmul.mubr.bf16.gmra.mxu0 %v2110
    %v2305 = vpop.f32.mrf.mxu0
    %v2306 = vadd.f32 %v2157, %v2305
    %v2307 = vpop.f32.mrf.mxu0
    %v2308 = vpop.f32.mrf.mxu0
    %v2309 = vadd.f32 %v2157, %v2308
    %v2310 = vpop.f32.mrf.mxu0
    %2311 = vmatprep.mubr.bf16.mxu0 0
    %2312 = vmatmul.mubr.bf16.gmra.mxu0 %v2111
    %v2313 = vpop.f32.mrf.mxu0
    %v2314 = vadd.f32 %v2157, %v2313
    %v2315 = vpop.f32.mrf.mxu0
    %v2316 = vpop.f32.mrf.mxu0
    %v2317 = vadd.f32 %v2157, %v2316
    %v2318 = vpop.f32.mrf.mxu0
    %2319 = vmatprep.mubr.bf16.mxu0 0
    %2320 = vmatmul.mubr.bf16.gmra.mxu0 %v2112
    %v2321 = vpop.f32.mrf.mxu0
    %v2322 = vadd.f32 %v2157, %v2321
    %v2323 = vpop.f32.mrf.mxu0
    %v2324 = vpop.f32.mrf.mxu0
    %v2325 = vadd.f32 %v2157, %v2324
    %v2326 = vpop.f32.mrf.mxu0
    %2327 = vmatprep.mubr.bf16.mxu0 0
    %2328 = vmatmul.mubr.bf16.gmra.mxu0 %v2113
    %v2329 = vpop.f32.mrf.mxu0
    %v2330 = vadd.f32 %v2157, %v2329
    %v2331 = vpop.f32.mrf.mxu0
    %v2332 = vpop.f32.mrf.mxu0
    %v2333 = vadd.f32 %v2157, %v2332
    %v2334 = vpop.f32.mrf.mxu0
    %2335 = vmatprep.mubr.bf16.mxu0 0
    %2336 = vmatmul.mubr.bf16.gmra.mxu0 %v2114
    %v2337 = vpop.f32.mrf.mxu0
    %v2338 = vadd.f32 %v2157, %v2337
    %v2339 = vpop.f32.mrf.mxu0
    %v2340 = vpop.f32.mrf.mxu0
    %v2341 = vadd.f32 %v2157, %v2340
    %v2342 = vpop.f32.mrf.mxu0
    %2343 = vmatprep.mubr.bf16.mxu0 0
    %2344 = vmatmul.mubr.bf16.gmra.mxu0 %v2115
    %v2345 = vpop.f32.mrf.mxu0
    %v2346 = vadd.f32 %v2157, %v2345
    %v2347 = vpop.f32.mrf.mxu0
    %v2348 = vpop.f32.mrf.mxu0
    %v2349 = vadd.f32 %v2157, %v2348
    %v2350 = vpop.f32.mrf.mxu0
    %2351 = vmatprep.mubr.bf16.mxu0 0
    %2352 = vmatmul.mubr.bf16.gmra.mxu0 %v2116
    %v2353 = vpop.f32.mrf.mxu0
    %v2354 = vadd.f32 %v2157, %v2353
    %v2355 = vpop.f32.mrf.mxu0
    %v2356 = vpop.f32.mrf.mxu0
    %v2357 = vadd.f32 %v2157, %v2356
    %v2358 = vpop.f32.mrf.mxu0
    %2359 = vmatprep.mubr.bf16.mxu0 0
    %2360 = vmatmul.mubr.bf16.gmra.mxu0 %v2117
    %v2361 = vpop.f32.mrf.mxu0
    %v2362 = vadd.f32 %v2157, %v2361
    %v2363 = vpop.f32.mrf.mxu0
    %v2364 = vpop.f32.mrf.mxu0
    %v2365 = vadd.f32 %v2157, %v2364
    %v2366 = vpop.f32.mrf.mxu0
    %2367 = vmatprep.mubr.bf16.mxu0 0
    %2368 = vmatmul.mubr.bf16.gmra.mxu0 %v2118
    %v2369 = vpop.f32.mrf.mxu0
    %v2370 = vadd.f32 %v2157, %v2369
    %v2371 = vpop.f32.mrf.mxu0
    %v2372 = vpop.f32.mrf.mxu0
    %v2373 = vadd.f32 %v2157, %v2372
    %v2374 = vpop.f32.mrf.mxu0
    %2375 = vmatprep.mubr.bf16.mxu0 0
    %2376 = vmatmul.mubr.bf16.gmra.mxu0 %v2119
    %v2377 = vpop.f32.mrf.mxu0
    %v2378 = vadd.f32 %v2157, %v2377
    %v2379 = vpop.f32.mrf.mxu0
    %v2380 = vpop.f32.mrf.mxu0
    %v2381 = vadd.f32 %v2157, %v2380
    %v2382 = vpop.f32.mrf.mxu0
    %2383 = vmatprep.mubr.bf16.mxu0 0
    %2384 = vmatmul.mubr.bf16.gmra.mxu0 %v2120
    %v2385 = vpop.f32.mrf.mxu0
    %v2386 = vadd.f32 %v2157, %v2385
    %v2387 = vpop.f32.mrf.mxu0
    %v2388 = vpop.f32.mrf.mxu0
    %v2389 = vadd.f32 %v2157, %v2388
    %v2390 = vpop.f32.mrf.mxu0
    %2391 = vmatprep.mubr.bf16.mxu0 0
    %2392 = vmatmul.mubr.bf16.gmra.mxu0 %v2121
    %v2393 = vpop.f32.mrf.mxu0
    %v2394 = vadd.f32 %v2157, %v2393
    %v2395 = vpop.f32.mrf.mxu0
    %v2396 = vpop.f32.mrf.mxu0
    %v2397 = vadd.f32 %v2157, %v2396
    %v2398 = vpop.f32.mrf.mxu0
    %2399 = vmatprep.mubr.bf16.mxu0 0
    %2400 = vmatmul.mubr.bf16.gmra.mxu0 %v2122
    %v2401 = vpop.f32.mrf.mxu0
    %v2402 = vadd.f32 %v2157, %v2401
    %v2403 = vpop.f32.mrf.mxu0
    %v2404 = vpop.f32.mrf.mxu0
    %v2405 = vadd.f32 %v2157, %v2404
    %v2406 = vpop.f32.mrf.mxu0
    %2407 = vmatprep.mubr.bf16.mxu0 0
    %2408 = vmatmul.mubr.bf16.gmra.mxu0 %v2123
    %v2409 = vpop.f32.mrf.mxu0
    %v2410 = vadd.f32 %v2157, %v2409
    %v2411 = vpop.f32.mrf.mxu0
    %v2412 = vpop.f32.mrf.mxu0
    %v2413 = vadd.f32 %v2157, %v2412
    %v2414 = vpop.f32.mrf.mxu0
    %2415 = vmatprep.mubr.bf16.mxu0 0
    %2416 = vmatmul.mubr.bf16.gmra.mxu0 %v2124
    %v2417 = vpop.f32.mrf.mxu0
    %v2418 = vadd.f32 %v2157, %v2417
    %v2419 = vpop.f32.mrf.mxu0
    %v2420 = vpop.f32.mrf.mxu0
    %v2421 = vadd.f32 %v2157, %v2420
    %v2422 = vpop.f32.mrf.mxu0
    %2423 = vmatprep.mubr.bf16.mxu0 0
    %2424 = vmatmul.mubr.bf16.gmra.mxu0 %v2125
    %v2425 = vpop.f32.mrf.mxu0
    %v2426 = vadd.f32 %v2157, %v2425
    %v2427 = vpop.f32.mrf.mxu0
    %v2428 = vpop.f32.mrf.mxu0
    %v2429 = vadd.f32 %v2157, %v2428
    %v2430 = vpop.f32.mrf.mxu0
    %2431 = vmatprep.mubr.bf16.mxu0 0
    %2432 = vmatmul.mubr.bf16.gmra.mxu0 %v2126
    %v2433 = vpop.f32.mrf.mxu0
    %v2434 = vadd.f32 %v2157, %v2433
    %v2435 = vpop.f32.mrf.mxu0
    %v2436 = vpop.f32.mrf.mxu0
    %v2437 = vadd.f32 %v2157, %v2436
    %v2438 = vpop.f32.mrf.mxu0
    %2439 = vmatprep.mubr.bf16.mxu0 0
    %2440 = vmatmul.mubr.bf16.gmra.mxu0 %v2127
    %v2441 = vpop.f32.mrf.mxu0
    %v2442 = vadd.f32 %v2157, %v2441
    %v2443 = vpop.f32.mrf.mxu0
    %v2444 = vpop.f32.mrf.mxu0
    %v2445 = vadd.f32 %v2157, %v2444
    %v2446 = vpop.f32.mrf.mxu0
    %2447 = vmatprep.mubr.bf16.mxu0 0
    %2448 = vmatmul.mubr.bf16.gmra.mxu0 %v2128
    %v2449 = vpop.f32.mrf.mxu0
    %v2450 = vadd.f32 %v2157, %v2449
    %v2451 = vpop.f32.mrf.mxu0
    %v2452 = vpop.f32.mrf.mxu0
    %v2453 = vadd.f32 %v2157, %v2452
    %v2454 = vpop.f32.mrf.mxu0
    %2455 = vmatprep.mubr.bf16.mxu0 0
    %2456 = vmatmul.mubr.bf16.gmra.mxu0 %v2129
    %v2457 = vpop.f32.mrf.mxu0
    %v2458 = vadd.f32 %v2157, %v2457
    %v2459 = vpop.f32.mrf.mxu0
    %v2460 = vpop.f32.mrf.mxu0
    %v2461 = vadd.f32 %v2157, %v2460
    %v2462 = vpop.f32.mrf.mxu0
    %2463 = vmatprep.mubr.bf16.mxu0 0
    %2464 = vmatmul.mubr.bf16.gmra.mxu0 %v2130
    %v2465 = vpop.f32.mrf.mxu0
    %v2466 = vadd.f32 %v2157, %v2465
    %v2467 = vpop.f32.mrf.mxu0
    %v2468 = vpop.f32.mrf.mxu0
    %v2469 = vadd.f32 %v2157, %v2468
    %v2470 = vpop.f32.mrf.mxu0
    %2471 = vmatprep.mubr.bf16.mxu0 0
    %2472 = vmatmul.mubr.bf16.gmra.mxu0 %v2131
    %v2473 = vpop.f32.mrf.mxu0
    %v2474 = vadd.f32 %v2157, %v2473
    %v2475 = vpop.f32.mrf.mxu0
    %v2476 = vpop.f32.mrf.mxu0
    %v2477 = vadd.f32 %v2157, %v2476
    %v2478 = vpop.f32.mrf.mxu0
    %2479 = vmatprep.mubr.bf16.mxu0 0
    %2480 = vmatmul.mubr.bf16.gmra.mxu0 %v2132
    %v2481 = vpop.f32.mrf.mxu0
    %v2482 = vadd.f32 %v2157, %v2481
    %v2483 = vpop.f32.mrf.mxu0
    %v2484 = vpop.f32.mrf.mxu0
    %v2485 = vadd.f32 %v2157, %v2484
    %v2486 = vpop.f32.mrf.mxu0
    %2487 = vmatprep.mubr.bf16.mxu0 0
    %2488 = vmatmul.mubr.bf16.gmra.mxu0 %v2133
    %v2489 = vpop.f32.mrf.mxu0
    %v2490 = vadd.f32 %v2157, %v2489
    %v2491 = vpop.f32.mrf.mxu0
    %v2492 = vpop.f32.mrf.mxu0
    %v2493 = vadd.f32 %v2157, %v2492
    %v2494 = vpop.f32.mrf.mxu0
    %2495 = vdwg.mxu0
    %v2496 = vmax.f32 %v2242, 0.0
    %v2497 = vmax.f32 %v2245, 0.0
    %v2498 = vmax.f32 %v2250, 0.0
    %v2499 = vmax.f32 %v2253, 0.0
    %v2500 = vmax.f32 %v2258, 0.0
    %v2501 = vmax.f32 %v2261, 0.0
    %v2502 = vmax.f32 %v2266, 0.0
    %v2503 = vmax.f32 %v2269, 0.0
    %v2504 = vmax.f32 %v2274, 0.0
    %v2505 = vmax.f32 %v2277, 0.0
    %v2506 = vmax.f32 %v2282, 0.0
    %v2507 = vmax.f32 %v2285, 0.0
    %v2508 = vmax.f32 %v2290, 0.0
    %v2509 = vmax.f32 %v2293, 0.0
    %v2510 = vmax.f32 %v2298, 0.0
    %v2511 = vmax.f32 %v2301, 0.0
    %v2512 = vmax.f32 %v2306, 0.0
    %v2513 = vmax.f32 %v2309, 0.0
    %v2514 = vmax.f32 %v2314, 0.0
    %v2515 = vmax.f32 %v2317, 0.0
    %v2516 = vmax.f32 %v2322, 0.0
    %v2517 = vmax.f32 %v2325, 0.0
    %v2518 = vmax.f32 %v2330, 0.0
    %v2519 = vmax.f32 %v2333, 0.0
    %v2520 = vmax.f32 %v2338, 0.0
    %v2521 = vmax.f32 %v2341, 0.0
    %v2522 = vmax.f32 %v2346, 0.0
    %v2523 = vmax.f32 %v2349, 0.0
    %v2524 = vmax.f32 %v2354, 0.0
    %v2525 = vmax.f32 %v2357, 0.0
    %v2526 = vmax.f32 %v2362, 0.0
    %v2527 = vmax.f32 %v2365, 0.0
    %v2528 = vmax.f32 %v2370, 0.0
    %v2529 = vmax.f32 %v2373, 0.0
    %v2530 = vmax.f32 %v2378, 0.0
    %v2531 = vmax.f32 %v2381, 0.0
    %v2532 = vmax.f32 %v2386, 0.0
    %v2533 = vmax.f32 %v2389, 0.0
    %v2534 = vmax.f32 %v2394, 0.0
    %v2535 = vmax.f32 %v2397, 0.0
    %v2536 = vmax.f32 %v2402, 0.0
    %v2537 = vmax.f32 %v2405, 0.0
    %v2538 = vmax.f32 %v2410, 0.0
    %v2539 = vmax.f32 %v2413, 0.0
    %v2540 = vmax.f32 %v2418, 0.0
    %v2541 = vmax.f32 %v2421, 0.0
    %v2542 = vmax.f32 %v2426, 0.0
    %v2543 = vmax.f32 %v2429, 0.0
    %v2544 = vmax.f32 %v2434, 0.0
    %v2545 = vmax.f32 %v2437, 0.0
    %v2546 = vmax.f32 %v2442, 0.0
    %v2547 = vmax.f32 %v2445, 0.0
    %v2548 = vmax.f32 %v2450, 0.0
    %v2549 = vmax.f32 %v2453, 0.0
    %v2550 = vmax.f32 %v2458, 0.0
    %v2551 = vmax.f32 %v2461, 0.0
    %v2552 = vmax.f32 %v2466, 0.0
    %v2553 = vmax.f32 %v2469, 0.0
    %v2554 = vmax.f32 %v2474, 0.0
    %v2555 = vmax.f32 %v2477, 0.0
    %v2556 = vmax.f32 %v2482, 0.0
    %v2557 = vmax.f32 %v2485, 0.0
    %v2558 = vmax.f32 %v2490, 0.0
    %v2559 = vmax.f32 %v2493, 0.0
    %v2560 = vpack.c.bf16 %v2497, %v2496
    %v2561 = vpack.c.bf16 %v2499, %v2498
    %v2562 = vpack.c.bf16 %v2501, %v2500
    %v2563 = vpack.c.bf16 %v2503, %v2502
    %v2564 = vpack.c.bf16 %v2505, %v2504
    %v2565 = vpack.c.bf16 %v2507, %v2506
    %v2566 = vpack.c.bf16 %v2509, %v2508
    %v2567 = vpack.c.bf16 %v2511, %v2510
    %v2568 = vpack.c.bf16 %v2513, %v2512
    %v2569 = vpack.c.bf16 %v2515, %v2514
    %v2570 = vpack.c.bf16 %v2517, %v2516
    %v2571 = vpack.c.bf16 %v2519, %v2518
    %v2572 = vpack.c.bf16 %v2521, %v2520
    %v2573 = vpack.c.bf16 %v2523, %v2522
    %v2574 = vpack.c.bf16 %v2525, %v2524
    %v2575 = vpack.c.bf16 %v2527, %v2526
    %v2576 = vpack.c.bf16 %v2529, %v2528
    %v2577 = vpack.c.bf16 %v2531, %v2530
    %v2578 = vpack.c.bf16 %v2533, %v2532
    %v2579 = vpack.c.bf16 %v2535, %v2534
    %v2580 = vpack.c.bf16 %v2537, %v2536
    %v2581 = vpack.c.bf16 %v2539, %v2538
    %v2582 = vpack.c.bf16 %v2541, %v2540
    %v2583 = vpack.c.bf16 %v2543, %v2542
    %v2584 = vpack.c.bf16 %v2545, %v2544
    %v2585 = vpack.c.bf16 %v2547, %v2546
    %v2586 = vpack.c.bf16 %v2549, %v2548
    %v2587 = vpack.c.bf16 %v2551, %v2550
    %v2588 = vpack.c.bf16 %v2553, %v2552
    %v2589 = vpack.c.bf16 %v2555, %v2554
    %v2590 = vpack.c.bf16 %v2557, %v2556
    %v2591 = vpack.c.bf16 %v2559, %v2558
    %s2592 = scalar_lea.vmem %s4, 256
    %v2593 = vld [vmem:[%s2592] sm:$0xf]
    %v2594 = vld [vmem:[%s2592 + $0x4] sm:$0xf]
    %v2595 = vld [vmem:[%s2592 + $0x8] sm:$0xf]
    %v2596 = vld [vmem:[%s2592 + $0xc] sm:$0xf]
    %v2597 = vld [vmem:[%s2592 + $0x10] sm:$0xf]
    %v2598 = vld [vmem:[%s2592 + $0x14] sm:$0xf]
    %v2599 = vld [vmem:[%s2592 + $0x18] sm:$0xf]
    %v2600 = vld [vmem:[%s2592 + $0x1c] sm:$0xf]
    %v2601 = vld [vmem:[%s2592 + $0x20] sm:$0xf]
    %v2602 = vld [vmem:[%s2592 + $0x24] sm:$0xf]
    %v2603 = vld [vmem:[%s2592 + $0x28] sm:$0xf]
    %v2604 = vld [vmem:[%s2592 + $0x2c] sm:$0xf]
    %v2605 = vld [vmem:[%s2592 + $0x30] sm:$0xf]
    %v2606 = vld [vmem:[%s2592 + $0x34] sm:$0xf]
    %v2607 = vld [vmem:[%s2592 + $0x38] sm:$0xf]
    %v2608 = vld [vmem:[%s2592 + $0x3c] sm:$0xf]
    %s2609 = scalar_lea.vmem %s5, 4
    %v2610 = vld [vmem:[%s2609] sm:$0x1]
    %v2612 = vlaneseq
    %v2613 = vshrl.u32 %v2612, 7
    %v2614 = vsub.s32 0, %v2613
    %v2615 = vrot.slane %v2610, %v2614
    %v2633 = vunpack.c.l.b16 %v2593
    %v2634 = vunpack.c.l.b16 %v2594
    %v2635 = vunpack.c.l.b16 %v2595
    %v2636 = vunpack.c.l.b16 %v2596
    %v2637 = vunpack.c.l.b16 %v2597
    %v2638 = vunpack.c.l.b16 %v2598
    %v2639 = vunpack.c.l.b16 %v2599
    %v2640 = vunpack.c.l.b16 %v2600
    %v2641 = vunpack.c.l.b16 %v2601
    %v2642 = vunpack.c.l.b16 %v2602
    %v2643 = vunpack.c.l.b16 %v2603
    %v2644 = vunpack.c.l.b16 %v2604
    %v2645 = vunpack.c.l.b16 %v2605
    %v2646 = vunpack.c.l.b16 %v2606
    %v2647 = vunpack.c.l.b16 %v2607
    %v2648 = vunpack.c.l.b16 %v2608
    %v2649 = vpack.c.b16 %v2634, %v2633
    %v2650 = vpack.c.b16 %v2636, %v2635
    %v2651 = vpack.c.b16 %v2638, %v2637
    %v2652 = vpack.c.b16 %v2640, %v2639
    %v2653 = vpack.c.b16 %v2642, %v2641
    %v2654 = vpack.c.b16 %v2644, %v2643
    %v2655 = vpack.c.b16 %v2646, %v2645
    %v2656 = vpack.c.b16 %v2648, %v2647
    %2665 = vmatprep.subr.bf16.mxu0 0
    %2666 = vmatpush1.bf16.msra.mxu0 %v2656
    %2667 = vmatprep.subr.bf16.mxu0 0
    %2668 = vmatpush1.bf16.msra.mxu0 %v2655
    %2669 = vmatprep.subr.bf16.mxu0 0
    %2670 = vmatpush1.bf16.msra.mxu0 %v2654
    %2671 = vmatprep.subr.bf16.mxu0 0
    %2672 = vmatpush1.bf16.msra.mxu0 %v2653
    %2673 = vmatprep.subr.bf16.mxu0 0
    %2674 = vmatpush1.bf16.msra.mxu0 %v2652
    %2675 = vmatprep.subr.bf16.mxu0 0
    %2676 = vmatpush1.bf16.msra.mxu0 %v2651
    %2677 = vmatprep.subr.bf16.mxu0 0
    %2678 = vmatpush1.bf16.msra.mxu0 %v2650
    %2679 = vmatprep.subr.bf16.mxu0 0
    %2680 = vmatpush1.bf16.msra.mxu0 %v2649
    %2681 = vmatprep.subr.bf16.mxu0 0
    %2682 = vmatpush2.bf16.msra.mxu0 0
    %2683 = vmatprep.subr.bf16.mxu0 0
    %2684 = vmatpush2.bf16.msra.mxu0 0
    %2685 = vmatprep.subr.bf16.mxu0 0
    %2686 = vmatpush2.bf16.msra.mxu0 0
    %2687 = vmatprep.subr.bf16.mxu0 0
    %2688 = vmatpush2.bf16.msra.mxu0 0
    %2689 = vmatprep.subr.bf16.mxu0 0
    %2690 = vmatpush2.bf16.msra.mxu0 0
    %2691 = vmatprep.subr.bf16.mxu0 0
    %2692 = vmatpush2.bf16.msra.mxu0 0
    %2693 = vmatprep.subr.bf16.mxu0 0
    %2694 = vmatpush2.bf16.msra.mxu0 0
    %2695 = vmatprep.subr.bf16.mxu0 0
    %2696 = vmatpush2.bf16.msra.mxu0 0
    %2697 = vmatprep.mubr.bf16.mxu0 0
    %2698 = vmatmul.mubr.bf16.gmra.mxu0 %v2560
    %v2699 = vpop.f32.mrf.mxu0
    %v2700 = vadd.f32 %v2615, %v2699
    %v2701 = vpop.f32.mrf.mxu0
    %v2702 = vpop.f32.mrf.mxu0
    %v2703 = vadd.f32 %v2615, %v2702
    %v2704 = vpop.f32.mrf.mxu0
    %2705 = vmatprep.mubr.bf16.mxu0 0
    %2706 = vmatmul.mubr.bf16.gmra.mxu0 %v2561
    %v2707 = vpop.f32.mrf.mxu0
    %v2708 = vadd.f32 %v2615, %v2707
    %v2709 = vpop.f32.mrf.mxu0
    %v2710 = vpop.f32.mrf.mxu0
    %v2711 = vadd.f32 %v2615, %v2710
    %v2712 = vpop.f32.mrf.mxu0
    %2713 = vmatprep.mubr.bf16.mxu0 0
    %2714 = vmatmul.mubr.bf16.gmra.mxu0 %v2562
    %v2715 = vpop.f32.mrf.mxu0
    %v2716 = vadd.f32 %v2615, %v2715
    %v2717 = vpop.f32.mrf.mxu0
    %v2718 = vpop.f32.mrf.mxu0
    %v2719 = vadd.f32 %v2615, %v2718
    %v2720 = vpop.f32.mrf.mxu0
    %2721 = vmatprep.mubr.bf16.mxu0 0
    %2722 = vmatmul.mubr.bf16.gmra.mxu0 %v2563
    %v2723 = vpop.f32.mrf.mxu0
    %v2724 = vadd.f32 %v2615, %v2723
    %v2725 = vpop.f32.mrf.mxu0
    %v2726 = vpop.f32.mrf.mxu0
    %v2727 = vadd.f32 %v2615, %v2726
    %v2728 = vpop.f32.mrf.mxu0
    %2729 = vmatprep.mubr.bf16.mxu0 0
    %2730 = vmatmul.mubr.bf16.gmra.mxu0 %v2564
    %v2731 = vpop.f32.mrf.mxu0
    %v2732 = vadd.f32 %v2615, %v2731
    %v2733 = vpop.f32.mrf.mxu0
    %v2734 = vpop.f32.mrf.mxu0
    %v2735 = vadd.f32 %v2615, %v2734
    %v2736 = vpop.f32.mrf.mxu0
    %2737 = vmatprep.mubr.bf16.mxu0 0
    %2738 = vmatmul.mubr.bf16.gmra.mxu0 %v2565
    %v2739 = vpop.f32.mrf.mxu0
    %v2740 = vadd.f32 %v2615, %v2739
    %v2741 = vpop.f32.mrf.mxu0
    %v2742 = vpop.f32.mrf.mxu0
    %v2743 = vadd.f32 %v2615, %v2742
    %v2744 = vpop.f32.mrf.mxu0
    %2745 = vmatprep.mubr.bf16.mxu0 0
    %2746 = vmatmul.mubr.bf16.gmra.mxu0 %v2566
    %v2747 = vpop.f32.mrf.mxu0
    %v2748 = vadd.f32 %v2615, %v2747
    %v2749 = vpop.f32.mrf.mxu0
    %v2750 = vpop.f32.mrf.mxu0
    %v2751 = vadd.f32 %v2615, %v2750
    %v2752 = vpop.f32.mrf.mxu0
    %2753 = vmatprep.mubr.bf16.mxu0 0
    %2754 = vmatmul.mubr.bf16.gmra.mxu0 %v2567
    %v2755 = vpop.f32.mrf.mxu0
    %v2756 = vadd.f32 %v2615, %v2755
    %v2757 = vpop.f32.mrf.mxu0
    %v2758 = vpop.f32.mrf.mxu0
    %v2759 = vadd.f32 %v2615, %v2758
    %v2760 = vpop.f32.mrf.mxu0
    %2761 = vmatprep.mubr.bf16.mxu0 0
    %2762 = vmatmul.mubr.bf16.gmra.mxu0 %v2568
    %v2763 = vpop.f32.mrf.mxu0
    %v2764 = vadd.f32 %v2615, %v2763
    %v2765 = vpop.f32.mrf.mxu0
    %v2766 = vpop.f32.mrf.mxu0
    %v2767 = vadd.f32 %v2615, %v2766
    %v2768 = vpop.f32.mrf.mxu0
    %2769 = vmatprep.mubr.bf16.mxu0 0
    %2770 = vmatmul.mubr.bf16.gmra.mxu0 %v2569
    %v2771 = vpop.f32.mrf.mxu0
    %v2772 = vadd.f32 %v2615, %v2771
    %v2773 = vpop.f32.mrf.mxu0
    %v2774 = vpop.f32.mrf.mxu0
    %v2775 = vadd.f32 %v2615, %v2774
    %v2776 = vpop.f32.mrf.mxu0
    %2777 = vmatprep.mubr.bf16.mxu0 0
    %2778 = vmatmul.mubr.bf16.gmra.mxu0 %v2570
    %v2779 = vpop.f32.mrf.mxu0
    %v2780 = vadd.f32 %v2615, %v2779
    %v2781 = vpop.f32.mrf.mxu0
    %v2782 = vpop.f32.mrf.mxu0
    %v2783 = vadd.f32 %v2615, %v2782
    %v2784 = vpop.f32.mrf.mxu0
    %2785 = vmatprep.mubr.bf16.mxu0 0
    %2786 = vmatmul.mubr.bf16.gmra.mxu0 %v2571
    %v2787 = vpop.f32.mrf.mxu0
    %v2788 = vadd.f32 %v2615, %v2787
    %v2789 = vpop.f32.mrf.mxu0
    %v2790 = vpop.f32.mrf.mxu0
    %v2791 = vadd.f32 %v2615, %v2790
    %v2792 = vpop.f32.mrf.mxu0
    %2793 = vmatprep.mubr.bf16.mxu0 0
    %2794 = vmatmul.mubr.bf16.gmra.mxu0 %v2572
    %v2795 = vpop.f32.mrf.mxu0
    %v2796 = vadd.f32 %v2615, %v2795
    %v2797 = vpop.f32.mrf.mxu0
    %v2798 = vpop.f32.mrf.mxu0
    %v2799 = vadd.f32 %v2615, %v2798
    %v2800 = vpop.f32.mrf.mxu0
    %2801 = vmatprep.mubr.bf16.mxu0 0
    %2802 = vmatmul.mubr.bf16.gmra.mxu0 %v2573
    %v2803 = vpop.f32.mrf.mxu0
    %v2804 = vadd.f32 %v2615, %v2803
    %v2805 = vpop.f32.mrf.mxu0
    %v2806 = vpop.f32.mrf.mxu0
    %v2807 = vadd.f32 %v2615, %v2806
    %v2808 = vpop.f32.mrf.mxu0
    %2809 = vmatprep.mubr.bf16.mxu0 0
    %2810 = vmatmul.mubr.bf16.gmra.mxu0 %v2574
    %v2811 = vpop.f32.mrf.mxu0
    %v2812 = vadd.f32 %v2615, %v2811
    %v2813 = vpop.f32.mrf.mxu0
    %v2814 = vpop.f32.mrf.mxu0
    %v2815 = vadd.f32 %v2615, %v2814
    %v2816 = vpop.f32.mrf.mxu0
    %2817 = vmatprep.mubr.bf16.mxu0 0
    %2818 = vmatmul.mubr.bf16.gmra.mxu0 %v2575
    %v2819 = vpop.f32.mrf.mxu0
    %v2820 = vadd.f32 %v2615, %v2819
    %v2821 = vpop.f32.mrf.mxu0
    %v2822 = vpop.f32.mrf.mxu0
    %v2823 = vadd.f32 %v2615, %v2822
    %v2824 = vpop.f32.mrf.mxu0
    %2825 = vmatprep.mubr.bf16.mxu0 0
    %2826 = vmatmul.mubr.bf16.gmra.mxu0 %v2576
    %v2827 = vpop.f32.mrf.mxu0
    %v2828 = vadd.f32 %v2615, %v2827
    %v2829 = vpop.f32.mrf.mxu0
    %v2830 = vpop.f32.mrf.mxu0
    %v2831 = vadd.f32 %v2615, %v2830
    %v2832 = vpop.f32.mrf.mxu0
    %2833 = vmatprep.mubr.bf16.mxu0 0
    %2834 = vmatmul.mubr.bf16.gmra.mxu0 %v2577
    %v2835 = vpop.f32.mrf.mxu0
    %v2836 = vadd.f32 %v2615, %v2835
    %v2837 = vpop.f32.mrf.mxu0
    %v2838 = vpop.f32.mrf.mxu0
    %v2839 = vadd.f32 %v2615, %v2838
    %v2840 = vpop.f32.mrf.mxu0
    %2841 = vmatprep.mubr.bf16.mxu0 0
    %2842 = vmatmul.mubr.bf16.gmra.mxu0 %v2578
    %v2843 = vpop.f32.mrf.mxu0
    %v2844 = vadd.f32 %v2615, %v2843
    %v2845 = vpop.f32.mrf.mxu0
    %v2846 = vpop.f32.mrf.mxu0
    %v2847 = vadd.f32 %v2615, %v2846
    %v2848 = vpop.f32.mrf.mxu0
    %2849 = vmatprep.mubr.bf16.mxu0 0
    %2850 = vmatmul.mubr.bf16.gmra.mxu0 %v2579
    %v2851 = vpop.f32.mrf.mxu0
    %v2852 = vadd.f32 %v2615, %v2851
    %v2853 = vpop.f32.mrf.mxu0
    %v2854 = vpop.f32.mrf.mxu0
    %v2855 = vadd.f32 %v2615, %v2854
    %v2856 = vpop.f32.mrf.mxu0
    %2857 = vmatprep.mubr.bf16.mxu0 0
    %2858 = vmatmul.mubr.bf16.gmra.mxu0 %v2580
    %v2859 = vpop.f32.mrf.mxu0
    %v2860 = vadd.f32 %v2615, %v2859
    %v2861 = vpop.f32.mrf.mxu0
    %v2862 = vpop.f32.mrf.mxu0
    %v2863 = vadd.f32 %v2615, %v2862
    %v2864 = vpop.f32.mrf.mxu0
    %2865 = vmatprep.mubr.bf16.mxu0 0
    %2866 = vmatmul.mubr.bf16.gmra.mxu0 %v2581
    %v2867 = vpop.f32.mrf.mxu0
    %v2868 = vadd.f32 %v2615, %v2867
    %v2869 = vpop.f32.mrf.mxu0
    %v2870 = vpop.f32.mrf.mxu0
    %v2871 = vadd.f32 %v2615, %v2870
    %v2872 = vpop.f32.mrf.mxu0
    %2873 = vmatprep.mubr.bf16.mxu0 0
    %2874 = vmatmul.mubr.bf16.gmra.mxu0 %v2582
    %v2875 = vpop.f32.mrf.mxu0
    %v2876 = vadd.f32 %v2615, %v2875
    %v2877 = vpop.f32.mrf.mxu0
    %v2878 = vpop.f32.mrf.mxu0
    %v2879 = vadd.f32 %v2615, %v2878
    %v2880 = vpop.f32.mrf.mxu0
    %2881 = vmatprep.mubr.bf16.mxu0 0
    %2882 = vmatmul.mubr.bf16.gmra.mxu0 %v2583
    %v2883 = vpop.f32.mrf.mxu0
    %v2884 = vadd.f32 %v2615, %v2883
    %v2885 = vpop.f32.mrf.mxu0
    %v2886 = vpop.f32.mrf.mxu0
    %v2887 = vadd.f32 %v2615, %v2886
    %v2888 = vpop.f32.mrf.mxu0
    %2889 = vmatprep.mubr.bf16.mxu0 0
    %2890 = vmatmul.mubr.bf16.gmra.mxu0 %v2584
    %v2891 = vpop.f32.mrf.mxu0
    %v2892 = vadd.f32 %v2615, %v2891
    %v2893 = vpop.f32.mrf.mxu0
    %v2894 = vpop.f32.mrf.mxu0
    %v2895 = vadd.f32 %v2615, %v2894
    %v2896 = vpop.f32.mrf.mxu0
    %2897 = vmatprep.mubr.bf16.mxu0 0
    %2898 = vmatmul.mubr.bf16.gmra.mxu0 %v2585
    %v2899 = vpop.f32.mrf.mxu0
    %v2900 = vadd.f32 %v2615, %v2899
    %v2901 = vpop.f32.mrf.mxu0
    %v2902 = vpop.f32.mrf.mxu0
    %v2903 = vadd.f32 %v2615, %v2902
    %v2904 = vpop.f32.mrf.mxu0
    %2905 = vmatprep.mubr.bf16.mxu0 0
    %2906 = vmatmul.mubr.bf16.gmra.mxu0 %v2586
    %v2907 = vpop.f32.mrf.mxu0
    %v2908 = vadd.f32 %v2615, %v2907
    %v2909 = vpop.f32.mrf.mxu0
    %v2910 = vpop.f32.mrf.mxu0
    %v2911 = vadd.f32 %v2615, %v2910
    %v2912 = vpop.f32.mrf.mxu0
    %2913 = vmatprep.mubr.bf16.mxu0 0
    %2914 = vmatmul.mubr.bf16.gmra.mxu0 %v2587
    %v2915 = vpop.f32.mrf.mxu0
    %v2916 = vadd.f32 %v2615, %v2915
    %v2917 = vpop.f32.mrf.mxu0
    %v2918 = vpop.f32.mrf.mxu0
    %v2919 = vadd.f32 %v2615, %v2918
    %v2920 = vpop.f32.mrf.mxu0
    %2921 = vmatprep.mubr.bf16.mxu0 0
    %2922 = vmatmul.mubr.bf16.gmra.mxu0 %v2588
    %v2923 = vpop.f32.mrf.mxu0
    %v2924 = vadd.f32 %v2615, %v2923
    %v2925 = vpop.f32.mrf.mxu0
    %v2926 = vpop.f32.mrf.mxu0
    %v2927 = vadd.f32 %v2615, %v2926
    %v2928 = vpop.f32.mrf.mxu0
    %2929 = vmatprep.mubr.bf16.mxu0 0
    %2930 = vmatmul.mubr.bf16.gmra.mxu0 %v2589
    %v2931 = vpop.f32.mrf.mxu0
    %v2932 = vadd.f32 %v2615, %v2931
    %v2933 = vpop.f32.mrf.mxu0
    %v2934 = vpop.f32.mrf.mxu0
    %v2935 = vadd.f32 %v2615, %v2934
    %v2936 = vpop.f32.mrf.mxu0
    %2937 = vmatprep.mubr.bf16.mxu0 0
    %2938 = vmatmul.mubr.bf16.gmra.mxu0 %v2590
    %v2939 = vpop.f32.mrf.mxu0
    %v2940 = vadd.f32 %v2615, %v2939
    %v2941 = vpop.f32.mrf.mxu0
    %v2942 = vpop.f32.mrf.mxu0
    %v2943 = vadd.f32 %v2615, %v2942
    %v2944 = vpop.f32.mrf.mxu0
    %2945 = vmatprep.mubr.bf16.mxu0 0
    %2946 = vmatmul.mubr.bf16.gmra.mxu0 %v2591
    %v2947 = vpop.f32.mrf.mxu0
    %v2948 = vadd.f32 %v2615, %v2947
    %v2949 = vpop.f32.mrf.mxu0
    %v2950 = vpop.f32.mrf.mxu0
    %v2951 = vadd.f32 %v2615, %v2950
    %v2952 = vpop.f32.mrf.mxu0
    %2953 = vdwg.mxu0
    %v2954 = vmax.f32 %v2700, 0.0
    %v2955 = vmax.f32 %v2703, 0.0
    %v2956 = vmax.f32 %v2708, 0.0
    %v2957 = vmax.f32 %v2711, 0.0
    %v2958 = vmax.f32 %v2716, 0.0
    %v2959 = vmax.f32 %v2719, 0.0
    %v2960 = vmax.f32 %v2724, 0.0
    %v2961 = vmax.f32 %v2727, 0.0
    %v2962 = vmax.f32 %v2732, 0.0
    %v2963 = vmax.f32 %v2735, 0.0
    %v2964 = vmax.f32 %v2740, 0.0
    %v2965 = vmax.f32 %v2743, 0.0
    %v2966 = vmax.f32 %v2748, 0.0
    %v2967 = vmax.f32 %v2751, 0.0
    %v2968 = vmax.f32 %v2756, 0.0
    %v2969 = vmax.f32 %v2759, 0.0
    %v2970 = vmax.f32 %v2764, 0.0
    %v2971 = vmax.f32 %v2767, 0.0
    %v2972 = vmax.f32 %v2772, 0.0
    %v2973 = vmax.f32 %v2775, 0.0
    %v2974 = vmax.f32 %v2780, 0.0
    %v2975 = vmax.f32 %v2783, 0.0
    %v2976 = vmax.f32 %v2788, 0.0
    %v2977 = vmax.f32 %v2791, 0.0
    %v2978 = vmax.f32 %v2796, 0.0
    %v2979 = vmax.f32 %v2799, 0.0
    %v2980 = vmax.f32 %v2804, 0.0
    %v2981 = vmax.f32 %v2807, 0.0
    %v2982 = vmax.f32 %v2812, 0.0
    %v2983 = vmax.f32 %v2815, 0.0
    %v2984 = vmax.f32 %v2820, 0.0
    %v2985 = vmax.f32 %v2823, 0.0
    %v2986 = vmax.f32 %v2828, 0.0
    %v2987 = vmax.f32 %v2831, 0.0
    %v2988 = vmax.f32 %v2836, 0.0
    %v2989 = vmax.f32 %v2839, 0.0
    %v2990 = vmax.f32 %v2844, 0.0
    %v2991 = vmax.f32 %v2847, 0.0
    %v2992 = vmax.f32 %v2852, 0.0
    %v2993 = vmax.f32 %v2855, 0.0
    %v2994 = vmax.f32 %v2860, 0.0
    %v2995 = vmax.f32 %v2863, 0.0
    %v2996 = vmax.f32 %v2868, 0.0
    %v2997 = vmax.f32 %v2871, 0.0
    %v2998 = vmax.f32 %v2876, 0.0
    %v2999 = vmax.f32 %v2879, 0.0
    %v3000 = vmax.f32 %v2884, 0.0
    %v3001 = vmax.f32 %v2887, 0.0
    %v3002 = vmax.f32 %v2892, 0.0
    %v3003 = vmax.f32 %v2895, 0.0
    %v3004 = vmax.f32 %v2900, 0.0
    %v3005 = vmax.f32 %v2903, 0.0
    %v3006 = vmax.f32 %v2908, 0.0
    %v3007 = vmax.f32 %v2911, 0.0
    %v3008 = vmax.f32 %v2916, 0.0
    %v3009 = vmax.f32 %v2919, 0.0
    %v3010 = vmax.f32 %v2924, 0.0
    %v3011 = vmax.f32 %v2927, 0.0
    %v3012 = vmax.f32 %v2932, 0.0
    %v3013 = vmax.f32 %v2935, 0.0
    %v3014 = vmax.f32 %v2940, 0.0
    %v3015 = vmax.f32 %v2943, 0.0
    %v3016 = vmax.f32 %v2948, 0.0
    %v3017 = vmax.f32 %v2951, 0.0
    %v3018 = vld [vmem:[%s6] sm:$0x1]
    %v3020 = vlaneseq
    %v3021 = vshrl.u32 %v3020, 7
    %v3022 = vsub.s32 0, %v3021
    %v3023 = vrot.slane %v3018, %v3022
    %v3025 = vmul.f32 %v2954, %v3023
    %v3026 = vmul.f32 %v2955, %v3023
    %v3027 = vmul.f32 %v2956, %v3023
    %v3028 = vmul.f32 %v2957, %v3023
    %v3029 = vmul.f32 %v2958, %v3023
    %v3030 = vmul.f32 %v2959, %v3023
    %v3031 = vmul.f32 %v2960, %v3023
    %v3032 = vmul.f32 %v2961, %v3023
    %v3033 = vmul.f32 %v2962, %v3023
    %v3034 = vmul.f32 %v2963, %v3023
    %v3035 = vmul.f32 %v2964, %v3023
    %v3036 = vmul.f32 %v2965, %v3023
    %v3037 = vmul.f32 %v2966, %v3023
    %v3038 = vmul.f32 %v2967, %v3023
    %v3039 = vmul.f32 %v2968, %v3023
    %v3040 = vmul.f32 %v2969, %v3023
    %v3041 = vmul.f32 %v2970, %v3023
    %v3042 = vmul.f32 %v2971, %v3023
    %v3043 = vmul.f32 %v2972, %v3023
    %v3044 = vmul.f32 %v2973, %v3023
    %v3045 = vmul.f32 %v2974, %v3023
    %v3046 = vmul.f32 %v2975, %v3023
    %v3047 = vmul.f32 %v2976, %v3023
    %v3048 = vmul.f32 %v2977, %v3023
    %v3049 = vmul.f32 %v2978, %v3023
    %v3050 = vmul.f32 %v2979, %v3023
    %v3051 = vmul.f32 %v2980, %v3023
    %v3052 = vmul.f32 %v2981, %v3023
    %v3053 = vmul.f32 %v2982, %v3023
    %v3054 = vmul.f32 %v2983, %v3023
    %v3055 = vmul.f32 %v2984, %v3023
    %v3056 = vmul.f32 %v2985, %v3023
    %v3057 = vmul.f32 %v2986, %v3023
    %v3058 = vmul.f32 %v2987, %v3023
    %v3059 = vmul.f32 %v2988, %v3023
    %v3060 = vmul.f32 %v2989, %v3023
    %v3061 = vmul.f32 %v2990, %v3023
    %v3062 = vmul.f32 %v2991, %v3023
    %v3063 = vmul.f32 %v2992, %v3023
    %v3064 = vmul.f32 %v2993, %v3023
    %v3065 = vmul.f32 %v2994, %v3023
    %v3066 = vmul.f32 %v2995, %v3023
    %v3067 = vmul.f32 %v2996, %v3023
    %v3068 = vmul.f32 %v2997, %v3023
    %v3069 = vmul.f32 %v2998, %v3023
    %v3070 = vmul.f32 %v2999, %v3023
    %v3071 = vmul.f32 %v3000, %v3023
    %v3072 = vmul.f32 %v3001, %v3023
    %v3073 = vmul.f32 %v3002, %v3023
    %v3074 = vmul.f32 %v3003, %v3023
    %v3075 = vmul.f32 %v3004, %v3023
    %v3076 = vmul.f32 %v3005, %v3023
    %v3077 = vmul.f32 %v3006, %v3023
    %v3078 = vmul.f32 %v3007, %v3023
    %v3079 = vmul.f32 %v3008, %v3023
    %v3080 = vmul.f32 %v3009, %v3023
    %v3081 = vmul.f32 %v3010, %v3023
    %v3082 = vmul.f32 %v3011, %v3023
    %v3083 = vmul.f32 %v3012, %v3023
    %v3084 = vmul.f32 %v3013, %v3023
    %v3085 = vmul.f32 %v3014, %v3023
    %v3086 = vmul.f32 %v3015, %v3023
    %v3087 = vmul.f32 %v3016, %v3023
    %v3088 = vmul.f32 %v3017, %v3023
    %3089 = vadd.xlane.f32.xlu0 %v3025
    %v3090 = vpop.xlane.xlu0 %3089
    %3091 = vadd.xlane.f32.xlu0 %v3026
    %v3092 = vpop.xlane.xlu0 %3091
    %3093 = vadd.xlane.f32.xlu0 %v3027
    %v3094 = vpop.xlane.xlu0 %3093
    %3095 = vadd.xlane.f32.xlu0 %v3028
    %v3096 = vpop.xlane.xlu0 %3095
    %3097 = vadd.xlane.f32.xlu0 %v3029
    %v3098 = vpop.xlane.xlu0 %3097
    %3099 = vadd.xlane.f32.xlu0 %v3030
    %v3100 = vpop.xlane.xlu0 %3099
    %3101 = vadd.xlane.f32.xlu0 %v3031
    %v3102 = vpop.xlane.xlu0 %3101
    %3103 = vadd.xlane.f32.xlu0 %v3032
    %v3104 = vpop.xlane.xlu0 %3103
    %3105 = vadd.xlane.f32.xlu0 %v3033
    %v3106 = vpop.xlane.xlu0 %3105
    %3107 = vadd.xlane.f32.xlu0 %v3034
    %v3108 = vpop.xlane.xlu0 %3107
    %3109 = vadd.xlane.f32.xlu0 %v3035
    %v3110 = vpop.xlane.xlu0 %3109
    %3111 = vadd.xlane.f32.xlu0 %v3036
    %v3112 = vpop.xlane.xlu0 %3111
    %3113 = vadd.xlane.f32.xlu0 %v3037
    %v3114 = vpop.xlane.xlu0 %3113
    %3115 = vadd.xlane.f32.xlu0 %v3038
    %v3116 = vpop.xlane.xlu0 %3115
    %3117 = vadd.xlane.f32.xlu0 %v3039
    %v3118 = vpop.xlane.xlu0 %3117
    %3119 = vadd.xlane.f32.xlu0 %v3040
    %v3120 = vpop.xlane.xlu0 %3119
    %3121 = vadd.xlane.f32.xlu0 %v3041
    %v3122 = vpop.xlane.xlu0 %3121
    %3123 = vadd.xlane.f32.xlu0 %v3042
    %v3124 = vpop.xlane.xlu0 %3123
    %3125 = vadd.xlane.f32.xlu0 %v3043
    %v3126 = vpop.xlane.xlu0 %3125
    %3127 = vadd.xlane.f32.xlu0 %v3044
    %v3128 = vpop.xlane.xlu0 %3127
    %3129 = vadd.xlane.f32.xlu0 %v3045
    %v3130 = vpop.xlane.xlu0 %3129
    %3131 = vadd.xlane.f32.xlu0 %v3046
    %v3132 = vpop.xlane.xlu0 %3131
    %3133 = vadd.xlane.f32.xlu0 %v3047
    %v3134 = vpop.xlane.xlu0 %3133
    %3135 = vadd.xlane.f32.xlu0 %v3048
    %v3136 = vpop.xlane.xlu0 %3135
    %3137 = vadd.xlane.f32.xlu0 %v3049
    %v3138 = vpop.xlane.xlu0 %3137
    %3139 = vadd.xlane.f32.xlu0 %v3050
    %v3140 = vpop.xlane.xlu0 %3139
    %3141 = vadd.xlane.f32.xlu0 %v3051
    %v3142 = vpop.xlane.xlu0 %3141
    %3143 = vadd.xlane.f32.xlu0 %v3052
    %v3144 = vpop.xlane.xlu0 %3143
    %3145 = vadd.xlane.f32.xlu0 %v3053
    %v3146 = vpop.xlane.xlu0 %3145
    %3147 = vadd.xlane.f32.xlu0 %v3054
    %v3148 = vpop.xlane.xlu0 %3147
    %3149 = vadd.xlane.f32.xlu0 %v3055
    %v3150 = vpop.xlane.xlu0 %3149
    %3151 = vadd.xlane.f32.xlu0 %v3056
    %v3152 = vpop.xlane.xlu0 %3151
    %3153 = vadd.xlane.f32.xlu0 %v3057
    %v3154 = vpop.xlane.xlu0 %3153
    %3155 = vadd.xlane.f32.xlu0 %v3058
    %v3156 = vpop.xlane.xlu0 %3155
    %3157 = vadd.xlane.f32.xlu0 %v3059
    %v3158 = vpop.xlane.xlu0 %3157
    %3159 = vadd.xlane.f32.xlu0 %v3060
    %v3160 = vpop.xlane.xlu0 %3159
    %3161 = vadd.xlane.f32.xlu0 %v3061
    %v3162 = vpop.xlane.xlu0 %3161
    %3163 = vadd.xlane.f32.xlu0 %v3062
    %v3164 = vpop.xlane.xlu0 %3163
    %3165 = vadd.xlane.f32.xlu0 %v3063
    %v3166 = vpop.xlane.xlu0 %3165
    %3167 = vadd.xlane.f32.xlu0 %v3064
    %v3168 = vpop.xlane.xlu0 %3167
    %3169 = vadd.xlane.f32.xlu0 %v3065
    %v3170 = vpop.xlane.xlu0 %3169
    %3171 = vadd.xlane.f32.xlu0 %v3066
    %v3172 = vpop.xlane.xlu0 %3171
    %3173 = vadd.xlane.f32.xlu0 %v3067
    %v3174 = vpop.xlane.xlu0 %3173
    %3175 = vadd.xlane.f32.xlu0 %v3068
    %v3176 = vpop.xlane.xlu0 %3175
    %3177 = vadd.xlane.f32.xlu0 %v3069
    %v3178 = vpop.xlane.xlu0 %3177
    %3179 = vadd.xlane.f32.xlu0 %v3070
    %v3180 = vpop.xlane.xlu0 %3179
    %3181 = vadd.xlane.f32.xlu0 %v3071
    %v3182 = vpop.xlane.xlu0 %3181
    %3183 = vadd.xlane.f32.xlu0 %v3072
    %v3184 = vpop.xlane.xlu0 %3183
    %3185 = vadd.xlane.f32.xlu0 %v3073
    %v3186 = vpop.xlane.xlu0 %3185
    %3187 = vadd.xlane.f32.xlu0 %v3074
    %v3188 = vpop.xlane.xlu0 %3187
    %3189 = vadd.xlane.f32.xlu0 %v3075
    %v3190 = vpop.xlane.xlu0 %3189
    %3191 = vadd.xlane.f32.xlu0 %v3076
    %v3192 = vpop.xlane.xlu0 %3191
    %3193 = vadd.xlane.f32.xlu0 %v3077
    %v3194 = vpop.xlane.xlu0 %3193
    %3195 = vadd.xlane.f32.xlu0 %v3078
    %v3196 = vpop.xlane.xlu0 %3195
    %3197 = vadd.xlane.f32.xlu0 %v3079
    %v3198 = vpop.xlane.xlu0 %3197
    %3199 = vadd.xlane.f32.xlu0 %v3080
    %v3200 = vpop.xlane.xlu0 %3199
    %3201 = vadd.xlane.f32.xlu0 %v3081
    %v3202 = vpop.xlane.xlu0 %3201
    %3203 = vadd.xlane.f32.xlu0 %v3082
    %v3204 = vpop.xlane.xlu0 %3203
    %3205 = vadd.xlane.f32.xlu0 %v3083
    %v3206 = vpop.xlane.xlu0 %3205
    %3207 = vadd.xlane.f32.xlu0 %v3084
    %v3208 = vpop.xlane.xlu0 %3207
    %3209 = vadd.xlane.f32.xlu0 %v3085
    %v3210 = vpop.xlane.xlu0 %3209
    %3211 = vadd.xlane.f32.xlu0 %v3086
    %v3212 = vpop.xlane.xlu0 %3211
    %3213 = vadd.xlane.f32.xlu0 %v3087
    %v3214 = vpop.xlane.xlu0 %3213
    %3215 = vadd.xlane.f32.xlu0 %v3088
    %v3216 = vpop.xlane.xlu0 %3215
    %v3217 = vld [vmem:[#allocation2] sm:$0x1]
    %v3219 = vlaneseq
    %v3220 = vshrl.u32 %v3219, 7
    %v3221 = vsub.s32 0, %v3220
    %v3222 = vrot.slane %v3217, %v3221
    %v3224 = vadd.f32 %v3090, %v3222
    %v3225 = vadd.f32 %v3092, %v3222
    %v3226 = vadd.f32 %v3094, %v3222
    %v3227 = vadd.f32 %v3096, %v3222
    %v3228 = vadd.f32 %v3098, %v3222
    %v3229 = vadd.f32 %v3100, %v3222
    %v3230 = vadd.f32 %v3102, %v3222
    %v3231 = vadd.f32 %v3104, %v3222
    %v3232 = vadd.f32 %v3106, %v3222
    %v3233 = vadd.f32 %v3108, %v3222
    %v3234 = vadd.f32 %v3110, %v3222
    %v3235 = vadd.f32 %v3112, %v3222
    %v3236 = vadd.f32 %v3114, %v3222
    %v3237 = vadd.f32 %v3116, %v3222
    %v3238 = vadd.f32 %v3118, %v3222
    %v3239 = vadd.f32 %v3120, %v3222
    %v3240 = vadd.f32 %v3122, %v3222
    %v3241 = vadd.f32 %v3124, %v3222
    %v3242 = vadd.f32 %v3126, %v3222
    %v3243 = vadd.f32 %v3128, %v3222
    %v3244 = vadd.f32 %v3130, %v3222
    %v3245 = vadd.f32 %v3132, %v3222
    %v3246 = vadd.f32 %v3134, %v3222
    %v3247 = vadd.f32 %v3136, %v3222
    %v3248 = vadd.f32 %v3138, %v3222
    %v3249 = vadd.f32 %v3140, %v3222
    %v3250 = vadd.f32 %v3142, %v3222
    %v3251 = vadd.f32 %v3144, %v3222
    %v3252 = vadd.f32 %v3146, %v3222
    %v3253 = vadd.f32 %v3148, %v3222
    %v3254 = vadd.f32 %v3150, %v3222
    %v3255 = vadd.f32 %v3152, %v3222
    %v3256 = vadd.f32 %v3154, %v3222
    %v3257 = vadd.f32 %v3156, %v3222
    %v3258 = vadd.f32 %v3158, %v3222
    %v3259 = vadd.f32 %v3160, %v3222
    %v3260 = vadd.f32 %v3162, %v3222
    %v3261 = vadd.f32 %v3164, %v3222
    %v3262 = vadd.f32 %v3166, %v3222
    %v3263 = vadd.f32 %v3168, %v3222
    %v3264 = vadd.f32 %v3170, %v3222
    %v3265 = vadd.f32 %v3172, %v3222
    %v3266 = vadd.f32 %v3174, %v3222
    %v3267 = vadd.f32 %v3176, %v3222
    %v3268 = vadd.f32 %v3178, %v3222
    %v3269 = vadd.f32 %v3180, %v3222
    %v3270 = vadd.f32 %v3182, %v3222
    %v3271 = vadd.f32 %v3184, %v3222
    %v3272 = vadd.f32 %v3186, %v3222
    %v3273 = vadd.f32 %v3188, %v3222
    %v3274 = vadd.f32 %v3190, %v3222
    %v3275 = vadd.f32 %v3192, %v3222
    %v3276 = vadd.f32 %v3194, %v3222
    %v3277 = vadd.f32 %v3196, %v3222
    %v3278 = vadd.f32 %v3198, %v3222
    %v3279 = vadd.f32 %v3200, %v3222
    %v3280 = vadd.f32 %v3202, %v3222
    %v3281 = vadd.f32 %v3204, %v3222
    %v3282 = vadd.f32 %v3206, %v3222
    %v3283 = vadd.f32 %v3208, %v3222
    %v3284 = vadd.f32 %v3210, %v3222
    %v3285 = vadd.f32 %v3212, %v3222
    %v3286 = vadd.f32 %v3214, %v3222
    %v3287 = vadd.f32 %v3216, %v3222
    %v3288 = vand.u32 2147483647, %v3224
    %v3289 = vand.u32 2147483647, %v3225
    %v3290 = vand.u32 2147483647, %v3226
    %v3291 = vand.u32 2147483647, %v3227
    %v3292 = vand.u32 2147483647, %v3228
    %v3293 = vand.u32 2147483647, %v3229
    %v3294 = vand.u32 2147483647, %v3230
    %v3295 = vand.u32 2147483647, %v3231
    %v3296 = vand.u32 2147483647, %v3232
    %v3297 = vand.u32 2147483647, %v3233
    %v3298 = vand.u32 2147483647, %v3234
    %v3299 = vand.u32 2147483647, %v3235
    %v3300 = vand.u32 2147483647, %v3236
    %v3301 = vand.u32 2147483647, %v3237
    %v3302 = vand.u32 2147483647, %v3238
    %v3303 = vand.u32 2147483647, %v3239
    %v3304 = vand.u32 2147483647, %v3240
    %v3305 = vand.u32 2147483647, %v3241
    %v3306 = vand.u32 2147483647, %v3242
    %v3307 = vand.u32 2147483647, %v3243
    %v3308 = vand.u32 2147483647, %v3244
    %v3309 = vand.u32 2147483647, %v3245
    %v3310 = vand.u32 2147483647, %v3246
    %v3311 = vand.u32 2147483647, %v3247
    %v3312 = vand.u32 2147483647, %v3248
    %v3313 = vand.u32 2147483647, %v3249
    %v3314 = vand.u32 2147483647, %v3250
    %v3315 = vand.u32 2147483647, %v3251
    %v3316 = vand.u32 2147483647, %v3252
    %v3317 = vand.u32 2147483647, %v3253
    %v3318 = vand.u32 2147483647, %v3254
    %v3319 = vand.u32 2147483647, %v3255
    %v3320 = vand.u32 2147483647, %v3256
    %v3321 = vand.u32 2147483647, %v3257
    %v3322 = vand.u32 2147483647, %v3258
    %v3323 = vand.u32 2147483647, %v3259
    %v3324 = vand.u32 2147483647, %v3260
    %v3325 = vand.u32 2147483647, %v3261
    %v3326 = vand.u32 2147483647, %v3262
    %v3327 = vand.u32 2147483647, %v3263
    %v3328 = vand.u32 2147483647, %v3264
    %v3329 = vand.u32 2147483647, %v3265
    %v3330 = vand.u32 2147483647, %v3266
    %v3331 = vand.u32 2147483647, %v3267
    %v3332 = vand.u32 2147483647, %v3268
    %v3333 = vand.u32 2147483647, %v3269
    %v3334 = vand.u32 2147483647, %v3270
    %v3335 = vand.u32 2147483647, %v3271
    %v3336 = vand.u32 2147483647, %v3272
    %v3337 = vand.u32 2147483647, %v3273
    %v3338 = vand.u32 2147483647, %v3274
    %v3339 = vand.u32 2147483647, %v3275
    %v3340 = vand.u32 2147483647, %v3276
    %v3341 = vand.u32 2147483647, %v3277
    %v3342 = vand.u32 2147483647, %v3278
    %v3343 = vand.u32 2147483647, %v3279
    %v3344 = vand.u32 2147483647, %v3280
    %v3345 = vand.u32 2147483647, %v3281
    %v3346 = vand.u32 2147483647, %v3282
    %v3347 = vand.u32 2147483647, %v3283
    %v3348 = vand.u32 2147483647, %v3284
    %v3349 = vand.u32 2147483647, %v3285
    %v3350 = vand.u32 2147483647, %v3286
    %v3351 = vand.u32 2147483647, %v3287
    %v3352 = vld [vmem:[%s0] sm:$0xf]
    %v3353 = vadd.f32 %v3288, 0.001
    %v3354 = vadd.f32 %v3289, 0.001
    %v3355 = vadd.f32 %v3290, 0.001
    %v3356 = vadd.f32 %v3291, 0.001
    %v3357 = vadd.f32 %v3292, 0.001
    %v3358 = vadd.f32 %v3293, 0.001
    %v3359 = vadd.f32 %v3294, 0.001
    %v3360 = vadd.f32 %v3295, 0.001
    %v3361 = vadd.f32 %v3296, 0.001
    %v3362 = vadd.f32 %v3297, 0.001
    %v3363 = vadd.f32 %v3298, 0.001
    %v3364 = vadd.f32 %v3299, 0.001
    %v3365 = vadd.f32 %v3300, 0.001
    %v3366 = vadd.f32 %v3301, 0.001
    %v3367 = vadd.f32 %v3302, 0.001
    %v3368 = vadd.f32 %v3303, 0.001
    %v3369 = vadd.f32 %v3304, 0.001
    %v3370 = vadd.f32 %v3305, 0.001
    %v3371 = vadd.f32 %v3306, 0.001
    %v3372 = vadd.f32 %v3307, 0.001
    %v3373 = vadd.f32 %v3308, 0.001
    %v3374 = vadd.f32 %v3309, 0.001
    %v3375 = vadd.f32 %v3310, 0.001
    %v3376 = vadd.f32 %v3311, 0.001
    %v3377 = vadd.f32 %v3312, 0.001
    %v3378 = vadd.f32 %v3313, 0.001
    %v3379 = vadd.f32 %v3314, 0.001
    %v3380 = vadd.f32 %v3315, 0.001
    %v3381 = vadd.f32 %v3316, 0.001
    %v3382 = vadd.f32 %v3317, 0.001
    %v3383 = vadd.f32 %v3318, 0.001
    %v3384 = vadd.f32 %v3319, 0.001
    %v3385 = vadd.f32 %v3320, 0.001
    %v3386 = vadd.f32 %v3321, 0.001
    %v3387 = vadd.f32 %v3322, 0.001
    %v3388 = vadd.f32 %v3323, 0.001
    %v3389 = vadd.f32 %v3324, 0.001
    %v3390 = vadd.f32 %v3325, 0.001
    %v3391 = vadd.f32 %v3326, 0.001
    %v3392 = vadd.f32 %v3327, 0.001
    %v3393 = vadd.f32 %v3328, 0.001
    %v3394 = vadd.f32 %v3329, 0.001
    %v3395 = vadd.f32 %v3330, 0.001
    %v3396 = vadd.f32 %v3331, 0.001
    %v3397 = vadd.f32 %v3332, 0.001
    %v3398 = vadd.f32 %v3333, 0.001
    %v3399 = vadd.f32 %v3334, 0.001
    %v3400 = vadd.f32 %v3335, 0.001
    %v3401 = vadd.f32 %v3336, 0.001
    %v3402 = vadd.f32 %v3337, 0.001
    %v3403 = vadd.f32 %v3338, 0.001
    %v3404 = vadd.f32 %v3339, 0.001
    %v3405 = vadd.f32 %v3340, 0.001
    %v3406 = vadd.f32 %v3341, 0.001
    %v3407 = vadd.f32 %v3342, 0.001
    %v3408 = vadd.f32 %v3343, 0.001
    %v3409 = vadd.f32 %v3344, 0.001
    %v3410 = vadd.f32 %v3345, 0.001
    %v3411 = vadd.f32 %v3346, 0.001
    %v3412 = vadd.f32 %v3347, 0.001
    %v3413 = vadd.f32 %v3348, 0.001
    %v3414 = vadd.f32 %v3349, 0.001
    %v3415 = vadd.f32 %v3350, 0.001
    %v3416 = vadd.f32 %v3351, 0.001
    %v3417 = vrcp.pop %v3353
    %v3418 = vrcp.pop %v3354
    %v3419 = vrcp.pop %v3355
    %v3420 = vrcp.pop %v3356
    %v3421 = vrcp.pop %v3357
    %v3422 = vrcp.pop %v3358
    %v3423 = vrcp.pop %v3359
    %v3424 = vrcp.pop %v3360
    %v3425 = vrcp.pop %v3361
    %v3426 = vrcp.pop %v3362
    %v3427 = vrcp.pop %v3363
    %v3428 = vrcp.pop %v3364
    %v3429 = vrcp.pop %v3365
    %v3430 = vrcp.pop %v3366
    %v3431 = vrcp.pop %v3367
    %v3432 = vrcp.pop %v3368
    %v3433 = vrcp.pop %v3369
    %v3434 = vrcp.pop %v3370
    %v3435 = vrcp.pop %v3371
    %v3436 = vrcp.pop %v3372
    %v3437 = vrcp.pop %v3373
    %v3438 = vrcp.pop %v3374
    %v3439 = vrcp.pop %v3375
    %v3440 = vrcp.pop %v3376
    %v3441 = vrcp.pop %v3377
    %v3442 = vrcp.pop %v3378
    %v3443 = vrcp.pop %v3379
    %v3444 = vrcp.pop %v3380
    %v3445 = vrcp.pop %v3381
    %v3446 = vrcp.pop %v3382
    %v3447 = vrcp.pop %v3383
    %v3448 = vrcp.pop %v3384
    %v3449 = vrcp.pop %v3385
    %v3450 = vrcp.pop %v3386
    %v3451 = vrcp.pop %v3387
    %v3452 = vrcp.pop %v3388
    %v3453 = vrcp.pop %v3389
    %v3454 = vrcp.pop %v3390
    %v3455 = vrcp.pop %v3391
    %v3456 = vrcp.pop %v3392
    %v3457 = vrcp.pop %v3393
    %v3458 = vrcp.pop %v3394
    %v3459 = vrcp.pop %v3395
    %v3460 = vrcp.pop %v3396
    %v3461 = vrcp.pop %v3397
    %v3462 = vrcp.pop %v3398
    %v3463 = vrcp.pop %v3399
    %v3464 = vrcp.pop %v3400
    %v3465 = vrcp.pop %v3401
    %v3466 = vrcp.pop %v3402
    %v3467 = vrcp.pop %v3403
    %v3468 = vrcp.pop %v3404
    %v3469 = vrcp.pop %v3405
    %v3470 = vrcp.pop %v3406
    %v3471 = vrcp.pop %v3407
    %v3472 = vrcp.pop %v3408
    %v3473 = vrcp.pop %v3409
    %v3474 = vrcp.pop %v3410
    %v3475 = vrcp.pop %v3411
    %v3476 = vrcp.pop %v3412
    %v3477 = vrcp.pop %v3413
    %v3478 = vrcp.pop %v3414
    %v3479 = vrcp.pop %v3415
    %v3480 = vrcp.pop %v3416
    %3545 = vset.pattern.permute.xlu0 0
    %3546 = vperm.xlu0 %3545, %v3417
    %v3547 = vpop.permute.xlu0 %3546
    %3548 = vset.pattern.permute.xlu0 0
    %3549 = vperm.xlu0 %3548, %v3418
    %v3550 = vpop.permute.xlu0 %3549
    %3551 = vset.pattern.permute.xlu0 0
    %3552 = vperm.xlu0 %3551, %v3419
    %v3553 = vpop.permute.xlu0 %3552
    %3554 = vset.pattern.permute.xlu0 0
    %3555 = vperm.xlu0 %3554, %v3420
    %v3556 = vpop.permute.xlu0 %3555
    %3557 = vset.pattern.permute.xlu0 0
    %3558 = vperm.xlu0 %3557, %v3421
    %v3559 = vpop.permute.xlu0 %3558
    %3560 = vset.pattern.permute.xlu0 0
    %3561 = vperm.xlu0 %3560, %v3422
    %v3562 = vpop.permute.xlu0 %3561
    %3563 = vset.pattern.permute.xlu0 0
    %3564 = vperm.xlu0 %3563, %v3423
    %v3565 = vpop.permute.xlu0 %3564
    %3566 = vset.pattern.permute.xlu0 0
    %3567 = vperm.xlu0 %3566, %v3424
    %v3568 = vpop.permute.xlu0 %3567
    %3569 = vset.pattern.permute.xlu0 0
    %3570 = vperm.xlu0 %3569, %v3425
    %v3571 = vpop.permute.xlu0 %3570
    %3572 = vset.pattern.permute.xlu0 0
    %3573 = vperm.xlu0 %3572, %v3426
    %v3574 = vpop.permute.xlu0 %3573
    %3575 = vset.pattern.permute.xlu0 0
    %3576 = vperm.xlu0 %3575, %v3427
    %v3577 = vpop.permute.xlu0 %3576
    %3578 = vset.pattern.permute.xlu0 0
    %3579 = vperm.xlu0 %3578, %v3428
    %v3580 = vpop.permute.xlu0 %3579
    %3581 = vset.pattern.permute.xlu0 0
    %3582 = vperm.xlu0 %3581, %v3429
    %v3583 = vpop.permute.xlu0 %3582
    %3584 = vset.pattern.permute.xlu0 0
    %3585 = vperm.xlu0 %3584, %v3430
    %v3586 = vpop.permute.xlu0 %3585
    %3587 = vset.pattern.permute.xlu0 0
    %3588 = vperm.xlu0 %3587, %v3431
    %v3589 = vpop.permute.xlu0 %3588
    %3590 = vset.pattern.permute.xlu0 0
    %3591 = vperm.xlu0 %3590, %v3432
    %v3592 = vpop.permute.xlu0 %3591
    %3593 = vset.pattern.permute.xlu0 0
    %3594 = vperm.xlu0 %3593, %v3433
    %v3595 = vpop.permute.xlu0 %3594
    %3596 = vset.pattern.permute.xlu0 0
    %3597 = vperm.xlu0 %3596, %v3434
    %v3598 = vpop.permute.xlu0 %3597
    %3599 = vset.pattern.permute.xlu0 0
    %3600 = vperm.xlu0 %3599, %v3435
    %v3601 = vpop.permute.xlu0 %3600
    %3602 = vset.pattern.permute.xlu0 0
    %3603 = vperm.xlu0 %3602, %v3436
    %v3604 = vpop.permute.xlu0 %3603
    %3605 = vset.pattern.permute.xlu0 0
    %3606 = vperm.xlu0 %3605, %v3437
    %v3607 = vpop.permute.xlu0 %3606
    %3608 = vset.pattern.permute.xlu0 0
    %3609 = vperm.xlu0 %3608, %v3438
    %v3610 = vpop.permute.xlu0 %3609
    %3611 = vset.pattern.permute.xlu0 0
    %3612 = vperm.xlu0 %3611, %v3439
    %v3613 = vpop.permute.xlu0 %3612
    %3614 = vset.pattern.permute.xlu0 0
    %3615 = vperm.xlu0 %3614, %v3440
    %v3616 = vpop.permute.xlu0 %3615
    %3617 = vset.pattern.permute.xlu0 0
    %3618 = vperm.xlu0 %3617, %v3441
    %v3619 = vpop.permute.xlu0 %3618
    %3620 = vset.pattern.permute.xlu0 0
    %3621 = vperm.xlu0 %3620, %v3442
    %v3622 = vpop.permute.xlu0 %3621
    %3623 = vset.pattern.permute.xlu0 0
    %3624 = vperm.xlu0 %3623, %v3443
    %v3625 = vpop.permute.xlu0 %3624
    %3626 = vset.pattern.permute.xlu0 0
    %3627 = vperm.xlu0 %3626, %v3444
    %v3628 = vpop.permute.xlu0 %3627
    %3629 = vset.pattern.permute.xlu0 0
    %3630 = vperm.xlu0 %3629, %v3445
    %v3631 = vpop.permute.xlu0 %3630
    %3632 = vset.pattern.permute.xlu0 0
    %3633 = vperm.xlu0 %3632, %v3446
    %v3634 = vpop.permute.xlu0 %3633
    %3635 = vset.pattern.permute.xlu0 0
    %3636 = vperm.xlu0 %3635, %v3447
    %v3637 = vpop.permute.xlu0 %3636
    %3638 = vset.pattern.permute.xlu0 0
    %3639 = vperm.xlu0 %3638, %v3448
    %v3640 = vpop.permute.xlu0 %3639
    %3641 = vset.pattern.permute.xlu0 0
    %3642 = vperm.xlu0 %3641, %v3449
    %v3643 = vpop.permute.xlu0 %3642
    %3644 = vset.pattern.permute.xlu0 0
    %3645 = vperm.xlu0 %3644, %v3450
    %v3646 = vpop.permute.xlu0 %3645
    %3647 = vset.pattern.permute.xlu0 0
    %3648 = vperm.xlu0 %3647, %v3451
    %v3649 = vpop.permute.xlu0 %3648
    %3650 = vset.pattern.permute.xlu0 0
    %3651 = vperm.xlu0 %3650, %v3452
    %v3652 = vpop.permute.xlu0 %3651
    %3653 = vset.pattern.permute.xlu0 0
    %3654 = vperm.xlu0 %3653, %v3453
    %v3655 = vpop.permute.xlu0 %3654
    %3656 = vset.pattern.permute.xlu0 0
    %3657 = vperm.xlu0 %3656, %v3454
    %v3658 = vpop.permute.xlu0 %3657
    %3659 = vset.pattern.permute.xlu0 0
    %3660 = vperm.xlu0 %3659, %v3455
    %v3661 = vpop.permute.xlu0 %3660
    %3662 = vset.pattern.permute.xlu0 0
    %3663 = vperm.xlu0 %3662, %v3456
    %v3664 = vpop.permute.xlu0 %3663
    %3665 = vset.pattern.permute.xlu0 0
    %3666 = vperm.xlu0 %3665, %v3457
    %v3667 = vpop.permute.xlu0 %3666
    %3668 = vset.pattern.permute.xlu0 0
    %3669 = vperm.xlu0 %3668, %v3458
    %v3670 = vpop.permute.xlu0 %3669
    %3671 = vset.pattern.permute.xlu0 0
    %3672 = vperm.xlu0 %3671, %v3459
    %v3673 = vpop.permute.xlu0 %3672
    %3674 = vset.pattern.permute.xlu0 0
    %3675 = vperm.xlu0 %3674, %v3460
    %v3676 = vpop.permute.xlu0 %3675
    %3677 = vset.pattern.permute.xlu0 0
    %3678 = vperm.xlu0 %3677, %v3461
    %v3679 = vpop.permute.xlu0 %3678
    %3680 = vset.pattern.permute.xlu0 0
    %3681 = vperm.xlu0 %3680, %v3462
    %v3682 = vpop.permute.xlu0 %3681
    %3683 = vset.pattern.permute.xlu0 0
    %3684 = vperm.xlu0 %3683, %v3463
    %v3685 = vpop.permute.xlu0 %3684
    %3686 = vset.pattern.permute.xlu0 0
    %3687 = vperm.xlu0 %3686, %v3464
    %v3688 = vpop.permute.xlu0 %3687
    %3689 = vset.pattern.permute.xlu0 0
    %3690 = vperm.xlu0 %3689, %v3465
    %v3691 = vpop.permute.xlu0 %3690
    %3692 = vset.pattern.permute.xlu0 0
    %3693 = vperm.xlu0 %3692, %v3466
    %v3694 = vpop.permute.xlu0 %3693
    %3695 = vset.pattern.permute.xlu0 0
    %3696 = vperm.xlu0 %3695, %v3467
    %v3697 = vpop.permute.xlu0 %3696
    %3698 = vset.pattern.permute.xlu0 0
    %3699 = vperm.xlu0 %3698, %v3468
    %v3700 = vpop.permute.xlu0 %3699
    %3701 = vset.pattern.permute.xlu0 0
    %3702 = vperm.xlu0 %3701, %v3469
    %v3703 = vpop.permute.xlu0 %3702
    %3704 = vset.pattern.permute.xlu0 0
    %3705 = vperm.xlu0 %3704, %v3470
    %v3706 = vpop.permute.xlu0 %3705
    %3707 = vset.pattern.permute.xlu0 0
    %3708 = vperm.xlu0 %3707, %v3471
    %v3709 = vpop.permute.xlu0 %3708
    %3710 = vset.pattern.permute.xlu0 0
    %3711 = vperm.xlu0 %3710, %v3472
    %v3712 = vpop.permute.xlu0 %3711
    %3713 = vset.pattern.permute.xlu0 0
    %3714 = vperm.xlu0 %3713, %v3473
    %v3715 = vpop.permute.xlu0 %3714
    %3716 = vset.pattern.permute.xlu0 0
    %3717 = vperm.xlu0 %3716, %v3474
    %v3718 = vpop.permute.xlu0 %3717
    %3719 = vset.pattern.permute.xlu0 0
    %3720 = vperm.xlu0 %3719, %v3475
    %v3721 = vpop.permute.xlu0 %3720
    %3722 = vset.pattern.permute.xlu0 0
    %3723 = vperm.xlu0 %3722, %v3476
    %v3724 = vpop.permute.xlu0 %3723
    %3725 = vset.pattern.permute.xlu0 0
    %3726 = vperm.xlu0 %3725, %v3477
    %v3727 = vpop.permute.xlu0 %3726
    %3728 = vset.pattern.permute.xlu0 0
    %3729 = vperm.xlu0 %3728, %v3478
    %v3730 = vpop.permute.xlu0 %3729
    %3731 = vset.pattern.permute.xlu0 0
    %3732 = vperm.xlu0 %3731, %v3479
    %v3733 = vpop.permute.xlu0 %3732
    %3734 = vset.pattern.permute.xlu0 0
    %3735 = vperm.xlu0 %3734, %v3480
    %v3736 = vpop.permute.xlu0 %3735
    %v3737 = vlaneseq
    %v3738 = vand.u32 %v3737, 127
    %v3739 = vlaneseq
    %v3740 = vshrl.u32 %v3739, 7
    %v3741 = vsub.s32 %v3738, %v3740
    %v3742 = vrot.slane %v3547, %v3741
    %v3743 = vadd.s32 %v3738, 4294967288
    %v3744 = vlaneseq
    %v3745 = vshrl.u32 %v3744, 7
    %v3746 = vsub.s32 %v3743, %v3745
    %v3747 = vrot.slane %v3550, %v3746
    %vm3748 = vcmask 130112
    %v3749 = vsel %vm3748, %v3747, %v3742
    %v3750 = vadd.s32 %v3738, 4294967280
    %v3751 = vlaneseq
    %v3752 = vshrl.u32 %v3751, 7
    %v3753 = vsub.s32 %v3750, %v3752
    %v3754 = vrot.slane %v3553, %v3753
    %vm3755 = vcmask 195712
    %v3756 = vsel %vm3755, %v3754, %v3749
    %v3757 = vadd.s32 %v3738, 4294967272
    %v3758 = vlaneseq
    %v3759 = vshrl.u32 %v3758, 7
    %v3760 = vsub.s32 %v3757, %v3759
    %v3761 = vrot.slane %v3556, %v3760
    %vm3762 = vcmask 261312
    %v3763 = vsel %vm3762, %v3761, %v3756
    %v3764 = vadd.s32 %v3738, 4294967264
    %v3765 = vlaneseq
    %v3766 = vshrl.u32 %v3765, 7
    %v3767 = vsub.s32 %v3764, %v3766
    %v3768 = vrot.slane %v3559, %v3767
    %vm3769 = vcmask 326912
    %v3770 = vsel %vm3769, %v3768, %v3763
    %v3771 = vadd.s32 %v3738, 4294967256
    %v3772 = vlaneseq
    %v3773 = vshrl.u32 %v3772, 7
    %v3774 = vsub.s32 %v3771, %v3773
    %v3775 = vrot.slane %v3562, %v3774
    %vm3776 = vcmask 392512
    %v3777 = vsel %vm3776, %v3775, %v3770
    %v3778 = vadd.s32 %v3738, 4294967248
    %v3779 = vlaneseq
    %v3780 = vshrl.u32 %v3779, 7
    %v3781 = vsub.s32 %v3778, %v3780
    %v3782 = vrot.slane %v3565, %v3781
    %vm3783 = vcmask 458112
    %v3784 = vsel %vm3783, %v3782, %v3777
    %v3785 = vadd.s32 %v3738, 4294967240
    %v3786 = vlaneseq
    %v3787 = vshrl.u32 %v3786, 7
    %v3788 = vsub.s32 %v3785, %v3787
    %v3789 = vrot.slane %v3568, %v3788
    %vm3790 = vcmask 523712
    %v3791 = vsel %vm3790, %v3789, %v3784
    %v3792 = vadd.s32 %v3738, 4294967232
    %v3793 = vlaneseq
    %v3794 = vshrl.u32 %v3793, 7
    %v3795 = vsub.s32 %v3792, %v3794
    %v3796 = vrot.slane %v3571, %v3795
    %vm3797 = vcmask 589312
    %v3798 = vsel %vm3797, %v3796, %v3791
    %v3799 = vadd.s32 %v3738, 4294967224
    %v3800 = vlaneseq
    %v3801 = vshrl.u32 %v3800, 7
    %v3802 = vsub.s32 %v3799, %v3801
    %v3803 = vrot.slane %v3574, %v3802
    %vm3804 = vcmask 654912
    %v3805 = vsel %vm3804, %v3803, %v3798
    %v3806 = vadd.s32 %v3738, 4294967216
    %v3807 = vlaneseq
    %v3808 = vshrl.u32 %v3807, 7
    %v3809 = vsub.s32 %v3806, %v3808
    %v3810 = vrot.slane %v3577, %v3809
    %vm3811 = vcmask 720512
    %v3812 = vsel %vm3811, %v3810, %v3805
    %v3813 = vadd.s32 %v3738, 4294967208
    %v3814 = vlaneseq
    %v3815 = vshrl.u32 %v3814, 7
    %v3816 = vsub.s32 %v3813, %v3815
    %v3817 = vrot.slane %v3580, %v3816
    %vm3818 = vcmask 786112
    %v3819 = vsel %vm3818, %v3817, %v3812
    %v3820 = vadd.s32 %v3738, 4294967200
    %v3821 = vlaneseq
    %v3822 = vshrl.u32 %v3821, 7
    %v3823 = vsub.s32 %v3820, %v3822
    %v3824 = vrot.slane %v3583, %v3823
    %vm3825 = vcmask 851712
    %v3826 = vsel %vm3825, %v3824, %v3819
    %v3827 = vadd.s32 %v3738, 4294967192
    %v3828 = vlaneseq
    %v3829 = vshrl.u32 %v3828, 7
    %v3830 = vsub.s32 %v3827, %v3829
    %v3831 = vrot.slane %v3586, %v3830
    %vm3832 = vcmask 917312
    %v3833 = vsel %vm3832, %v3831, %v3826
    %v3834 = vadd.s32 %v3738, 4294967184
    %v3835 = vlaneseq
    %v3836 = vshrl.u32 %v3835, 7
    %v3837 = vsub.s32 %v3834, %v3836
    %v3838 = vrot.slane %v3589, %v3837
    %vm3839 = vcmask 982912
    %v3840 = vsel %vm3839, %v3838, %v3833
    %v3841 = vadd.s32 %v3738, 4294967176
    %v3842 = vlaneseq
    %v3843 = vshrl.u32 %v3842, 7
    %v3844 = vsub.s32 %v3841, %v3843
    %v3845 = vrot.slane %v3592, %v3844
    %vm3846 = vcmask 1048512
    %v3847 = vsel %vm3846, %v3845, %v3840
    %v3848 = vlaneseq
    %v3849 = vshrl.u32 %v3848, 7
    %v3850 = vsub.s32 %v3738, %v3849
    %v3851 = vrot.slane %v3595, %v3850
    %v3852 = vlaneseq
    %v3853 = vshrl.u32 %v3852, 7
    %v3854 = vsub.s32 %v3743, %v3853
    %v3855 = vrot.slane %v3598, %v3854
    %v3856 = vsel %vm3748, %v3855, %v3851
    %v3857 = vlaneseq
    %v3858 = vshrl.u32 %v3857, 7
    %v3859 = vsub.s32 %v3750, %v3858
    %v3860 = vrot.slane %v3601, %v3859
    %v3861 = vsel %vm3755, %v3860, %v3856
    %v3862 = vlaneseq
    %v3863 = vshrl.u32 %v3862, 7
    %v3864 = vsub.s32 %v3757, %v3863
    %v3865 = vrot.slane %v3604, %v3864
    %v3866 = vsel %vm3762, %v3865, %v3861
    %v3867 = vlaneseq
    %v3868 = vshrl.u32 %v3867, 7
    %v3869 = vsub.s32 %v3764, %v3868
    %v3870 = vrot.slane %v3607, %v3869
    %v3871 = vsel %vm3769, %v3870, %v3866
    %v3872 = vlaneseq
    %v3873 = vshrl.u32 %v3872, 7
    %v3874 = vsub.s32 %v3771, %v3873
    %v3875 = vrot.slane %v3610, %v3874
    %v3876 = vsel %vm3776, %v3875, %v3871
    %v3877 = vlaneseq
    %v3878 = vshrl.u32 %v3877, 7
    %v3879 = vsub.s32 %v3778, %v3878
    %v3880 = vrot.slane %v3613, %v3879
    %v3881 = vsel %vm3783, %v3880, %v3876
    %v3882 = vlaneseq
    %v3883 = vshrl.u32 %v3882, 7
    %v3884 = vsub.s32 %v3785, %v3883
    %v3885 = vrot.slane %v3616, %v3884
    %v3886 = vsel %vm3790, %v3885, %v3881
    %v3887 = vlaneseq
    %v3888 = vshrl.u32 %v3887, 7
    %v3889 = vsub.s32 %v3792, %v3888
    %v3890 = vrot.slane %v3619, %v3889
    %v3891 = vsel %vm3797, %v3890, %v3886
    %v3892 = vlaneseq
    %v3893 = vshrl.u32 %v3892, 7
    %v3894 = vsub.s32 %v3799, %v3893
    %v3895 = vrot.slane %v3622, %v3894
    %v3896 = vsel %vm3804, %v3895, %v3891
    %v3897 = vlaneseq
    %v3898 = vshrl.u32 %v3897, 7
    %v3899 = vsub.s32 %v3806, %v3898
    %v3900 = vrot.slane %v3625, %v3899
    %v3901 = vsel %vm3811, %v3900, %v3896
    %v3902 = vlaneseq
    %v3903 = vshrl.u32 %v3902, 7
    %v3904 = vsub.s32 %v3813, %v3903
    %v3905 = vrot.slane %v3628, %v3904
    %v3906 = vsel %vm3818, %v3905, %v3901
    %v3907 = vlaneseq
    %v3908 = vshrl.u32 %v3907, 7
    %v3909 = vsub.s32 %v3820, %v3908
    %v3910 = vrot.slane %v3631, %v3909
    %v3911 = vsel %vm3825, %v3910, %v3906
    %v3912 = vlaneseq
    %v3913 = vshrl.u32 %v3912, 7
    %v3914 = vsub.s32 %v3827, %v3913
    %v3915 = vrot.slane %v3634, %v3914
    %v3916 = vsel %vm3832, %v3915, %v3911
    %v3917 = vlaneseq
    %v3918 = vshrl.u32 %v3917, 7
    %v3919 = vsub.s32 %v3834, %v3918
    %v3920 = vrot.slane %v3637, %v3919
    %v3921 = vsel %vm3839, %v3920, %v3916
    %v3922 = vlaneseq
    %v3923 = vshrl.u32 %v3922, 7
    %v3924 = vsub.s32 %v3841, %v3923
    %v3925 = vrot.slane %v3640, %v3924
    %v3926 = vsel %vm3846, %v3925, %v3921
    %v3927 = vlaneseq
    %v3928 = vshrl.u32 %v3927, 7
    %v3929 = vsub.s32 %v3738, %v3928
    %v3930 = vrot.slane %v3643, %v3929
    %v3931 = vlaneseq
    %v3932 = vshrl.u32 %v3931, 7
    %v3933 = vsub.s32 %v3743, %v3932
    %v3934 = vrot.slane %v3646, %v3933
    %v3935 = vsel %vm3748, %v3934, %v3930
    %v3936 = vlaneseq
    %v3937 = vshrl.u32 %v3936, 7
    %v3938 = vsub.s32 %v3750, %v3937
    %v3939 = vrot.slane %v3649, %v3938
    %v3940 = vsel %vm3755, %v3939, %v3935
    %v3941 = vlaneseq
    %v3942 = vshrl.u32 %v3941, 7
    %v3943 = vsub.s32 %v3757, %v3942
    %v3944 = vrot.slane %v3652, %v3943
    %v3945 = vsel %vm3762, %v3944, %v3940
    %v3946 = vlaneseq
    %v3947 = vshrl.u32 %v3946, 7
    %v3948 = vsub.s32 %v3764, %v3947
    %v3949 = vrot.slane %v3655, %v3948
    %v3950 = vsel %vm3769, %v3949, %v3945
    %v3951 = vlaneseq
    %v3952 = vshrl.u32 %v3951, 7
    %v3953 = vsub.s32 %v3771, %v3952
    %v3954 = vrot.slane %v3658, %v3953
    %v3955 = vsel %vm3776, %v3954, %v3950
    %v3956 = vlaneseq
    %v3957 = vshrl.u32 %v3956, 7
    %v3958 = vsub.s32 %v3778, %v3957
    %v3959 = vrot.slane %v3661, %v3958
    %v3960 = vsel %vm3783, %v3959, %v3955
    %v3961 = vlaneseq
    %v3962 = vshrl.u32 %v3961, 7
    %v3963 = vsub.s32 %v3785, %v3962
    %v3964 = vrot.slane %v3664, %v3963
    %v3965 = vsel %vm3790, %v3964, %v3960
    %v3966 = vlaneseq
    %v3967 = vshrl.u32 %v3966, 7
    %v3968 = vsub.s32 %v3792, %v3967
    %v3969 = vrot.slane %v3667, %v3968
    %v3970 = vsel %vm3797, %v3969, %v3965
    %v3971 = vlaneseq
    %v3972 = vshrl.u32 %v3971, 7
    %v3973 = vsub.s32 %v3799, %v3972
    %v3974 = vrot.slane %v3670, %v3973
    %v3975 = vsel %vm3804, %v3974, %v3970
    %v3976 = vlaneseq
    %v3977 = vshrl.u32 %v3976, 7
    %v3978 = vsub.s32 %v3806, %v3977
    %v3979 = vrot.slane %v3673, %v3978
    %v3980 = vsel %vm3811, %v3979, %v3975
    %v3981 = vlaneseq
    %v3982 = vshrl.u32 %v3981, 7
    %v3983 = vsub.s32 %v3813, %v3982
    %v3984 = vrot.slane %v3676, %v3983
    %v3985 = vsel %vm3818, %v3984, %v3980
    %v3986 = vlaneseq
    %v3987 = vshrl.u32 %v3986, 7
    %v3988 = vsub.s32 %v3820, %v3987
    %v3989 = vrot.slane %v3679, %v3988
    %v3990 = vsel %vm3825, %v3989, %v3985
    %v3991 = vlaneseq
    %v3992 = vshrl.u32 %v3991, 7
    %v3993 = vsub.s32 %v3827, %v3992
    %v3994 = vrot.slane %v3682, %v3993
    %v3995 = vsel %vm3832, %v3994, %v3990
    %v3996 = vlaneseq
    %v3997 = vshrl.u32 %v3996, 7
    %v3998 = vsub.s32 %v3834, %v3997
    %v3999 = vrot.slane %v3685, %v3998
    %v4000 = vsel %vm3839, %v3999, %v3995
    %v4001 = vlaneseq
    %v4002 = vshrl.u32 %v4001, 7
    %v4003 = vsub.s32 %v3841, %v4002
    %v4004 = vrot.slane %v3688, %v4003
    %v4005 = vsel %vm3846, %v4004, %v4000
    %v4006 = vlaneseq
    %v4007 = vshrl.u32 %v4006, 7
    %v4008 = vsub.s32 %v3738, %v4007
    %v4009 = vrot.slane %v3691, %v4008
    %v4010 = vlaneseq
    %v4011 = vshrl.u32 %v4010, 7
    %v4012 = vsub.s32 %v3743, %v4011
    %v4013 = vrot.slane %v3694, %v4012
    %v4014 = vsel %vm3748, %v4013, %v4009
    %v4015 = vlaneseq
    %v4016 = vshrl.u32 %v4015, 7
    %v4017 = vsub.s32 %v3750, %v4016
    %v4018 = vrot.slane %v3697, %v4017
    %v4019 = vsel %vm3755, %v4018, %v4014
    %v4020 = vlaneseq
    %v4021 = vshrl.u32 %v4020, 7
    %v4022 = vsub.s32 %v3757, %v4021
    %v4023 = vrot.slane %v3700, %v4022
    %v4024 = vsel %vm3762, %v4023, %v4019
    %v4025 = vlaneseq
    %v4026 = vshrl.u32 %v4025, 7
    %v4027 = vsub.s32 %v3764, %v4026
    %v4028 = vrot.slane %v3703, %v4027
    %v4029 = vsel %vm3769, %v4028, %v4024
    %v4030 = vlaneseq
    %v4031 = vshrl.u32 %v4030, 7
    %v4032 = vsub.s32 %v3771, %v4031
    %v4033 = vrot.slane %v3706, %v4032
    %v4034 = vsel %vm3776, %v4033, %v4029
    %v4035 = vlaneseq
    %v4036 = vshrl.u32 %v4035, 7
    %v4037 = vsub.s32 %v3778, %v4036
    %v4038 = vrot.slane %v3709, %v4037
    %v4039 = vsel %vm3783, %v4038, %v4034
    %v4040 = vlaneseq
    %v4041 = vshrl.u32 %v4040, 7
    %v4042 = vsub.s32 %v3785, %v4041
    %v4043 = vrot.slane %v3712, %v4042
    %v4044 = vsel %vm3790, %v4043, %v4039
    %v4045 = vlaneseq
    %v4046 = vshrl.u32 %v4045, 7
    %v4047 = vsub.s32 %v3792, %v4046
    %v4048 = vrot.slane %v3715, %v4047
    %v4049 = vsel %vm3797, %v4048, %v4044
    %v4050 = vlaneseq
    %v4051 = vshrl.u32 %v4050, 7
    %v4052 = vsub.s32 %v3799, %v4051
    %v4053 = vrot.slane %v3718, %v4052
    %v4054 = vsel %vm3804, %v4053, %v4049
    %v4055 = vlaneseq
    %v4056 = vshrl.u32 %v4055, 7
    %v4057 = vsub.s32 %v3806, %v4056
    %v4058 = vrot.slane %v3721, %v4057
    %v4059 = vsel %vm3811, %v4058, %v4054
    %v4060 = vlaneseq
    %v4061 = vshrl.u32 %v4060, 7
    %v4062 = vsub.s32 %v3813, %v4061
    %v4063 = vrot.slane %v3724, %v4062
    %v4064 = vsel %vm3818, %v4063, %v4059
    %v4065 = vlaneseq
    %v4066 = vshrl.u32 %v4065, 7
    %v4067 = vsub.s32 %v3820, %v4066
    %v4068 = vrot.slane %v3727, %v4067
    %v4069 = vsel %vm3825, %v4068, %v4064
    %v4070 = vlaneseq
    %v4071 = vshrl.u32 %v4070, 7
    %v4072 = vsub.s32 %v3827, %v4071
    %v4073 = vrot.slane %v3730, %v4072
    %v4074 = vsel %vm3832, %v4073, %v4069
    %v4075 = vlaneseq
    %v4076 = vshrl.u32 %v4075, 7
    %v4077 = vsub.s32 %v3834, %v4076
    %v4078 = vrot.slane %v3733, %v4077
    %v4079 = vsel %vm3839, %v4078, %v4074
    %v4080 = vlaneseq
    %v4081 = vshrl.u32 %v4080, 7
    %v4082 = vsub.s32 %v3841, %v4081
    %v4083 = vrot.slane %v3736, %v4082
    %v4084 = vsel %vm3846, %v4083, %v4079
    %vm4085 = vcmask 1041409
    %v4086 = vsel %vm4085, %v3926, %v3847
    %vm4087 = vcmask 1042434
    %v4088 = vsel %vm4087, %v4005, %v4086
    %vm4089 = vcmask 1043459
    %v4090 = vsel %vm4089, %v4084, %v4088
    %v4092 = vmul.f32 %v3352, %v4090
    %v4093 = vand.u32 2147483647, %v4092
    %v4094 = vsub.f32 0.0, %v4093
    %v4095 = vmul.f32 %v4094, 1.442695
    %v4096 = vpow.pop %v4095
    %v4097 = vadd.f32 %v4096, 1.0
    %v4098 = vrcp.pop %v4097
    %vm4099 = vcmp.ge.f32.partialorder %v4092, 0.0
    %v4100 = vsub.f32 1.0, %v4098
    %v4101 = vsel %vm4099, %v4098, %v4100
    %4102 = vst [vmem:[#allocation3] sm:$0xf] %v4101
    // Predicated region
    $region34: #{_lambda_.1} parent=1 // pred_check
      _
    $region35: #{_lambda_.1} parent=1 // pred_check_branch
      %4104 = sbr.rel (0) target = $region37
    $region36: #{_lambda_.1} parent=1 // pred_region
      %s4106 = ssub.s32 64, 64
      %4107 = vsyncadd [#allocation4], %s4106
      %s4109 = sshll.u32 [#allocation3], 4
      %s4110 = int_to_ptr.vmem [resolvable:$true] %s4109
      %4112 = dma.vmem_to_hbm [thread:$0]  %s4110, 64, %s8, [#allocation4]
    $region37: #{_lambda_.1} parent=1 // pred_fallthru
      _
    // Predicated region
    $region38: #{_lambda_.1} parent=1 // pred_check
      _
    $region39: #{_lambda_.1} parent=1 // pred_check_branch
      %4114 = sbr.rel (0) target = $region41
    $region40: #{_lambda_.1} parent=1 // pred_region
      %4115 = dma.done [#allocation4], 64
    $region41: #{_lambda_.1} parent=1 // pred_fallthru
      _
    %4116 = vsyncpa [#allocation4], 1

</llo_original>
